<compile_context>
chip_gen: v5e
topology: v5e:2x2
jax: 0.10.0
libtpu: 0.0.40
codegen_flags: <defaults>
</compile_context>

<pallas_src>
import functools

import jax
import jax.numpy as jnp
import numpy as np
from jax import lax
from jax.experimental import pallas as pl
from jax.experimental.pallas import tpu as pltpu

TEMPERATURE = 0.2
THRESH_LO = 0.01
THRESH_HI = 0.5


def _moco_kernel(q_ref, k_ref, negs_ref, comp_ref, asn_ref,
                 neglog_ref, mask_ref, stats_ref,
                 onehot_sc, pos_sc, m_sc, l_sc):
    """One (B tile, Q tile) step of the MoCo-with-mixtures forward."""
    j = pl.program_id(1)
    nq = pl.num_programs(1)
    inv_t = 1.0 / TEMPERATURE  # python float -> jaxpr literal (no captured const)

    # ---- init per-B-tile state on the first Q tile ----
    @pl.when(j == 0)
    def _():
        qf = q_ref[...].astype(jnp.float32)
        kf = k_ref[...].astype(jnp.float32)
        pos = jnp.sum(qf * kf, axis=1, keepdims=True) * inv_t   # (tB, 1)
        pos_sc[...] = pos
        m_sc[...] = pos                    # positive logit is always unmasked
        l_sc[...] = jnp.ones_like(pos)     # exp(pos - m) = 1
        # one-hot of the component assignments; invariant across Q tiles.
        tb, c = onehot_sc.shape
        onehot_sc[...] = (asn_ref[...] ==
                          lax.broadcasted_iota(jnp.int32, (tb, c), 1)
                          ).astype(jnp.bfloat16)

    # ---- negative logits for this tile: bf16 MXU matmul, f32 accumulate ----
    neg_l = jnp.dot(q_ref[...], negs_ref[...],
                    preferred_element_type=jnp.float32) * inv_t  # (tB, tQ)

    # ---- fused gather of the thresholded scores via one-hot matmul ----
    # onehot (tB, C) and comp (C, tQ) are exactly {0,1} in bf16, so the f32
    # accumulated result is exactly {0,1} (one nonzero term per row).
    maskf = jnp.dot(onehot_sc[...], comp_ref[...],
                    preferred_element_type=jnp.float32)          # (tB, tQ)

    # ---- online masked logsumexp across Q tiles (pos seeds m/l) ----
    m_prev = m_sc[...]
    m_new = jnp.maximum(m_prev, jnp.max(neg_l, axis=1, keepdims=True))
    p = jnp.exp(neg_l - m_new) * maskf                           # masked -> 0
    l_sc[...] = (jnp.exp(m_prev - m_new) * l_sc[...]
                 + jnp.sum(p, axis=1, keepdims=True))
    m_sc[...] = m_new

    # ---- per-tile outputs ----
    neglog_ref[...] = neg_l
    mask_ref[...] = maskf.astype(jnp.int8)

    # ---- finalize: pos logit + per-row loss in a lane-dense (tB, 128) slab ----
    @pl.when(j == nq - 1)
    def _():
        lse = m_sc[...] + jnp.log(l_sc[...])                     # (tB, 1)
        loss_row = lse - pos_sc[...]                             # = -(pos - lse)
        col = lax.broadcasted_iota(jnp.int32, stats_ref.shape, 1)
        stats_ref[...] = jnp.where(col == 0, pos_sc[...],
                                   jnp.where(col == 1, loss_row, 0.0))


@functools.partial(jax.jit, static_argnames=("block_b", "block_q"))
def moco_with_mixture_loss(query, key, negatives, scores, query_assignments,
                           *, block_b=128, block_q=512):
    """query:(B,F) key:(B,F) negatives:(F,Q) scores:(Q,C) query_assignments:(B,)"""
    B, F = query.shape
    F2, Q = negatives.shape
    Qs, C = scores.shape
    assert F == F2 and Q == Qs

    block_b = min(block_b, B)
    # Keep >= 2 B tiles when B allows it so the "parallel" axis actually shards
    # across the two TensorCores on v7x (single-TC chips are unaffected).
    if B // block_b < 2 and B >= 64:
        block_b = B // 2
    block_q = min(block_q, Q)
    assert B % block_b == 0 and Q % block_q == 0
    assert (block_b % 8 == 0) or (block_b == B)
    assert (block_q % 128 == 0) or (block_q == Q)
    assert block_b >= 32 or block_b == B    # int8 mask sublane tile

    # bf16 feeds the MXU natively on v5e/v6e/v7x and halves the dominant HBM
    # read streams; thresholding is done here in exact f32, producing an exact
    # {0,1} bf16 (C, Q) comp matrix (transpose fused into the same XLA op).
    q_bf = query.astype(jnp.bfloat16)
    k_bf = key.astype(jnp.bfloat16)
    n_bf = negatives.astype(jnp.bfloat16)
    comp = ((scores > THRESH_LO) & (scores < THRESH_HI)).T.astype(jnp.bfloat16)
    asn = query_assignments.astype(jnp.int32).reshape(B, 1)

    nb, nq = B // block_b, Q // block_q

    # Scoped-VMEM budget: double-buffered inputs/outputs + scratch + headroom.
    # Floor at 32 MiB (fine on every generation), cap at 48 MiB (v7x physical
    # VMEM is 64 MiB per TensorCore).
    est = 2 * (2 * block_b * F * 2            # query + key (bf16)
               + F * block_q * 2              # negatives (bf16)
               + C * block_q * 2              # comp (bf16)
               + block_b * 4                  # assignments (int32)
               + block_b * block_q * 4        # neg logits (f32)
               + block_b * block_q * 1        # mask (int8)
               + block_b * 128 * 4)           # stats (f32)
    est += block_b * C * 2 + 3 * block_b * 4 + (2 << 20)
    assert est <= (48 << 20), "tile config exceeds the v7x VMEM budget"
    vmem_limit = min(max(est, 32 << 20), 48 << 20)

    grid_spec = pltpu.PrefetchScalarGridSpec(
        num_scalar_prefetch=0,
        grid=(nb, nq),
        in_specs=[
            pl.BlockSpec((block_b, F), lambda i, j: (i, 0)),        # query  bf16
            pl.BlockSpec((block_b, F), lambda i, j: (i, 0)),        # key    bf16
            pl.BlockSpec((F, block_q), lambda i, j: (0, j)),        # negatives bf16
            pl.BlockSpec((C, block_q), lambda i, j: (0, j)),        # comp {0,1} bf16
            pl.BlockSpec((block_b, 1), lambda i, j: (i, 0)),        # assignments
        ],
        out_specs=[
            pl.BlockSpec((block_b, block_q), lambda i, j: (i, j)),  # neg logits f32
            pl.BlockSpec((block_b, block_q), lambda i, j: (i, j)),  # neg mask int8
            pl.BlockSpec((block_b, 128), lambda i, j: (i, 0)),      # [pos | loss]
        ],
        scratch_shapes=[
            pltpu.VMEM((block_b, C), jnp.bfloat16),  # one-hot(assignments)
            pltpu.VMEM((block_b, 1), jnp.float32),   # pos logit
            pltpu.VMEM((block_b, 1), jnp.float32),   # running max m
            pltpu.VMEM((block_b, 1), jnp.float32),   # running sum l
        ],
    )

    out_shapes = (
        jax.ShapeDtypeStruct((B, Q), jnp.float32),    # negative logits / T
        jax.ShapeDtypeStruct((B, Q), jnp.int8),       # negative mask (0/1)
        jax.ShapeDtypeStruct((B, 128), jnp.float32),  # col0 = pos/T, col1 = loss
    )

    neg_l, neg_mask_i8, stats = pl.pallas_call(
        _moco_kernel,
        out_shape=out_shapes,
        grid_spec=grid_spec,
        compiler_params=pltpu.CompilerParams(
            dimension_semantics=("parallel", "arbitrary"),
            vmem_limit_bytes=vmem_limit),
    )(q_bf, k_bf, n_bf, comp, asn)

    # Thin JAX glue for the module's output format ('mean' reduction).
    pos_l = stats[:, 0:1]
    loss = jnp.mean(stats[:, 1])
    logits = jnp.concatenate([pos_l, neg_l], axis=1)
    mask = jnp.concatenate(
        [jnp.ones((B, 1), dtype=bool), neg_mask_i8.astype(bool)], axis=1)
    return loss, logits, mask


def _reference(query, key, negatives, scores, query_assignments):
    """Pure-JAX mirror of the PyTorch forward (reduction='mean').

    Matches the kernel's precision policy: query/key/negatives rounded to bf16
    (what the MXU consumes), all math in f32, scores kept in f32.
    """
    qf = query.astype(jnp.bfloat16).astype(jnp.float32)
    kf = key.astype(jnp.bfloat16).astype(jnp.float32)
    nf = negatives.astype(jnp.bfloat16).astype(jnp.float32)
    pos = jnp.sum(qf * kf, axis=1, keepdims=True)
    neg = jnp.dot(qf, nf, precision=jax.lax.Precision.HIGHEST)
    logits = jnp.concatenate([pos, neg], axis=1) / TEMPERATURE
    sc = scores[:, query_assignments]                      # (Q, B)
    neg_mask = (sc > THRESH_LO).T & (sc < THRESH_HI).T     # (B, Q)
    mask = jnp.concatenate(
        [jnp.ones((query.shape[0], 1), dtype=bool), neg_mask], axis=1)
    masked = jnp.where(mask, logits, -jnp.inf)
    lse = jax.scipy.special.logsumexp(masked, axis=1, keepdims=True)
    loss = -((pos / TEMPERATURE) - lse)
    return loss.mean(), logits, mask


if __name__ == "__main__":
    # Small but multi-tile shapes: 2 B tiles (megacore axis) x 2 Q tiles
    # (exercises the online masked-LSE carry).
    B, F, Q, C = 256, 128, 1024, 16

    root = jax.random.PRNGKey(0)
    kq, kk, kn, ks, ka = jax.random.split(root, 5)
    query = jax.random.normal(kq, (B, F), dtype=jnp.float32)
    key = jax.random.normal(kk, (B, F), dtype=jnp.float32)
    negatives = jax.random.normal(kn, (F, Q), dtype=jnp.float32)
    scores = jax.random.uniform(ks, (Q, C), dtype=jnp.float32)
    query_assignments = jax.random.randint(ka, (B,), 0, C, dtype=jnp.int32)

    loss, logits, mask = moco_with_mixture_loss(
        query, key, negatives, scores, query_assignments)
    jax.block_until_ready((loss, logits, mask))

    ref_loss, ref_logits, ref_mask = _reference(
        query, key, negatives, scores, query_assignments)

    np.testing.assert_allclose(np.asarray(logits), np.asarray(ref_logits),
                               rtol=1e-3, atol=1e-2)
    np.testing.assert_array_equal(np.asarray(mask), np.asarray(ref_mask))
    np.testing.assert_allclose(np.asarray(loss), np.asarray(ref_loss),
                               rtol=1e-3, atol=1e-2)

    print("KERNEL_OK")
</pallas_src>

<mosaic_0001>
module attributes {stable_mosaic.version = 11 : i64} {
  func.func @_moco_kernel(%arg0: i32, %arg1: i32, %arg2: memref<128x128xbf16, #tpu.memory_space<vmem>>, %arg3: memref<128x128xbf16, #tpu.memory_space<vmem>>, %arg4: memref<128x512xbf16, #tpu.memory_space<vmem>>, %arg5: memref<16x512xbf16, #tpu.memory_space<vmem>>, %arg6: memref<128x1xi32, #tpu.memory_space<vmem>>, %arg7: memref<128x512xf32, #tpu.memory_space<vmem>>, %arg8: memref<128x512xi8, #tpu.memory_space<vmem>>, %arg9: memref<128x128xf32, #tpu.memory_space<vmem>>, %arg10: memref<128x16xbf16, #tpu.memory_space<vmem>>, %arg11: memref<128x1xf32, #tpu.memory_space<vmem>>, %arg12: memref<128x1xf32, #tpu.memory_space<vmem>>, %arg13: memref<128x1xf32, #tpu.memory_space<vmem>>) attributes {dimension_semantics = [#tpu.dimension_semantics<parallel>, #tpu.dimension_semantics<arbitrary>], iteration_bounds = array<i64: 2, 2>, scalar_prefetch = 0 : i64, scratch_operands = 4 : i64, tpu.core_type = #tpu.core_type<tc>, window_params = [{transform_indices = @transform_0, window_bounds = array<i64: 128, 128>}, {transform_indices = @transform_1, window_bounds = array<i64: 128, 128>}, {transform_indices = @transform_2, window_bounds = array<i64: 128, 512>}, {transform_indices = @transform_3, window_bounds = array<i64: 16, 512>}, {transform_indices = @transform_4, window_bounds = array<i64: 128, 1>}, {transform_indices = @transform_5, window_bounds = array<i64: 128, 512>}, {transform_indices = @transform_6, window_bounds = array<i64: 128, 512>}, {transform_indices = @transform_7, window_bounds = array<i64: 128, 128>}]} {
    %c0_i32 = arith.constant 0 : i32
    %0 = arith.cmpi eq, %arg1, %c0_i32 : i32
    %1 = arith.extui %0 : i1 to i32
    %c0_i32_0 = arith.constant 0 : i32
    %2 = arith.cmpi ne, %1, %c0_i32_0 : i32
    scf.if %2 {
      %c0_25 = arith.constant 0 : index
      %c0_26 = arith.constant 0 : index
      %34 = vector.load %arg2[%c0_25, %c0_26] : memref<128x128xbf16, #tpu.memory_space<vmem>>, vector<128x128xbf16>
      %35 = arith.extf %34 : vector<128x128xbf16> to vector<128x128xf32>
      %c0_27 = arith.constant 0 : index
      %c0_28 = arith.constant 0 : index
      %36 = vector.load %arg3[%c0_27, %c0_28] : memref<128x128xbf16, #tpu.memory_space<vmem>>, vector<128x128xbf16>
      %37 = arith.extf %36 : vector<128x128xbf16> to vector<128x128xf32>
      %38 = arith.mulf %35, %37 : vector<128x128xf32>
      %cst_29 = arith.constant dense<0.000000e+00> : vector<128xf32>
      %39 = vector.multi_reduction <add>, %38, %cst_29 [1] : vector<128x128xf32> to vector<128xf32>
      %40 = vector.shape_cast %39 : vector<128xf32> to vector<128x1xf32>
      %cst_30 = arith.constant 5.000000e+00 : f32
      %41 = vector.broadcast %cst_30 : f32 to vector<128x1xf32>
      %42 = arith.mulf %40, %41 : vector<128x1xf32>
      %c0_31 = arith.constant 0 : index
      %c0_32 = arith.constant 0 : index
      %43 = vector.load %arg11[%c0_31, %c0_32] : memref<128x1xf32, #tpu.memory_space<vmem>>, vector<128x1xf32>
      tpu.vector_store %arg11[%c0_31, %c0_32], %42 {strides = array<i32>} : memref<128x1xf32, #tpu.memory_space<vmem>>, vector<128x1xf32>,
      %c0_33 = arith.constant 0 : index
      %c0_34 = arith.constant 0 : index
      %44 = vector.load %arg12[%c0_33, %c0_34] : memref<128x1xf32, #tpu.memory_space<vmem>>, vector<128x1xf32>
      tpu.vector_store %arg12[%c0_33, %c0_34], %42 {strides = array<i32>} : memref<128x1xf32, #tpu.memory_space<vmem>>, vector<128x1xf32>,
      %cst_35 = arith.constant 1.000000e+00 : f32
      %45 = vector.broadcast %cst_35 : f32 to vector<128x1xf32>
      %c0_36 = arith.constant 0 : index
      %c0_37 = arith.constant 0 : index
      %46 = vector.load %arg13[%c0_36, %c0_37] : memref<128x1xf32, #tpu.memory_space<vmem>>, vector<128x1xf32>
      tpu.vector_store %arg13[%c0_36, %c0_37], %45 {strides = array<i32>} : memref<128x1xf32, #tpu.memory_space<vmem>>, vector<128x1xf32>,
      %c0_38 = arith.constant 0 : index
      %c0_39 = arith.constant 0 : index
      %47 = vector.load %arg6[%c0_38, %c0_39] : memref<128x1xi32, #tpu.memory_space<vmem>>, vector<128x1xi32>
      %48 = tpu.iota {dimensions = array<i32: 1>} : vector<128x16xi32>
      %49 = vector.broadcast %47 : vector<128x1xi32> to vector<128x16xi32>
      %50 = arith.cmpi eq, %49, %48 : vector<128x16xi32>
      %51 = arith.extui %50 : vector<128x16xi1> to vector<128x16xi32>
      %52 = arith.sitofp %51 : vector<128x16xi32> to vector<128x16xf32>
      %53 = arith.truncf %52 : vector<128x16xf32> to vector<128x16xbf16>
      %c0_40 = arith.constant 0 : index
      %c0_41 = arith.constant 0 : index
      %54 = vector.load %arg10[%c0_40, %c0_41] : memref<128x16xbf16, #tpu.memory_space<vmem>>, vector<128x16xbf16>
      tpu.vector_store %arg10[%c0_40, %c0_41], %53 {strides = array<i32>} : memref<128x16xbf16, #tpu.memory_space<vmem>>, vector<128x16xbf16>,
    } else {
    }
    %c0 = arith.constant 0 : index
    %c0_1 = arith.constant 0 : index
    %3 = vector.load %arg2[%c0, %c0_1] : memref<128x128xbf16, #tpu.memory_space<vmem>>, vector<128x128xbf16>
    %c0_2 = arith.constant 0 : index
    %c0_3 = arith.constant 0 : index
    %4 = vector.load %arg4[%c0_2, %c0_3] : memref<128x512xbf16, #tpu.memory_space<vmem>>, vector<128x512xbf16>
    %cst = arith.constant dense<0.000000e+00> : vector<128x512xf32>
    %5 = tpu.matmul %3, %4, %cst {dimension_numbers = #tpu.dot_dimension_numbers<[1], [0], [0], [1], [0, 0, 1, 1], [], []>} : vector<128x128xbf16>, vector<128x512xbf16>, vector<128x512xf32> -> vector<128x512xf32>
    %cst_4 = arith.constant 5.000000e+00 : f32
    %6 = vector.broadcast %cst_4 : f32 to vector<128x512xf32>
    %7 = arith.mulf %5, %6 : vector<128x512xf32>
    %c0_5 = arith.constant 0 : index
    %c0_6 = arith.constant 0 : index
    %8 = vector.load %arg10[%c0_5, %c0_6] : memref<128x16xbf16, #tpu.memory_space<vmem>>, vector<128x16xbf16>
    %c0_7 = arith.constant 0 : index
    %c0_8 = arith.constant 0 : index
    %9 = vector.load %arg5[%c0_7, %c0_8] : memref<16x512xbf16, #tpu.memory_space<vmem>>, vector<16x512xbf16>
    %cst_9 = arith.constant dense<0.000000e+00> : vector<128x512xf32>
    %10 = tpu.matmul %8, %9, %cst_9 {dimension_numbers = #tpu.dot_dimension_numbers<[1], [0], [0], [1], [0, 0, 1, 1], [], []>} : vector<128x16xbf16>, vector<16x512xbf16>, vector<128x512xf32> -> vector<128x512xf32>
    %c0_10 = arith.constant 0 : index
    %c0_11 = arith.constant 0 : index
    %11 = vector.load %arg12[%c0_10, %c0_11] : memref<128x1xf32, #tpu.memory_space<vmem>>, vector<128x1xf32>
    %cst_12 = arith.constant dense<0xFF800000> : vector<128xf32>
    %12 = vector.multi_reduction <maximumf>, %7, %cst_12 [1] : vector<128x512xf32> to vector<128xf32>
    %13 = vector.shape_cast %12 : vector<128xf32> to vector<128x1xf32>
    %14 = arith.maximumf %11, %13 : vector<128x1xf32>
    %15 = vector.broadcast %14 : vector<128x1xf32> to vector<128x512xf32>
    %16 = arith.subf %7, %15 : vector<128x512xf32>
    %17 = math.exp %16 : vector<128x512xf32>
    %18 = arith.mulf %17, %10 : vector<128x512xf32>
    %19 = arith.subf %11, %14 : vector<128x1xf32>
    %20 = math.exp %19 : vector<128x1xf32>
    %c0_13 = arith.constant 0 : index
    %c0_14 = arith.constant 0 : index
    %21 = vector.load %arg13[%c0_13, %c0_14] : memref<128x1xf32, #tpu.memory_space<vmem>>, vector<128x1xf32>
    %22 = arith.mulf %20, %21 : vector<128x1xf32>
    %cst_15 = arith.constant dense<0.000000e+00> : vector<128xf32>
    %23 = vector.multi_reduction <add>, %18, %cst_15 [1] : vector<128x512xf32> to vector<128xf32>
    %24 = vector.shape_cast %23 : vector<128xf32> to vector<128x1xf32>
    %25 = arith.addf %22, %24 : vector<128x1xf32>
    %c0_16 = arith.constant 0 : index
    %c0_17 = arith.constant 0 : index
    %26 = vector.load %arg13[%c0_16, %c0_17] : memref<128x1xf32, #tpu.memory_space<vmem>>, vector<128x1xf32>
    tpu.vector_store %arg13[%c0_16, %c0_17], %25 {strides = array<i32>} : memref<128x1xf32, #tpu.memory_space<vmem>>, vector<128x1xf32>,
    %c0_18 = arith.constant 0 : index
    %c0_19 = arith.constant 0 : index
    %27 = vector.load %arg12[%c0_18, %c0_19] : memref<128x1xf32, #tpu.memory_space<vmem>>, vector<128x1xf32>
    tpu.vector_store %arg12[%c0_18, %c0_19], %14 {strides = array<i32>} : memref<128x1xf32, #tpu.memory_space<vmem>>, vector<128x1xf32>,
    %c0_20 = arith.constant 0 : index
    %c0_21 = arith.constant 0 : index
    %28 = vector.load %arg7[%c0_20, %c0_21] : memref<128x512xf32, #tpu.memory_space<vmem>>, vector<128x512xf32>
    tpu.vector_store %arg7[%c0_20, %c0_21], %7 {strides = array<i32>} : memref<128x512xf32, #tpu.memory_space<vmem>>, vector<128x512xf32>,
    %29 = arith.fptosi %10 : vector<128x512xf32> to vector<128x512xi8>
    %c0_22 = arith.constant 0 : index
    %c0_23 = arith.constant 0 : index
    %30 = vector.load %arg8[%c0_22, %c0_23] : memref<128x512xi8, #tpu.memory_space<vmem>>, vector<128x512xi8>
    tpu.vector_store %arg8[%c0_22, %c0_23], %29 {strides = array<i32>} : memref<128x512xi8, #tpu.memory_space<vmem>>, vector<128x512xi8>,
    %c1_i32 = arith.constant 1 : i32
    %31 = arith.cmpi eq, %arg1, %c1_i32 : i32
    %32 = arith.extui %31 : i1 to i32
    %c0_i32_24 = arith.constant 0 : i32
    %33 = arith.cmpi ne, %32, %c0_i32_24 : i32
    scf.if %33 {
      %c0_25 = arith.constant 0 : index
      %c0_26 = arith.constant 0 : index
      %34 = vector.load %arg12[%c0_25, %c0_26] : memref<128x1xf32, #tpu.memory_space<vmem>>, vector<128x1xf32>
      %c0_27 = arith.constant 0 : index
      %c0_28 = arith.constant 0 : index
      %35 = vector.load %arg13[%c0_27, %c0_28] : memref<128x1xf32, #tpu.memory_space<vmem>>, vector<128x1xf32>
      %36 = math.log %35 : vector<128x1xf32>
      %37 = arith.addf %34, %36 : vector<128x1xf32>
      %c0_29 = arith.constant 0 : index
      %c0_30 = arith.constant 0 : index
      %38 = vector.load %arg11[%c0_29, %c0_30] : memref<128x1xf32, #tpu.memory_space<vmem>>, vector<128x1xf32>
      %39 = arith.subf %37, %38 : vector<128x1xf32>
      %40 = tpu.iota {dimensions = array<i32: 1>} : vector<128x128xi32>
      %c0_i32_31 = arith.constant 0 : i32
      %41 = vector.broadcast %c0_i32_31 : i32 to vector<128x128xi32>
      %42 = arith.cmpi eq, %40, %41 : vector<128x128xi32>
      %c0_32 = arith.constant 0 : index
      %c0_33 = arith.constant 0 : index
      %43 = vector.load %arg11[%c0_32, %c0_33] : memref<128x1xf32, #tpu.memory_space<vmem>>, vector<128x1xf32>
      %c1_i32_34 = arith.constant 1 : i32
      %44 = vector.broadcast %c1_i32_34 : i32 to vector<128x128xi32>
      %45 = arith.cmpi eq, %40, %44 : vector<128x128xi32>
      %cst_35 = arith.constant 0.000000e+00 : f32
      %46 = vector.shape_cast %39 : vector<128x1xf32> to vector<128x1xf32>
      %47 = vector.broadcast %46 : vector<128x1xf32> to vector<128x128xf32>
      %48 = vector.broadcast %cst_35 : f32 to vector<128x128xf32>
      %49 = arith.select %45, %47, %48 : vector<128x128xi1>, vector<128x128xf32>
      %50 = vector.shape_cast %43 : vector<128x1xf32> to vector<128x1xf32>
      %51 = vector.broadcast %50 : vector<128x1xf32> to vector<128x128xf32>
      %52 = arith.select %42, %51, %49 : vector<128x128xi1>, vector<128x128xf32>
      %c0_36 = arith.constant 0 : index
      %c0_37 = arith.constant 0 : index
      %53 = vector.load %arg9[%c0_36, %c0_37] : memref<128x128xf32, #tpu.memory_space<vmem>>, vector<128x128xf32>
      tpu.vector_store %arg9[%c0_36, %c0_37], %52 {strides = array<i32>} : memref<128x128xf32, #tpu.memory_space<vmem>>, vector<128x128xf32>,
    } else {
    }
    return
  }
  func.func @transform_0(%arg0: i32, %arg1: i32) -> (i32, i32) {
    %c0_i32 = arith.constant 0 : i32
    %c0_i32_0 = arith.constant 0 : i32
    return %arg0, %c0_i32 : i32, i32
  }
  func.func @transform_1(%arg0: i32, %arg1: i32) -> (i32, i32) {
    %c0_i32 = arith.constant 0 : i32
    %c0_i32_0 = arith.constant 0 : i32
    return %arg0, %c0_i32 : i32, i32
  }
  func.func @transform_2(%arg0: i32, %arg1: i32) -> (i32, i32) {
    %c0_i32 = arith.constant 0 : i32
    %c0_i32_0 = arith.constant 0 : i32
    return %c0_i32, %arg1 : i32, i32
  }
  func.func @transform_3(%arg0: i32, %arg1: i32) -> (i32, i32) {
    %c0_i32 = arith.constant 0 : i32
    %c0_i32_0 = arith.constant 0 : i32
    return %c0_i32, %arg1 : i32, i32
  }
  func.func @transform_4(%arg0: i32, %arg1: i32) -> (i32, i32) {
    %c0_i32 = arith.constant 0 : i32
    %c0_i32_0 = arith.constant 0 : i32
    return %arg0, %c0_i32 : i32, i32
  }
  func.func @transform_5(%arg0: i32, %arg1: i32) -> (i32, i32) {
    %c0_i32 = arith.constant 0 : i32
    return %arg0, %arg1 : i32, i32
  }
  func.func @transform_6(%arg0: i32, %arg1: i32) -> (i32, i32) {
    %c0_i32 = arith.constant 0 : i32
    return %arg0, %arg1 : i32, i32
  }
  func.func @transform_7(%arg0: i32, %arg1: i32) -> (i32, i32) {
    %c0_i32 = arith.constant 0 : i32
    %c0_i32_0 = arith.constant 0 : i32
    return %arg0, %c0_i32 : i32, i32
  }
}

</mosaic_0001>

<llo_original>
// kernel: moco_with_mixture_loss.1
$region0: #{moco_with_mixture_loss.1}
  #allocation0 [shape = 'u32[]', space=smem, size = 0x4, offset = 0x4, fixed_abs, tag = 'smem constant byte address 0x4 - core index']
  #allocation1 [shape = 'u32[72,128]{1,0:T(1,128)}', space=vmem, size = 0x9000, scoped, tag = 'internal scratch']
  #allocation2 [shape = 'bf16[128,16]{1,0:T(8,128)(2,1)}', space=vmem, size = 0x8000, scoped, tag = 'scratch operand']
  #allocation3 [shape = 'f32[128,1]{1,0:T(8,128)}', space=vmem, size = 0x10000, scoped, tag = 'scratch operand']
  #allocation4 [shape = 'f32[128,1]{1,0:T(8,128)}', space=vmem, size = 0x10000, scoped, tag = 'scratch operand']
  #allocation5 [shape = 'f32[128,1]{1,0:T(8,128)}', space=vmem, size = 0x10000, scoped, tag = 'scratch operand']
  %s0 = inlined_call_operand.vmem [shape: bf16[256,128], index: 0, kind: input, shape index: {}]
  %s1 = inlined_call_operand.vmem [shape: bf16[256,128], index: 1, kind: input, shape index: {}]
  %s2 = inlined_call_operand.vmem [shape: bf16[128,1024], index: 2, kind: input, shape index: {}]
  %s3 = inlined_call_operand.vmem [shape: bf16[16,1024], index: 3, kind: input, shape index: {}]
  %s4 = inlined_call_operand.vmem [shape: s32[256,1], index: 4, kind: input, shape index: {}]
  %s5 = inlined_call_operand.vmem [shape: f32[256,1024], index: 5, kind: output, shape index: {0}]
  %s6 = inlined_call_operand.vmem [shape: s8[256,1024], index: 6, kind: output, shape index: {1}]
  %s7 = inlined_call_operand.vmem [shape: f32[256,128], index: 7, kind: output, shape index: {2}]
  %8 = xla_tuple %s5, %s6, %s7
  %s9 = sld [smem:[#allocation0]]
  $region176: #{moco_with_mixture_loss.1} parent=0
    _
  %s11 = ssub.s32 1, %s9
  %s12 = scalar_select 0, %s11, %s9
  $region1: #{moco_with_mixture_loss.1} parent=0
    #allocation6 [shape = 'u8[262144]{0}', space=vmem, size = 0x40000, scoped, tag = 'input window, operand 2']
    #allocation7 [shape = 'u8[32768]{0}', space=vmem, size = 0x8000, scoped, tag = 'input window, operand 3']
    #allocation8 [shape = 'u8[524288]{0}', space=vmem, size = 0x80000, scoped, tag = 'output window, operand 0']
    #allocation9 [shape = 'u8[131072]{0}', space=vmem, size = 0x20000, scoped, tag = 'output window, operand 1']
    loop: start=0, step=1, limit=6
    $region2: #{moco_with_mixture_loss.1} parent=1 // loop_pre_header
      _
    $region3: #{moco_with_mixture_loss.1} parent=1 // loop_header
      %s14 = sphi 0, %s18
      %p15 = scmp.ge.s32.totalorder %s14, 6
      %s21 = sphi 0, %s33
      %s22 = sphi 0, %s29
      %s23 = sphi 0, %s21
      %s24 = sphi 0, %s22
      %s25 = sphi 0, %s23
      %s26 = sphi 0, %s24
      %s36 = sphi 0, %s38
      %s39 = sphi 0, %s36
      %s40 = sphi 0, %s39
      %s56 = sphi 0, %s40
      %s62 = sphi 0, %s64
      %s65 = sphi 0, %s62
      %s66 = sphi 0, %s65
      %s82 = sphi 0, %s66
      %s88 = sphi 0, %s90
      %s91 = sphi 0, %s88
      %s92 = sphi 0, %s91
      %s108 = sphi 0, %s92
      %s114 = sphi 0, %s116
      %s117 = sphi 0, %s114
      %s118 = sphi 0, %s117
      %s134 = sphi 0, %s118
      %s140 = sphi 0, %s142
      %s143 = sphi 0, %s140
      %s144 = sphi 0, %s143
      %s160 = sphi 0, %s144
      %s168 = sphi 0, %s170
      %s171 = sphi 0, %s168
      %s172 = sphi 0, %s171
      %s188 = sphi 0, %s172
      %s196 = sphi 0, %s198
      %s199 = sphi 0, %s196
      %s200 = sphi 0, %s199
      %s216 = sphi 0, %s200
      %s222 = sphi 0, %s224
      %s225 = sphi 0, %s222
      %s226 = sphi 0, %s225
      %s242 = sphi 0, %s226
    $region4: #{moco_with_mixture_loss.1} parent=1 // loop_header_branch
      %17 = sbr.rel (%p15) target = $region8
    $region5: #{moco_with_mixture_loss.1} parent=1 // loop_body
      %s19 = ssub.s32 %s14, 1
      %s20 = ssub.s32 %s14, 2
      %s27 = sadd.s32 1, %s22
      %p28 = scmp.ge.s32.totalorder %s27, 2
      %s29 = scalar_select %p28, 0, %s27
      %s30 = sadd.s32 1, %s21
      %s31 = scalar_select %p28, %s30, %s21
      %p32 = scmp.ge.s32.totalorder %s31, 2
      %s33 = scalar_select %p32, 0, %s31
      %s34 = ssub.s32 %s21, %s33
      %p35 = scmp.eq.s32.totalorder %s34, 0
      %s37 = sadd.s32 %s36, 1
      %s38 = scalar_select %p35, %s36, %s37
      %p41 = pneg %p35
      %p42 = scmp.eq.s32.totalorder %s14, 3
      %p43 = por %p41, %p42
      %p44 = scmp.ne.s32.totalorder %s36, %s39
      %p45 = scmp.eq.s32.totalorder %s14, 0
      %p46 = por %p44, %p45
      %p47 = scmp.ne.s32.totalorder %s36, %s39
      %p48 = scmp.eq.s32.totalorder %s19, 3
      %p49 = por %p47, %p48
      %p50 = scmp.ne.s32.totalorder %s39, %s40
      %p51 = scmp.eq.s32.totalorder %s19, 0
      %p52 = por %p50, %p51
      %p53 = scmp.ne.s32.totalorder %s39, %s40
      %p54 = scmp.eq.s32.totalorder %s20, 3
      %p55 = por %p53, %p54
      %p57 = scmp.ne.s32.totalorder %s40, %s56
      %p58 = scmp.eq.s32.totalorder %s20, 0
      %p59 = por %p57, %p58
      %s60 = ssub.s32 %s21, %s33
      %p61 = scmp.eq.s32.totalorder %s60, 0
      %s63 = sadd.s32 %s62, 1
      %s64 = scalar_select %p61, %s62, %s63
      %p67 = pneg %p61
      %p68 = scmp.eq.s32.totalorder %s14, 3
      %p69 = por %p67, %p68
      %p70 = scmp.ne.s32.totalorder %s62, %s65
      %p71 = scmp.eq.s32.totalorder %s14, 0
      %p72 = por %p70, %p71
      %p73 = scmp.ne.s32.totalorder %s62, %s65
      %p74 = scmp.eq.s32.totalorder %s19, 3
      %p75 = por %p73, %p74
      %p76 = scmp.ne.s32.totalorder %s65, %s66
      %p77 = scmp.eq.s32.totalorder %s19, 0
      %p78 = por %p76, %p77
      %p79 = scmp.ne.s32.totalorder %s65, %s66
      %p80 = scmp.eq.s32.totalorder %s20, 3
      %p81 = por %p79, %p80
      %p83 = scmp.ne.s32.totalorder %s66, %s82
      %p84 = scmp.eq.s32.totalorder %s20, 0
      %p85 = por %p83, %p84
      %s86 = ssub.s32 %s22, %s29
      %p87 = scmp.eq.s32.totalorder %s86, 0
      %s89 = sadd.s32 %s88, 1
      %s90 = scalar_select %p87, %s88, %s89
      %p93 = pneg %p87
      %p94 = scmp.eq.s32.totalorder %s14, 3
      %p95 = por %p93, %p94
      %p96 = scmp.ne.s32.totalorder %s88, %s91
      %p97 = scmp.eq.s32.totalorder %s14, 0
      %p98 = por %p96, %p97
      %p99 = scmp.ne.s32.totalorder %s88, %s91
      %p100 = scmp.eq.s32.totalorder %s19, 3
      %p101 = por %p99, %p100
      %p102 = scmp.ne.s32.totalorder %s91, %s92
      %p103 = scmp.eq.s32.totalorder %s19, 0
      %p104 = por %p102, %p103
      %p105 = scmp.ne.s32.totalorder %s91, %s92
      %p106 = scmp.eq.s32.totalorder %s20, 3
      %p107 = por %p105, %p106
      %p109 = scmp.ne.s32.totalorder %s92, %s108
      %p110 = scmp.eq.s32.totalorder %s20, 0
      %p111 = por %p109, %p110
      %s112 = ssub.s32 %s22, %s29
      %p113 = scmp.eq.s32.totalorder %s112, 0
      %s115 = sadd.s32 %s114, 1
      %s116 = scalar_select %p113, %s114, %s115
      %p119 = pneg %p113
      %p120 = scmp.eq.s32.totalorder %s14, 3
      %p121 = por %p119, %p120
      %p122 = scmp.ne.s32.totalorder %s114, %s117
      %p123 = scmp.eq.s32.totalorder %s14, 0
      %p124 = por %p122, %p123
      %p125 = scmp.ne.s32.totalorder %s114, %s117
      %p126 = scmp.eq.s32.totalorder %s19, 3
      %p127 = por %p125, %p126
      %p128 = scmp.ne.s32.totalorder %s117, %s118
      %p129 = scmp.eq.s32.totalorder %s19, 0
      %p130 = por %p128, %p129
      %p131 = scmp.ne.s32.totalorder %s117, %s118
      %p132 = scmp.eq.s32.totalorder %s20, 3
      %p133 = por %p131, %p132
      %p135 = scmp.ne.s32.totalorder %s118, %s134
      %p136 = scmp.eq.s32.totalorder %s20, 0
      %p137 = por %p135, %p136
      %s138 = ssub.s32 %s21, %s33
      %p139 = scmp.eq.s32.totalorder %s138, 0
      %s141 = sadd.s32 %s140, 1
      %s142 = scalar_select %p139, %s140, %s141
      %p145 = pneg %p139
      %p146 = scmp.eq.s32.totalorder %s14, 3
      %p147 = por %p145, %p146
      %p148 = scmp.ne.s32.totalorder %s140, %s143
      %p149 = scmp.eq.s32.totalorder %s14, 0
      %p150 = por %p148, %p149
      %p151 = scmp.ne.s32.totalorder %s140, %s143
      %p152 = scmp.eq.s32.totalorder %s19, 3
      %p153 = por %p151, %p152
      %p154 = scmp.ne.s32.totalorder %s143, %s144
      %p155 = scmp.eq.s32.totalorder %s19, 0
      %p156 = por %p154, %p155
      %p157 = scmp.ne.s32.totalorder %s143, %s144
      %p158 = scmp.eq.s32.totalorder %s20, 3
      %p159 = por %p157, %p158
      %p161 = scmp.ne.s32.totalorder %s144, %s160
      %p162 = scmp.eq.s32.totalorder %s20, 0
      %p163 = por %p161, %p162
      %s164 = ssub.s32 %s21, %s33
      %s165 = ssub.s32 %s22, %s29
      %s166 = sor.u32 %s164, %s165
      %p167 = scmp.eq.s32.totalorder %s166, 0
      %s169 = sadd.s32 %s168, 1
      %s170 = scalar_select %p167, %s168, %s169
      %p173 = pneg %p167
      %p174 = scmp.eq.s32.totalorder %s14, 3
      %p175 = por %p173, %p174
      %p176 = scmp.ne.s32.totalorder %s168, %s171
      %p177 = scmp.eq.s32.totalorder %s14, 0
      %p178 = por %p176, %p177
      %p179 = scmp.ne.s32.totalorder %s168, %s171
      %p180 = scmp.eq.s32.totalorder %s19, 3
      %p181 = por %p179, %p180
      %p182 = scmp.ne.s32.totalorder %s171, %s172
      %p183 = scmp.eq.s32.totalorder %s19, 0
      %p184 = por %p182, %p183
      %p185 = scmp.ne.s32.totalorder %s171, %s172
      %p186 = scmp.eq.s32.totalorder %s20, 3
      %p187 = por %p185, %p186
      %p189 = scmp.ne.s32.totalorder %s172, %s188
      %p190 = scmp.eq.s32.totalorder %s20, 0
      %p191 = por %p189, %p190
      %s192 = ssub.s32 %s21, %s33
      %s193 = ssub.s32 %s22, %s29
      %s194 = sor.u32 %s192, %s193
      %p195 = scmp.eq.s32.totalorder %s194, 0
      %s197 = sadd.s32 %s196, 1
      %s198 = scalar_select %p195, %s196, %s197
      %p201 = pneg %p195
      %p202 = scmp.eq.s32.totalorder %s14, 3
      %p203 = por %p201, %p202
      %p204 = scmp.ne.s32.totalorder %s196, %s199
      %p205 = scmp.eq.s32.totalorder %s14, 0
      %p206 = por %p204, %p205
      %p207 = scmp.ne.s32.totalorder %s196, %s199
      %p208 = scmp.eq.s32.totalorder %s19, 3
      %p209 = por %p207, %p208
      %p210 = scmp.ne.s32.totalorder %s199, %s200
      %p211 = scmp.eq.s32.totalorder %s19, 0
      %p212 = por %p210, %p211
      %p213 = scmp.ne.s32.totalorder %s199, %s200
      %p214 = scmp.eq.s32.totalorder %s20, 3
      %p215 = por %p213, %p214
      %p217 = scmp.ne.s32.totalorder %s200, %s216
      %p218 = scmp.eq.s32.totalorder %s20, 0
      %p219 = por %p217, %p218
      %s220 = ssub.s32 %s21, %s33
      %p221 = scmp.eq.s32.totalorder %s220, 0
      %s223 = sadd.s32 %s222, 1
      %s224 = scalar_select %p221, %s222, %s223
      %p227 = pneg %p221
      %p228 = scmp.eq.s32.totalorder %s14, 3
      %p229 = por %p227, %p228
      %p230 = scmp.ne.s32.totalorder %s222, %s225
      %p231 = scmp.eq.s32.totalorder %s14, 0
      %p232 = por %p230, %p231
      %p233 = scmp.ne.s32.totalorder %s222, %s225
      %p234 = scmp.eq.s32.totalorder %s19, 3
      %p235 = por %p233, %p234
      %p236 = scmp.ne.s32.totalorder %s225, %s226
      %p237 = scmp.eq.s32.totalorder %s19, 0
      %p238 = por %p236, %p237
      %p239 = scmp.ne.s32.totalorder %s225, %s226
      %p240 = scmp.eq.s32.totalorder %s20, 3
      %p241 = por %p239, %p240
      %p243 = scmp.ne.s32.totalorder %s226, %s242
      %p244 = scmp.eq.s32.totalorder %s20, 0
      %p245 = por %p243, %p244
      %p246 = scmp.le.s32.totalorder 1, %s14
      %p247 = scmp.lt.s32.totalorder %s14, 5
      %p248 = pnand %p246, %p247
      %p249 = pneg %p248
      // Predicated region
      $region9: #{moco_with_mixture_loss.1} parent=5 // pred_check
        _
      $region10: #{moco_with_mixture_loss.1} parent=5 // pred_check_branch
        %251 = sbr.rel (%p248) target = $region12
      $region11: #{moco_with_mixture_loss.1} parent=5 // pred_region
        %s252 = ssub.s32 %s14, 1
      $region12: #{moco_with_mixture_loss.1} parent=5 // pred_fallthru
        _
      %p253 = scmp.lt.s32.totalorder %s14, 4
      // Predicated region
      $region13: #{moco_with_mixture_loss.1} parent=5 // pred_check
        %p254 = pneg %p253
      $region14: #{moco_with_mixture_loss.1} parent=5 // pred_check_branch
        %256 = sbr.rel (%p254) target = $region16
      $region15: #{moco_with_mixture_loss.1} parent=5 // pred_region
        // Predicated region
        $region17: #{moco_with_mixture_loss.1} parent=15 // pred_check
          %p257 = pneg %p46
        $region18: #{moco_with_mixture_loss.1} parent=15 // pred_check_branch
          %259 = sbr.rel (%p257) target = $region20
        $region19: #{moco_with_mixture_loss.1} parent=15 // pred_region
          %s260 = smul.u32 16, %s21
          %p261 = scmp.lt.s32.totalorder %s260, 31
          %s262 = scalar_select %p261, %s260, 31
          %s263 = smul.addr %s262, 4
          %s264 = scalar_lea.vmem %s0, %s263
          %s265 = smul.u32 16, %s21
        $region20: #{moco_with_mixture_loss.1} parent=15 // pred_fallthru
          _
        // Predicated region
        $region21: #{moco_with_mixture_loss.1} parent=15 // pred_check
          %p266 = pneg %p72
        $region22: #{moco_with_mixture_loss.1} parent=15 // pred_check_branch
          %268 = sbr.rel (%p266) target = $region24
        $region23: #{moco_with_mixture_loss.1} parent=15 // pred_region
          %s269 = smul.u32 16, %s21
          %p270 = scmp.lt.s32.totalorder %s269, 31
          %s271 = scalar_select %p270, %s269, 31
          %s272 = smul.addr %s271, 4
          %s273 = scalar_lea.vmem %s1, %s272
          %s274 = smul.u32 16, %s21
        $region24: #{moco_with_mixture_loss.1} parent=15 // pred_fallthru
          _
        // Predicated region
        $region25: #{moco_with_mixture_loss.1} parent=15 // pred_check
          %p275 = pneg %p98
        $region26: #{moco_with_mixture_loss.1} parent=15 // pred_check_branch
          %277 = sbr.rel (%p275) target = $region28
        $region27: #{moco_with_mixture_loss.1} parent=15 // pred_region
          %s278 = sand.u32 %s88, 1
          %s279 = sand.u32 %s88, 1
          %s280 = smul.addr %s279, 256
          %s281 = scalar_lea.vmem [#allocation6], %s280
          %s282 = smul.u32 4, %s22
          %s283 = smul.addr %s282, 4
          %s284 = scalar_lea.vmem %s2, %s283
          // Predicated region
          $region29: #{moco_with_mixture_loss.1} parent=27 // pred_check
            _
          $region30: #{moco_with_mixture_loss.1} parent=27 // pred_check_branch
            %286 = sbr.rel (0) target = $region32
          $region31: #{moco_with_mixture_loss.1} parent=27 // pred_region
            // Predicated region
            $region33: #{moco_with_mixture_loss.1} parent=31 // pred_check
              _
            $region34: #{moco_with_mixture_loss.1} parent=31 // pred_check_branch
              %288 = sbr.rel (0) target = $region36
            $region35: #{moco_with_mixture_loss.1} parent=31 // pred_region
              loop: start=0, step=1, limit=1
              $region37: #{moco_with_mixture_loss.1} parent=35 // loop_pre_header
                _
              $region38: #{moco_with_mixture_loss.1} parent=35 // loop_header
                %s290 = sphi 0, %s294
                %p291 = scmp.ge.s32.totalorder %s290, 1
                %s295 = sphi %s284, %s284
                %s296 = sphi %s281, %s281
              $region39: #{moco_with_mixture_loss.1} parent=35 // loop_header_branch
                %293 = sbr.rel (%p291) target = $region43
              $region40: #{moco_with_mixture_loss.1} parent=35 // loop_body
                %v297 = vld [vmem:[%s295] sm:$0xff]
                %298 = vst [vmem:[%s296] sm:$0xff] %v297
                %v299 = vld [vmem:[%s295 + $0x8] sm:$0xff]
                %300 = vst [vmem:[%s296 + $0x8] sm:$0xff] %v299
                %v301 = vld [vmem:[%s295 + $0x20] sm:$0xff]
                %302 = vst [vmem:[%s296 + $0x10] sm:$0xff] %v301
                %v303 = vld [vmem:[%s295 + $0x28] sm:$0xff]
                %304 = vst [vmem:[%s296 + $0x18] sm:$0xff] %v303
                %v305 = vld [vmem:[%s295 + $0x40] sm:$0xff]
                %306 = vst [vmem:[%s296 + $0x20] sm:$0xff] %v305
                %v307 = vld [vmem:[%s295 + $0x48] sm:$0xff]
                %308 = vst [vmem:[%s296 + $0x28] sm:$0xff] %v307
                %v309 = vld [vmem:[%s295 + $0x60] sm:$0xff]
                %310 = vst [vmem:[%s296 + $0x30] sm:$0xff] %v309
                %v311 = vld [vmem:[%s295 + $0x68] sm:$0xff]
                %312 = vst [vmem:[%s296 + $0x38] sm:$0xff] %v311
                %v313 = vld [vmem:[%s295 + $0x80] sm:$0xff]
                %314 = vst [vmem:[%s296 + $0x40] sm:$0xff] %v313
                %v315 = vld [vmem:[%s295 + $0x88] sm:$0xff]
                %316 = vst [vmem:[%s296 + $0x48] sm:$0xff] %v315
                %v317 = vld [vmem:[%s295 + $0xa0] sm:$0xff]
                %318 = vst [vmem:[%s296 + $0x50] sm:$0xff] %v317
                %v319 = vld [vmem:[%s295 + $0xa8] sm:$0xff]
                %320 = vst [vmem:[%s296 + $0x58] sm:$0xff] %v319
                %v321 = vld [vmem:[%s295 + $0xc0] sm:$0xff]
                %322 = vst [vmem:[%s296 + $0x60] sm:$0xff] %v321
                %v323 = vld [vmem:[%s295 + $0xc8] sm:$0xff]
                %324 = vst [vmem:[%s296 + $0x68] sm:$0xff] %v323
                %v325 = vld [vmem:[%s295 + $0xe0] sm:$0xff]
                %326 = vst [vmem:[%s296 + $0x70] sm:$0xff] %v325
                %v327 = vld [vmem:[%s295 + $0xe8] sm:$0xff]
                %328 = vst [vmem:[%s296 + $0x78] sm:$0xff] %v327
                %v329 = vld [vmem:[%s295 + $0x100] sm:$0xff]
                %330 = vst [vmem:[%s296 + $0x80] sm:$0xff] %v329
                %v331 = vld [vmem:[%s295 + $0x108] sm:$0xff]
                %332 = vst [vmem:[%s296 + $0x88] sm:$0xff] %v331
                %v333 = vld [vmem:[%s295 + $0x120] sm:$0xff]
                %334 = vst [vmem:[%s296 + $0x90] sm:$0xff] %v333
                %v335 = vld [vmem:[%s295 + $0x128] sm:$0xff]
                %336 = vst [vmem:[%s296 + $0x98] sm:$0xff] %v335
                %v337 = vld [vmem:[%s295 + $0x140] sm:$0xff]
                %338 = vst [vmem:[%s296 + $0xa0] sm:$0xff] %v337
                %v339 = vld [vmem:[%s295 + $0x148] sm:$0xff]
                %340 = vst [vmem:[%s296 + $0xa8] sm:$0xff] %v339
                %v341 = vld [vmem:[%s295 + $0x160] sm:$0xff]
                %342 = vst [vmem:[%s296 + $0xb0] sm:$0xff] %v341
                %v343 = vld [vmem:[%s295 + $0x168] sm:$0xff]
                %344 = vst [vmem:[%s296 + $0xb8] sm:$0xff] %v343
                %v345 = vld [vmem:[%s295 + $0x180] sm:$0xff]
                %346 = vst [vmem:[%s296 + $0xc0] sm:$0xff] %v345
                %v347 = vld [vmem:[%s295 + $0x188] sm:$0xff]
                %348 = vst [vmem:[%s296 + $0xc8] sm:$0xff] %v347
                %v349 = vld [vmem:[%s295 + $0x1a0] sm:$0xff]
                %350 = vst [vmem:[%s296 + $0xd0] sm:$0xff] %v349
                %v351 = vld [vmem:[%s295 + $0x1a8] sm:$0xff]
                %352 = vst [vmem:[%s296 + $0xd8] sm:$0xff] %v351
                %v353 = vld [vmem:[%s295 + $0x1c0] sm:$0xff]
                %354 = vst [vmem:[%s296 + $0xe0] sm:$0xff] %v353
                %v355 = vld [vmem:[%s295 + $0x1c8] sm:$0xff]
                %356 = vst [vmem:[%s296 + $0xe8] sm:$0xff] %v355
                %v357 = vld [vmem:[%s295 + $0x1e0] sm:$0xff]
                %358 = vst [vmem:[%s296 + $0xf0] sm:$0xff] %v357
                %v359 = vld [vmem:[%s295 + $0x1e8] sm:$0xff]
                %360 = vst [vmem:[%s296 + $0xf8] sm:$0xff] %v359
              $region41: #{moco_with_mixture_loss.1} parent=35 // loop_footer
                %s294 = sadd.s32 1, %s290
              $region42: #{moco_with_mixture_loss.1} parent=35 // loop_footer_branch
                %289 = sbr.rel target = $region38
              $region43: #{moco_with_mixture_loss.1} parent=35 // loop_exit
                _
            $region36: #{moco_with_mixture_loss.1} parent=31 // pred_fallthru
              _
            // Predicated region
            $region44: #{moco_with_mixture_loss.1} parent=31 // pred_check
              _
            $region45: #{moco_with_mixture_loss.1} parent=31 // pred_check_branch
              %362 = sbr.rel target = $region47
            $region46: #{moco_with_mixture_loss.1} parent=31 // pred_region
              _
            $region47: #{moco_with_mixture_loss.1} parent=31 // pred_fallthru
              _
          $region32: #{moco_with_mixture_loss.1} parent=27 // pred_fallthru
            _
          %363 = vnop
        $region28: #{moco_with_mixture_loss.1} parent=15 // pred_fallthru
          _
        // Predicated region
        $region48: #{moco_with_mixture_loss.1} parent=15 // pred_check
          %p364 = pneg %p124
        $region49: #{moco_with_mixture_loss.1} parent=15 // pred_check_branch
          %366 = sbr.rel (%p364) target = $region51
        $region50: #{moco_with_mixture_loss.1} parent=15 // pred_region
          %s367 = sand.u32 %s114, 1
          %s368 = sand.u32 %s114, 1
          %s369 = smul.addr %s368, 32
          %s370 = scalar_lea.vmem [#allocation7], %s369
          %s371 = smul.u32 4, %s22
          %s372 = smul.addr %s371, 4
          %s373 = scalar_lea.vmem %s3, %s372
          // Predicated region
          $region52: #{moco_with_mixture_loss.1} parent=50 // pred_check
            _
          $region53: #{moco_with_mixture_loss.1} parent=50 // pred_check_branch
            %375 = sbr.rel (0) target = $region55
          $region54: #{moco_with_mixture_loss.1} parent=50 // pred_region
            // Predicated region
            $region56: #{moco_with_mixture_loss.1} parent=54 // pred_check
              _
            $region57: #{moco_with_mixture_loss.1} parent=54 // pred_check_branch
              %377 = sbr.rel (0) target = $region59
            $region58: #{moco_with_mixture_loss.1} parent=54 // pred_region
              loop: start=0, step=1, limit=1
              $region60: #{moco_with_mixture_loss.1} parent=58 // loop_pre_header
                _
              $region61: #{moco_with_mixture_loss.1} parent=58 // loop_header
                %s379 = sphi 0, %s383
                %p380 = scmp.ge.s32.totalorder %s379, 1
                %s384 = sphi %s373, %s373
                %s385 = sphi %s370, %s370
              $region62: #{moco_with_mixture_loss.1} parent=58 // loop_header_branch
                %382 = sbr.rel (%p380) target = $region66
              $region63: #{moco_with_mixture_loss.1} parent=58 // loop_body
                %v386 = vld [vmem:[%s384] sm:$0xff]
                %387 = vst [vmem:[%s385] sm:$0xff] %v386
                %v388 = vld [vmem:[%s384 + $0x8] sm:$0xff]
                %389 = vst [vmem:[%s385 + $0x8] sm:$0xff] %v388
                %v390 = vld [vmem:[%s384 + $0x20] sm:$0xff]
                %391 = vst [vmem:[%s385 + $0x10] sm:$0xff] %v390
                %v392 = vld [vmem:[%s384 + $0x28] sm:$0xff]
                %393 = vst [vmem:[%s385 + $0x18] sm:$0xff] %v392
              $region64: #{moco_with_mixture_loss.1} parent=58 // loop_footer
                %s383 = sadd.s32 1, %s379
              $region65: #{moco_with_mixture_loss.1} parent=58 // loop_footer_branch
                %378 = sbr.rel target = $region61
              $region66: #{moco_with_mixture_loss.1} parent=58 // loop_exit
                _
            $region59: #{moco_with_mixture_loss.1} parent=54 // pred_fallthru
              _
            // Predicated region
            $region67: #{moco_with_mixture_loss.1} parent=54 // pred_check
              _
            $region68: #{moco_with_mixture_loss.1} parent=54 // pred_check_branch
              %395 = sbr.rel target = $region70
            $region69: #{moco_with_mixture_loss.1} parent=54 // pred_region
              _
            $region70: #{moco_with_mixture_loss.1} parent=54 // pred_fallthru
              _
          $region55: #{moco_with_mixture_loss.1} parent=50 // pred_fallthru
            _
          %396 = vnop
        $region51: #{moco_with_mixture_loss.1} parent=15 // pred_fallthru
          _
        // Predicated region
        $region71: #{moco_with_mixture_loss.1} parent=15 // pred_check
          %p397 = pneg %p150
        $region72: #{moco_with_mixture_loss.1} parent=15 // pred_check_branch
          %399 = sbr.rel (%p397) target = $region74
        $region73: #{moco_with_mixture_loss.1} parent=15 // pred_region
          %s400 = smul.u32 16, %s21
          %p401 = scmp.lt.s32.totalorder %s400, 31
          %s402 = scalar_select %p401, %s400, 31
          %s403 = smul.addr %s402, 8
          %s404 = scalar_lea.vmem %s4, %s403
          %s405 = smul.u32 16, %s21
        $region74: #{moco_with_mixture_loss.1} parent=15 // pred_fallthru
          _
      $region16: #{moco_with_mixture_loss.1} parent=5 // pred_fallthru
        _
      %p406 = scmp.le.s32.totalorder 1, %s14
      %p407 = scmp.lt.s32.totalorder %s14, 5
      %p408 = pnand %p406, %p407
      %p409 = pneg %p408
      // Predicated region
      $region75: #{moco_with_mixture_loss.1} parent=5 // pred_check
        _
      $region76: #{moco_with_mixture_loss.1} parent=5 // pred_check_branch
        %411 = sbr.rel (%p408) target = $region78
      $region77: #{moco_with_mixture_loss.1} parent=5 // pred_region
        %s412 = ssub.s32 %s14, 1
        %s413 = sand.u32 %s91, 1
        %s414 = sand.u32 %s91, 1
        %s415 = smul.addr %s414, 256
        %s416 = scalar_lea.vmem [#allocation6], %s415
        // Predicated region
        $region79: #{moco_with_mixture_loss.1} parent=77 // pred_check
          %p417 = pneg %p104
        $region80: #{moco_with_mixture_loss.1} parent=77 // pred_check_branch
          %419 = sbr.rel (%p417) target = $region82
        $region81: #{moco_with_mixture_loss.1} parent=77 // pred_region
          _
        $region82: #{moco_with_mixture_loss.1} parent=77 // pred_fallthru
          _
        %s420 = sand.u32 %s117, 1
        %s421 = sand.u32 %s117, 1
        %s422 = smul.addr %s421, 32
        %s423 = scalar_lea.vmem [#allocation7], %s422
        // Predicated region
        $region83: #{moco_with_mixture_loss.1} parent=77 // pred_check
          %p424 = pneg %p130
        $region84: #{moco_with_mixture_loss.1} parent=77 // pred_check_branch
          %426 = sbr.rel (%p424) target = $region86
        $region85: #{moco_with_mixture_loss.1} parent=77 // pred_region
          _
        $region86: #{moco_with_mixture_loss.1} parent=77 // pred_fallthru
          _
        %s427 = smul.u32 16, %s23
        %p428 = scmp.lt.s32.totalorder %s427, 31
        %s429 = scalar_select %p428, %s427, 31
        %s430 = smul.addr %s429, 4
        %s431 = scalar_lea.vmem %s0, %s430
        %p432 = pneg %p52
        %p433 = pneg %p49
        %s434 = smul.u32 16, %s23
        %p435 = scmp.lt.s32.totalorder %s434, 31
        %s436 = scalar_select %p435, %s434, 31
        %s437 = smul.addr %s436, 4
        %s438 = scalar_lea.vmem %s1, %s437
        %p439 = pneg %p78
        %p440 = pneg %p75
        %s441 = sand.u32 %s91, 1
        %s442 = sand.u32 %s91, 1
        %s443 = smul.addr %s442, 256
        %s444 = scalar_lea.vmem [#allocation6], %s443
        %p445 = pneg %p104
        %p446 = pneg %p101
        %s447 = sand.u32 %s117, 1
        %s448 = sand.u32 %s117, 1
        %s449 = smul.addr %s448, 32
        %s450 = scalar_lea.vmem [#allocation7], %s449
        %p451 = pneg %p130
        %p452 = pneg %p127
        %s453 = smul.u32 16, %s23
        %p454 = scmp.lt.s32.totalorder %s453, 31
        %s455 = scalar_select %p454, %s453, 31
        %s456 = smul.addr %s455, 8
        %s457 = scalar_lea.vmem %s4, %s456
        %p458 = pneg %p156
        %p459 = pneg %p153
        %p460 = pneg %p184
        %p461 = pneg %p181
        %s462 = sand.u32 %s171, 1
        %s463 = sand.u32 %s171, 1
        %s464 = smul.addr %s463, 512
        %s465 = scalar_lea.vmem [#allocation8], %s464
        %p466 = pneg %p212
        %p467 = pneg %p209
        %s468 = sand.u32 %s199, 1
        %s469 = sand.u32 %s199, 1
        %s470 = smul.addr %s469, 128
        %s471 = scalar_lea.vmem [#allocation9], %s470
        %p472 = pneg %p238
        %p473 = pneg %p235
        %s474 = smul.u32 16, %s23
        %p475 = scmp.lt.s32.totalorder %s474, 31
        %s476 = scalar_select %p475, %s474, 31
        %s477 = smul.addr %s476, 8
        %s478 = scalar_lea.vmem %s7, %s477
        %s479 = smul.u32 16, %s23
        %p480 = scmp.lt.s32.totalorder %s479, 31
        %s481 = scalar_select %p480, %s479, 31
        %s482 = smul.addr %s481, 4
        %s483 = scalar_lea.vmem %s0, %s482
        %s484 = smul.u32 16, %s23
        %s485 = smul.u32 16, %s23
        %p486 = scmp.lt.s32.totalorder %s485, 31
        %s487 = scalar_select %p486, %s485, 31
        %s488 = smul.addr %s487, 4
        %s489 = scalar_lea.vmem %s1, %s488
        %s490 = smul.u32 16, %s23
        %s491 = smul.u32 4, %s24
        %s492 = smul.u32 4, %s24
        %s493 = smul.u32 16, %s23
        %p494 = scmp.lt.s32.totalorder %s493, 31
        %s495 = scalar_select %p494, %s493, 31
        %s496 = smul.addr %s495, 8
        %s497 = scalar_lea.vmem %s4, %s496
        %s498 = smul.u32 16, %s23
        %s499 = smul.u32 16, %s23
        %s500 = smul.u32 4, %s24
        %s501 = smul.u32 16, %s23
        %s502 = smul.u32 4, %s24
        %s503 = smul.u32 16, %s23
        %p504 = scmp.lt.s32.totalorder %s503, 31
        %s505 = scalar_select %p504, %s503, 31
        %s506 = smul.addr %s505, 8
        %s507 = scalar_lea.vmem %s7, %s506
        %s508 = smul.u32 16, %s23
        %p510 = scmp.eq.s32.totalorder %s24, 0
        // Predicated region
        $region87: #{moco_with_mixture_loss.1} parent=77 // pred_check
          %p511 = pneg %p510
        $region88: #{moco_with_mixture_loss.1} parent=77 // pred_check_branch
          %513 = sbr.rel (%p511) target = $region90
        $region89: #{moco_with_mixture_loss.1} parent=77 // pred_region
          %v514 = vld [vmem:[%s483] sm:$0xf]
          %v515 = vld [vmem:[%s483 + $0x4] sm:$0xf]
          %v516 = vld [vmem:[%s483 + $0x8] sm:$0xf]
          %v517 = vld [vmem:[%s483 + $0xc] sm:$0xf]
          %v518 = vld [vmem:[%s483 + $0x10] sm:$0xf]
          %v519 = vld [vmem:[%s483 + $0x14] sm:$0xf]
          %v520 = vld [vmem:[%s483 + $0x18] sm:$0xf]
          %v521 = vld [vmem:[%s483 + $0x1c] sm:$0xf]
          %v522 = vld [vmem:[%s483 + $0x20] sm:$0xf]
          %v523 = vld [vmem:[%s483 + $0x24] sm:$0xf]
          %v524 = vld [vmem:[%s483 + $0x28] sm:$0xf]
          %v525 = vld [vmem:[%s483 + $0x2c] sm:$0xf]
          %v526 = vld [vmem:[%s483 + $0x30] sm:$0xf]
          %v527 = vld [vmem:[%s483 + $0x34] sm:$0xf]
          %v528 = vld [vmem:[%s483 + $0x38] sm:$0xf]
          %v529 = vld [vmem:[%s483 + $0x3c] sm:$0xf]
          %v530 = vunpack.c.l.bf16 %v514
          %v531 = vunpack.c.l.bf16 %v515
          %v532 = vunpack.c.l.bf16 %v516
          %v533 = vunpack.c.l.bf16 %v517
          %v534 = vunpack.c.l.bf16 %v518
          %v535 = vunpack.c.l.bf16 %v519
          %v536 = vunpack.c.l.bf16 %v520
          %v537 = vunpack.c.l.bf16 %v521
          %v538 = vunpack.c.l.bf16 %v522
          %v539 = vunpack.c.l.bf16 %v523
          %v540 = vunpack.c.l.bf16 %v524
          %v541 = vunpack.c.l.bf16 %v525
          %v542 = vunpack.c.l.bf16 %v526
          %v543 = vunpack.c.l.bf16 %v527
          %v544 = vunpack.c.l.bf16 %v528
          %v545 = vunpack.c.l.bf16 %v529
          %v546 = vld [vmem:[%s489] sm:$0xf]
          %v547 = vld [vmem:[%s489 + $0x4] sm:$0xf]
          %v548 = vld [vmem:[%s489 + $0x8] sm:$0xf]
          %v549 = vld [vmem:[%s489 + $0xc] sm:$0xf]
          %v550 = vld [vmem:[%s489 + $0x10] sm:$0xf]
          %v551 = vld [vmem:[%s489 + $0x14] sm:$0xf]
          %v552 = vld [vmem:[%s489 + $0x18] sm:$0xf]
          %v553 = vld [vmem:[%s489 + $0x1c] sm:$0xf]
          %v554 = vld [vmem:[%s489 + $0x20] sm:$0xf]
          %v555 = vld [vmem:[%s489 + $0x24] sm:$0xf]
          %v556 = vld [vmem:[%s489 + $0x28] sm:$0xf]
          %v557 = vld [vmem:[%s489 + $0x2c] sm:$0xf]
          %v558 = vld [vmem:[%s489 + $0x30] sm:$0xf]
          %v559 = vld [vmem:[%s489 + $0x34] sm:$0xf]
          %v560 = vld [vmem:[%s489 + $0x38] sm:$0xf]
          %v561 = vld [vmem:[%s489 + $0x3c] sm:$0xf]
          %v562 = vunpack.c.l.bf16 %v546
          %v563 = vunpack.c.l.bf16 %v547
          %v564 = vunpack.c.l.bf16 %v548
          %v565 = vunpack.c.l.bf16 %v549
          %v566 = vunpack.c.l.bf16 %v550
          %v567 = vunpack.c.l.bf16 %v551
          %v568 = vunpack.c.l.bf16 %v552
          %v569 = vunpack.c.l.bf16 %v553
          %v570 = vunpack.c.l.bf16 %v554
          %v571 = vunpack.c.l.bf16 %v555
          %v572 = vunpack.c.l.bf16 %v556
          %v573 = vunpack.c.l.bf16 %v557
          %v574 = vunpack.c.l.bf16 %v558
          %v575 = vunpack.c.l.bf16 %v559
          %v576 = vunpack.c.l.bf16 %v560
          %v577 = vunpack.c.l.bf16 %v561
          %v578 = vmul.f32 %v530, %v562
          %v579 = vmul.f32 %v531, %v563
          %v580 = vmul.f32 %v532, %v564
          %v581 = vmul.f32 %v533, %v565
          %v582 = vmul.f32 %v534, %v566
          %v583 = vmul.f32 %v535, %v567
          %v584 = vmul.f32 %v536, %v568
          %v585 = vmul.f32 %v537, %v569
          %v586 = vmul.f32 %v538, %v570
          %v587 = vmul.f32 %v539, %v571
          %v588 = vmul.f32 %v540, %v572
          %v589 = vmul.f32 %v541, %v573
          %v590 = vmul.f32 %v542, %v574
          %v591 = vmul.f32 %v543, %v575
          %v592 = vmul.f32 %v544, %v576
          %v593 = vmul.f32 %v545, %v577
          %594 = vadd.xlane.f32.xlu0 %v578
          %v595 = vpop.xlane.xlu0 %594
          %596 = vadd.xlane.f32.xlu0 %v579
          %v597 = vpop.xlane.xlu0 %596
          %598 = vadd.xlane.f32.xlu0 %v580
          %v599 = vpop.xlane.xlu0 %598
          %600 = vadd.xlane.f32.xlu0 %v581
          %v601 = vpop.xlane.xlu0 %600
          %602 = vadd.xlane.f32.xlu0 %v582
          %v603 = vpop.xlane.xlu0 %602
          %604 = vadd.xlane.f32.xlu0 %v583
          %v605 = vpop.xlane.xlu0 %604
          %606 = vadd.xlane.f32.xlu0 %v584
          %v607 = vpop.xlane.xlu0 %606
          %608 = vadd.xlane.f32.xlu0 %v585
          %v609 = vpop.xlane.xlu0 %608
          %610 = vadd.xlane.f32.xlu0 %v586
          %v611 = vpop.xlane.xlu0 %610
          %612 = vadd.xlane.f32.xlu0 %v587
          %v613 = vpop.xlane.xlu0 %612
          %614 = vadd.xlane.f32.xlu0 %v588
          %v615 = vpop.xlane.xlu0 %614
          %616 = vadd.xlane.f32.xlu0 %v589
          %v617 = vpop.xlane.xlu0 %616
          %618 = vadd.xlane.f32.xlu0 %v590
          %v619 = vpop.xlane.xlu0 %618
          %620 = vadd.xlane.f32.xlu0 %v591
          %v621 = vpop.xlane.xlu0 %620
          %622 = vadd.xlane.f32.xlu0 %v592
          %v623 = vpop.xlane.xlu0 %622
          %624 = vadd.xlane.f32.xlu0 %v593
          %v625 = vpop.xlane.xlu0 %624
          %v626 = vmul.f32 %v595, 5.0
          %v627 = vmul.f32 %v597, 5.0
          %v628 = vmul.f32 %v599, 5.0
          %v629 = vmul.f32 %v601, 5.0
          %v630 = vmul.f32 %v603, 5.0
          %v631 = vmul.f32 %v605, 5.0
          %v632 = vmul.f32 %v607, 5.0
          %v633 = vmul.f32 %v609, 5.0
          %v634 = vmul.f32 %v611, 5.0
          %v635 = vmul.f32 %v613, 5.0
          %v636 = vmul.f32 %v615, 5.0
          %v637 = vmul.f32 %v617, 5.0
          %v638 = vmul.f32 %v619, 5.0
          %v639 = vmul.f32 %v621, 5.0
          %v640 = vmul.f32 %v623, 5.0
          %v641 = vmul.f32 %v625, 5.0
          %vm642 = vcmask 7168
          %643 = vst.msk [vmem:[#allocation3] sm:$0xff] %vm642, %v626
          %644 = vst.msk [vmem:[#allocation3 + $0x8] sm:$0xff] %vm642, %v627
          %645 = vst.msk [vmem:[#allocation3 + $0x10] sm:$0xff] %vm642, %v628
          %646 = vst.msk [vmem:[#allocation3 + $0x18] sm:$0xff] %vm642, %v629
          %647 = vst.msk [vmem:[#allocation3 + $0x20] sm:$0xff] %vm642, %v630
          %648 = vst.msk [vmem:[#allocation3 + $0x28] sm:$0xff] %vm642, %v631
          %649 = vst.msk [vmem:[#allocation3 + $0x30] sm:$0xff] %vm642, %v632
          %650 = vst.msk [vmem:[#allocation3 + $0x38] sm:$0xff] %vm642, %v633
          %651 = vst.msk [vmem:[#allocation3 + $0x40] sm:$0xff] %vm642, %v634
          %652 = vst.msk [vmem:[#allocation3 + $0x48] sm:$0xff] %vm642, %v635
          %653 = vst.msk [vmem:[#allocation3 + $0x50] sm:$0xff] %vm642, %v636
          %654 = vst.msk [vmem:[#allocation3 + $0x58] sm:$0xff] %vm642, %v637
          %655 = vst.msk [vmem:[#allocation3 + $0x60] sm:$0xff] %vm642, %v638
          %656 = vst.msk [vmem:[#allocation3 + $0x68] sm:$0xff] %vm642, %v639
          %657 = vst.msk [vmem:[#allocation3 + $0x70] sm:$0xff] %vm642, %v640
          %658 = vst.msk [vmem:[#allocation3 + $0x78] sm:$0xff] %vm642, %v641
          %659 = vst.msk [vmem:[#allocation4] sm:$0xff] %vm642, %v626
          %660 = vst.msk [vmem:[#allocation4 + $0x8] sm:$0xff] %vm642, %v627
          %661 = vst.msk [vmem:[#allocation4 + $0x10] sm:$0xff] %vm642, %v628
          %662 = vst.msk [vmem:[#allocation4 + $0x18] sm:$0xff] %vm642, %v629
          %663 = vst.msk [vmem:[#allocation4 + $0x20] sm:$0xff] %vm642, %v630
          %664 = vst.msk [vmem:[#allocation4 + $0x28] sm:$0xff] %vm642, %v631
          %665 = vst.msk [vmem:[#allocation4 + $0x30] sm:$0xff] %vm642, %v632
          %666 = vst.msk [vmem:[#allocation4 + $0x38] sm:$0xff] %vm642, %v633
          %667 = vst.msk [vmem:[#allocation4 + $0x40] sm:$0xff] %vm642, %v634
          %668 = vst.msk [vmem:[#allocation4 + $0x48] sm:$0xff] %vm642, %v635
          %669 = vst.msk [vmem:[#allocation4 + $0x50] sm:$0xff] %vm642, %v636
          %670 = vst.msk [vmem:[#allocation4 + $0x58] sm:$0xff] %vm642, %v637
          %671 = vst.msk [vmem:[#allocation4 + $0x60] sm:$0xff] %vm642, %v638
          %672 = vst.msk [vmem:[#allocation4 + $0x68] sm:$0xff] %vm642, %v639
          %673 = vst.msk [vmem:[#allocation4 + $0x70] sm:$0xff] %vm642, %v640
          %674 = vst.msk [vmem:[#allocation4 + $0x78] sm:$0xff] %vm642, %v641
          %675 = vst.msk [vmem:[#allocation5] sm:$0xff] %vm642, 1.0
          %676 = vst.msk [vmem:[#allocation5 + $0x8] sm:$0xff] %vm642, 1.0
          %677 = vst.msk [vmem:[#allocation5 + $0x10] sm:$0xff] %vm642, 1.0
          %678 = vst.msk [vmem:[#allocation5 + $0x18] sm:$0xff] %vm642, 1.0
          %679 = vst.msk [vmem:[#allocation5 + $0x20] sm:$0xff] %vm642, 1.0
          %680 = vst.msk [vmem:[#allocation5 + $0x28] sm:$0xff] %vm642, 1.0
          %681 = vst.msk [vmem:[#allocation5 + $0x30] sm:$0xff] %vm642, 1.0
          %682 = vst.msk [vmem:[#allocation5 + $0x38] sm:$0xff] %vm642, 1.0
          %683 = vst.msk [vmem:[#allocation5 + $0x40] sm:$0xff] %vm642, 1.0
          %684 = vst.msk [vmem:[#allocation5 + $0x48] sm:$0xff] %vm642, 1.0
          %685 = vst.msk [vmem:[#allocation5 + $0x50] sm:$0xff] %vm642, 1.0
          %686 = vst.msk [vmem:[#allocation5 + $0x58] sm:$0xff] %vm642, 1.0
          %687 = vst.msk [vmem:[#allocation5 + $0x60] sm:$0xff] %vm642, 1.0
          %688 = vst.msk [vmem:[#allocation5 + $0x68] sm:$0xff] %vm642, 1.0
          %689 = vst.msk [vmem:[#allocation5 + $0x70] sm:$0xff] %vm642, 1.0
          %690 = vst.msk [vmem:[#allocation5 + $0x78] sm:$0xff] %vm642, 1.0
          %v691 = vld [vmem:[%s497] sm:$0xff]
          %v692 = vld [vmem:[%s497 + $0x8] sm:$0xff]
          %v693 = vld [vmem:[%s497 + $0x10] sm:$0xff]
          %v694 = vld [vmem:[%s497 + $0x18] sm:$0xff]
          %v695 = vld [vmem:[%s497 + $0x20] sm:$0xff]
          %v696 = vld [vmem:[%s497 + $0x28] sm:$0xff]
          %v697 = vld [vmem:[%s497 + $0x30] sm:$0xff]
          %v698 = vld [vmem:[%s497 + $0x38] sm:$0xff]
          %v699 = vld [vmem:[%s497 + $0x40] sm:$0xff]
          %v700 = vld [vmem:[%s497 + $0x48] sm:$0xff]
          %v701 = vld [vmem:[%s497 + $0x50] sm:$0xff]
          %v702 = vld [vmem:[%s497 + $0x58] sm:$0xff]
          %v703 = vld [vmem:[%s497 + $0x60] sm:$0xff]
          %v704 = vld [vmem:[%s497 + $0x68] sm:$0xff]
          %v705 = vld [vmem:[%s497 + $0x70] sm:$0xff]
          %v706 = vld [vmem:[%s497 + $0x78] sm:$0xff]
          %v707 = vlaneseq
          %v708 = vand.u32 %v707, 127
          %709 = vset.pattern.permute.xlu0 0
          %710 = vperm.xlu0 %709, %v691
          %v711 = vpop.permute.xlu0 %710
          %712 = vset.pattern.permute.xlu0 0
          %713 = vperm.xlu0 %712, %v692
          %v714 = vpop.permute.xlu0 %713
          %715 = vset.pattern.permute.xlu0 0
          %716 = vperm.xlu0 %715, %v693
          %v717 = vpop.permute.xlu0 %716
          %718 = vset.pattern.permute.xlu0 0
          %719 = vperm.xlu0 %718, %v694
          %v720 = vpop.permute.xlu0 %719
          %721 = vset.pattern.permute.xlu0 0
          %722 = vperm.xlu0 %721, %v695
          %v723 = vpop.permute.xlu0 %722
          %724 = vset.pattern.permute.xlu0 0
          %725 = vperm.xlu0 %724, %v696
          %v726 = vpop.permute.xlu0 %725
          %727 = vset.pattern.permute.xlu0 0
          %728 = vperm.xlu0 %727, %v697
          %v729 = vpop.permute.xlu0 %728
          %730 = vset.pattern.permute.xlu0 0
          %731 = vperm.xlu0 %730, %v698
          %v732 = vpop.permute.xlu0 %731
          %733 = vset.pattern.permute.xlu0 0
          %734 = vperm.xlu0 %733, %v699
          %v735 = vpop.permute.xlu0 %734
          %736 = vset.pattern.permute.xlu0 0
          %737 = vperm.xlu0 %736, %v700
          %v738 = vpop.permute.xlu0 %737
          %739 = vset.pattern.permute.xlu0 0
          %740 = vperm.xlu0 %739, %v701
          %v741 = vpop.permute.xlu0 %740
          %742 = vset.pattern.permute.xlu0 0
          %743 = vperm.xlu0 %742, %v702
          %v744 = vpop.permute.xlu0 %743
          %745 = vset.pattern.permute.xlu0 0
          %746 = vperm.xlu0 %745, %v703
          %v747 = vpop.permute.xlu0 %746
          %748 = vset.pattern.permute.xlu0 0
          %749 = vperm.xlu0 %748, %v704
          %v750 = vpop.permute.xlu0 %749
          %751 = vset.pattern.permute.xlu0 0
          %752 = vperm.xlu0 %751, %v705
          %v753 = vpop.permute.xlu0 %752
          %754 = vset.pattern.permute.xlu0 0
          %755 = vperm.xlu0 %754, %v706
          %v756 = vpop.permute.xlu0 %755
          %vm757 = vcmp.eq.s32.totalorder %v711, %v708
          %vm758 = vcmp.eq.s32.totalorder %v714, %v708
          %vm759 = vcmp.eq.s32.totalorder %v717, %v708
          %vm760 = vcmp.eq.s32.totalorder %v720, %v708
          %vm761 = vcmp.eq.s32.totalorder %v723, %v708
          %vm762 = vcmp.eq.s32.totalorder %v726, %v708
          %vm763 = vcmp.eq.s32.totalorder %v729, %v708
          %vm764 = vcmp.eq.s32.totalorder %v732, %v708
          %vm765 = vcmp.eq.s32.totalorder %v735, %v708
          %vm766 = vcmp.eq.s32.totalorder %v738, %v708
          %vm767 = vcmp.eq.s32.totalorder %v741, %v708
          %vm768 = vcmp.eq.s32.totalorder %v744, %v708
          %vm769 = vcmp.eq.s32.totalorder %v747, %v708
          %vm770 = vcmp.eq.s32.totalorder %v750, %v708
          %vm771 = vcmp.eq.s32.totalorder %v753, %v708
          %vm772 = vcmp.eq.s32.totalorder %v756, %v708
          %v773 = vsel %vm757, 1, 0
          %v774 = vsel %vm758, 1, 0
          %v775 = vsel %vm759, 1, 0
          %v776 = vsel %vm760, 1, 0
          %v777 = vsel %vm761, 1, 0
          %v778 = vsel %vm762, 1, 0
          %v779 = vsel %vm763, 1, 0
          %v780 = vsel %vm764, 1, 0
          %v781 = vsel %vm765, 1, 0
          %v782 = vsel %vm766, 1, 0
          %v783 = vsel %vm767, 1, 0
          %v784 = vsel %vm768, 1, 0
          %v785 = vsel %vm769, 1, 0
          %v786 = vsel %vm770, 1, 0
          %v787 = vsel %vm771, 1, 0
          %v788 = vsel %vm772, 1, 0
          %v789 = vcvt.s32.f32 %v773
          %v790 = vcvt.s32.f32 %v774
          %v791 = vcvt.s32.f32 %v775
          %v792 = vcvt.s32.f32 %v776
          %v793 = vcvt.s32.f32 %v777
          %v794 = vcvt.s32.f32 %v778
          %v795 = vcvt.s32.f32 %v779
          %v796 = vcvt.s32.f32 %v780
          %v797 = vcvt.s32.f32 %v781
          %v798 = vcvt.s32.f32 %v782
          %v799 = vcvt.s32.f32 %v783
          %v800 = vcvt.s32.f32 %v784
          %v801 = vcvt.s32.f32 %v785
          %v802 = vcvt.s32.f32 %v786
          %v803 = vcvt.s32.f32 %v787
          %v804 = vcvt.s32.f32 %v788
          %v805 = vpack.c.bf16 %v789, %v789
          %v806 = vpack.c.bf16 %v790, %v790
          %v807 = vpack.c.bf16 %v791, %v791
          %v808 = vpack.c.bf16 %v792, %v792
          %v809 = vpack.c.bf16 %v793, %v793
          %v810 = vpack.c.bf16 %v794, %v794
          %v811 = vpack.c.bf16 %v795, %v795
          %v812 = vpack.c.bf16 %v796, %v796
          %v813 = vpack.c.bf16 %v797, %v797
          %v814 = vpack.c.bf16 %v798, %v798
          %v815 = vpack.c.bf16 %v799, %v799
          %v816 = vpack.c.bf16 %v800, %v800
          %v817 = vpack.c.bf16 %v801, %v801
          %v818 = vpack.c.bf16 %v802, %v802
          %v819 = vpack.c.bf16 %v803, %v803
          %v820 = vpack.c.bf16 %v804, %v804
          %vm821 = vcmask 125952
          %822 = vst.msk [vmem:[#allocation2] sm:$0xf] %vm821, %v805
          %823 = vst.msk [vmem:[#allocation2 + $0x4] sm:$0xf] %vm821, %v806
          %824 = vst.msk [vmem:[#allocation2 + $0x8] sm:$0xf] %vm821, %v807
          %825 = vst.msk [vmem:[#allocation2 + $0xc] sm:$0xf] %vm821, %v808
          %826 = vst.msk [vmem:[#allocation2 + $0x10] sm:$0xf] %vm821, %v809
          %827 = vst.msk [vmem:[#allocation2 + $0x14] sm:$0xf] %vm821, %v810
          %828 = vst.msk [vmem:[#allocation2 + $0x18] sm:$0xf] %vm821, %v811
          %829 = vst.msk [vmem:[#allocation2 + $0x1c] sm:$0xf] %vm821, %v812
          %830 = vst.msk [vmem:[#allocation2 + $0x20] sm:$0xf] %vm821, %v813
          %831 = vst.msk [vmem:[#allocation2 + $0x24] sm:$0xf] %vm821, %v814
          %832 = vst.msk [vmem:[#allocation2 + $0x28] sm:$0xf] %vm821, %v815
          %833 = vst.msk [vmem:[#allocation2 + $0x2c] sm:$0xf] %vm821, %v816
          %834 = vst.msk [vmem:[#allocation2 + $0x30] sm:$0xf] %vm821, %v817
          %835 = vst.msk [vmem:[#allocation2 + $0x34] sm:$0xf] %vm821, %v818
          %836 = vst.msk [vmem:[#allocation2 + $0x38] sm:$0xf] %vm821, %v819
          %837 = vst.msk [vmem:[#allocation2 + $0x3c] sm:$0xf] %vm821, %v820
        $region90: #{moco_with_mixture_loss.1} parent=77 // pred_fallthru
          _
        %v838 = vld [vmem:[%s483] sm:$0xf]
        %v839 = vld [vmem:[%s483 + $0x4] sm:$0xf]
        %v840 = vld [vmem:[%s483 + $0x8] sm:$0xf]
        %v841 = vld [vmem:[%s483 + $0xc] sm:$0xf]
        %v842 = vld [vmem:[%s483 + $0x10] sm:$0xf]
        %v843 = vld [vmem:[%s483 + $0x14] sm:$0xf]
        %v844 = vld [vmem:[%s483 + $0x18] sm:$0xf]
        %v845 = vld [vmem:[%s483 + $0x1c] sm:$0xf]
        %v846 = vld [vmem:[%s483 + $0x20] sm:$0xf]
        %v847 = vld [vmem:[%s483 + $0x24] sm:$0xf]
        %v848 = vld [vmem:[%s483 + $0x28] sm:$0xf]
        %v849 = vld [vmem:[%s483 + $0x2c] sm:$0xf]
        %v850 = vld [vmem:[%s483 + $0x30] sm:$0xf]
        %v851 = vld [vmem:[%s483 + $0x34] sm:$0xf]
        %v852 = vld [vmem:[%s483 + $0x38] sm:$0xf]
        %v853 = vld [vmem:[%s483 + $0x3c] sm:$0xf]
        %v854 = vld [vmem:[%s416] sm:$0xff]
        %v855 = vld [vmem:[%s416 + $0x8] sm:$0xff]
        %v856 = vld [vmem:[%s416 + $0x10] sm:$0xff]
        %v857 = vld [vmem:[%s416 + $0x18] sm:$0xff]
        %v858 = vld [vmem:[%s416 + $0x20] sm:$0xff]
        %v859 = vld [vmem:[%s416 + $0x28] sm:$0xff]
        %v860 = vld [vmem:[%s416 + $0x30] sm:$0xff]
        %v861 = vld [vmem:[%s416 + $0x38] sm:$0xff]
        %v862 = vld [vmem:[%s416 + $0x40] sm:$0xff]
        %v863 = vld [vmem:[%s416 + $0x48] sm:$0xff]
        %v864 = vld [vmem:[%s416 + $0x50] sm:$0xff]
        %v865 = vld [vmem:[%s416 + $0x58] sm:$0xff]
        %v866 = vld [vmem:[%s416 + $0x60] sm:$0xff]
        %v867 = vld [vmem:[%s416 + $0x68] sm:$0xff]
        %v868 = vld [vmem:[%s416 + $0x70] sm:$0xff]
        %v869 = vld [vmem:[%s416 + $0x78] sm:$0xff]
        %v870 = vld [vmem:[%s416 + $0x80] sm:$0xff]
        %v871 = vld [vmem:[%s416 + $0x88] sm:$0xff]
        %v872 = vld [vmem:[%s416 + $0x90] sm:$0xff]
        %v873 = vld [vmem:[%s416 + $0x98] sm:$0xff]
        %v874 = vld [vmem:[%s416 + $0xa0] sm:$0xff]
        %v875 = vld [vmem:[%s416 + $0xa8] sm:$0xff]
        %v876 = vld [vmem:[%s416 + $0xb0] sm:$0xff]
        %v877 = vld [vmem:[%s416 + $0xb8] sm:$0xff]
        %v878 = vld [vmem:[%s416 + $0xc0] sm:$0xff]
        %v879 = vld [vmem:[%s416 + $0xc8] sm:$0xff]
        %v880 = vld [vmem:[%s416 + $0xd0] sm:$0xff]
        %v881 = vld [vmem:[%s416 + $0xd8] sm:$0xff]
        %v882 = vld [vmem:[%s416 + $0xe0] sm:$0xff]
        %v883 = vld [vmem:[%s416 + $0xe8] sm:$0xff]
        %v884 = vld [vmem:[%s416 + $0xf0] sm:$0xff]
        %v885 = vld [vmem:[%s416 + $0xf8] sm:$0xff]
        %v902 = vunpack.c.l.b16 %v838
        %v903 = vunpack.c.l.b16 %v839
        %v904 = vunpack.c.l.b16 %v840
        %v905 = vunpack.c.l.b16 %v841
        %v906 = vunpack.c.l.b16 %v842
        %v907 = vunpack.c.l.b16 %v843
        %v908 = vunpack.c.l.b16 %v844
        %v909 = vunpack.c.l.b16 %v845
        %v910 = vunpack.c.l.b16 %v846
        %v911 = vunpack.c.l.b16 %v847
        %v912 = vunpack.c.l.b16 %v848
        %v913 = vunpack.c.l.b16 %v849
        %v914 = vunpack.c.l.b16 %v850
        %v915 = vunpack.c.l.b16 %v851
        %v916 = vunpack.c.l.b16 %v852
        %v917 = vunpack.c.l.b16 %v853
        %v918 = vpack.c.b16 %v903, %v902
        %v919 = vpack.c.b16 %v905, %v904
        %v920 = vpack.c.b16 %v907, %v906
        %v921 = vpack.c.b16 %v909, %v908
        %v922 = vpack.c.b16 %v911, %v910
        %v923 = vpack.c.b16 %v913, %v912
        %v924 = vpack.c.b16 %v915, %v914
        %v925 = vpack.c.b16 %v917, %v916
        %v966 = vunpack.c.l.b16 %v854
        %v967 = vunpack.c.h.b16 %v854
        %v968 = vunpack.c.l.b16 %v855
        %v969 = vunpack.c.h.b16 %v855
        %v970 = vunpack.c.l.b16 %v856
        %v971 = vunpack.c.h.b16 %v856
        %v972 = vunpack.c.l.b16 %v857
        %v973 = vunpack.c.h.b16 %v857
        %v974 = vunpack.c.l.b16 %v858
        %v975 = vunpack.c.h.b16 %v858
        %v976 = vunpack.c.l.b16 %v859
        %v977 = vunpack.c.h.b16 %v859
        %v978 = vunpack.c.l.b16 %v860
        %v979 = vunpack.c.h.b16 %v860
        %v980 = vunpack.c.l.b16 %v861
        %v981 = vunpack.c.h.b16 %v861
        %v982 = vunpack.c.l.b16 %v862
        %v983 = vunpack.c.h.b16 %v862
        %v984 = vunpack.c.l.b16 %v863
        %v985 = vunpack.c.h.b16 %v863
        %v986 = vunpack.c.l.b16 %v864
        %v987 = vunpack.c.h.b16 %v864
        %v988 = vunpack.c.l.b16 %v865
        %v989 = vunpack.c.h.b16 %v865
        %v990 = vunpack.c.l.b16 %v866
        %v991 = vunpack.c.h.b16 %v866
        %v992 = vunpack.c.l.b16 %v867
        %v993 = vunpack.c.h.b16 %v867
        %v994 = vunpack.c.l.b16 %v868
        %v995 = vunpack.c.h.b16 %v868
        %v996 = vunpack.c.l.b16 %v869
        %v997 = vunpack.c.h.b16 %v869
        %v998 = vunpack.c.l.b16 %v870
        %v999 = vunpack.c.h.b16 %v870
        %v1000 = vunpack.c.l.b16 %v871
        %v1001 = vunpack.c.h.b16 %v871
        %v1002 = vunpack.c.l.b16 %v872
        %v1003 = vunpack.c.h.b16 %v872
        %v1004 = vunpack.c.l.b16 %v873
        %v1005 = vunpack.c.h.b16 %v873
        %v1006 = vunpack.c.l.b16 %v874
        %v1007 = vunpack.c.h.b16 %v874
        %v1008 = vunpack.c.l.b16 %v875
        %v1009 = vunpack.c.h.b16 %v875
        %v1010 = vunpack.c.l.b16 %v876
        %v1011 = vunpack.c.h.b16 %v876
        %v1012 = vunpack.c.l.b16 %v877
        %v1013 = vunpack.c.h.b16 %v877
        %v1014 = vunpack.c.l.b16 %v878
        %v1015 = vunpack.c.h.b16 %v878
        %v1016 = vunpack.c.l.b16 %v879
        %v1017 = vunpack.c.h.b16 %v879
        %v1018 = vunpack.c.l.b16 %v880
        %v1019 = vunpack.c.h.b16 %v880
        %v1020 = vunpack.c.l.b16 %v881
        %v1021 = vunpack.c.h.b16 %v881
        %v1022 = vunpack.c.l.b16 %v882
        %v1023 = vunpack.c.h.b16 %v882
        %v1024 = vunpack.c.l.b16 %v883
        %v1025 = vunpack.c.h.b16 %v883
        %v1026 = vunpack.c.l.b16 %v884
        %v1027 = vunpack.c.h.b16 %v884
        %v1028 = vunpack.c.l.b16 %v885
        %v1029 = vunpack.c.h.b16 %v885
        %v1030 = vpack.c.b16 %v970, %v966
        %v1031 = vpack.c.b16 %v971, %v967
        %v1032 = vpack.c.b16 %v972, %v968
        %v1033 = vpack.c.b16 %v973, %v969
        %v1034 = vpack.c.b16 %v978, %v974
        %v1035 = vpack.c.b16 %v979, %v975
        %v1036 = vpack.c.b16 %v980, %v976
        %v1037 = vpack.c.b16 %v981, %v977
        %v1038 = vpack.c.b16 %v986, %v982
        %v1039 = vpack.c.b16 %v987, %v983
        %v1040 = vpack.c.b16 %v988, %v984
        %v1041 = vpack.c.b16 %v989, %v985
        %v1042 = vpack.c.b16 %v994, %v990
        %v1043 = vpack.c.b16 %v995, %v991
        %v1044 = vpack.c.b16 %v996, %v992
        %v1045 = vpack.c.b16 %v997, %v993
        %v1046 = vpack.c.b16 %v1002, %v998
        %v1047 = vpack.c.b16 %v1003, %v999
        %v1048 = vpack.c.b16 %v1004, %v1000
        %v1049 = vpack.c.b16 %v1005, %v1001
        %v1050 = vpack.c.b16 %v1010, %v1006
        %v1051 = vpack.c.b16 %v1011, %v1007
        %v1052 = vpack.c.b16 %v1012, %v1008
        %v1053 = vpack.c.b16 %v1013, %v1009
        %v1054 = vpack.c.b16 %v1018, %v1014
        %v1055 = vpack.c.b16 %v1019, %v1015
        %v1056 = vpack.c.b16 %v1020, %v1016
        %v1057 = vpack.c.b16 %v1021, %v1017
        %v1058 = vpack.c.b16 %v1026, %v1022
        %v1059 = vpack.c.b16 %v1027, %v1023
        %v1060 = vpack.c.b16 %v1028, %v1024
        %v1061 = vpack.c.b16 %v1029, %v1025
        %1094 = vmatpush.bf16.msra.mxu0 %v1058
        %1095 = vmatpush.bf16.msra.mxu0 %v1054
        %1096 = vmatpush.bf16.msra.mxu0 %v1050
        %1097 = vmatpush.bf16.msra.mxu0 %v1046
        %1098 = vmatpush.bf16.msra.mxu0 %v1042
        %1099 = vmatpush.bf16.msra.mxu0 %v1038
        %1100 = vmatpush.bf16.msra.mxu0 %v1034
        %1101 = vmatpush.bf16.msra.mxu0 %v1030
        %1102 = vmatmul.bf16.gmra.mxu0 %v918
        %v1103 = vpop.f32.mrf.mxu0
        %v1104 = vadd.f32 0.0, %v1103
        %v1105 = vpop.f32.mrf.mxu0
        %v1106 = vadd.f32 0.0, %v1105
        %1107 = vmatmul.bf16.gmra.mxu0 %v919
        %v1108 = vpop.f32.mrf.mxu0
        %v1109 = vadd.f32 0.0, %v1108
        %v1110 = vpop.f32.mrf.mxu0
        %v1111 = vadd.f32 0.0, %v1110
        %1112 = vmatmul.bf16.gmra.mxu0 %v920
        %v1113 = vpop.f32.mrf.mxu0
        %v1114 = vadd.f32 0.0, %v1113
        %v1115 = vpop.f32.mrf.mxu0
        %v1116 = vadd.f32 0.0, %v1115
        %1117 = vmatmul.bf16.gmra.mxu0 %v921
        %v1118 = vpop.f32.mrf.mxu0
        %v1119 = vadd.f32 0.0, %v1118
        %v1120 = vpop.f32.mrf.mxu0
        %v1121 = vadd.f32 0.0, %v1120
        %1122 = vmatmul.bf16.gmra.mxu0 %v922
        %v1123 = vpop.f32.mrf.mxu0
        %v1124 = vadd.f32 0.0, %v1123
        %v1125 = vpop.f32.mrf.mxu0
        %v1126 = vadd.f32 0.0, %v1125
        %1127 = vmatmul.bf16.gmra.mxu0 %v923
        %v1128 = vpop.f32.mrf.mxu0
        %v1129 = vadd.f32 0.0, %v1128
        %v1130 = vpop.f32.mrf.mxu0
        %v1131 = vadd.f32 0.0, %v1130
        %1132 = vmatmul.bf16.gmra.mxu0 %v924
        %v1133 = vpop.f32.mrf.mxu0
        %v1134 = vadd.f32 0.0, %v1133
        %v1135 = vpop.f32.mrf.mxu0
        %v1136 = vadd.f32 0.0, %v1135
        %1137 = vmatmul.bf16.gmra.mxu0 %v925
        %v1138 = vpop.f32.mrf.mxu0
        %v1139 = vadd.f32 0.0, %v1138
        %v1140 = vpop.f32.mrf.mxu0
        %v1141 = vadd.f32 0.0, %v1140
        %1142 = vdwg.mxu0
        %1143 = vmatpush.bf16.msra.mxu0 %v1059
        %1144 = vmatpush.bf16.msra.mxu0 %v1055
        %1145 = vmatpush.bf16.msra.mxu0 %v1051
        %1146 = vmatpush.bf16.msra.mxu0 %v1047
        %1147 = vmatpush.bf16.msra.mxu0 %v1043
        %1148 = vmatpush.bf16.msra.mxu0 %v1039
        %1149 = vmatpush.bf16.msra.mxu0 %v1035
        %1150 = vmatpush.bf16.msra.mxu0 %v1031
        %1151 = vmatmul.bf16.gmra.mxu0 %v918
        %v1152 = vpop.f32.mrf.mxu0
        %v1153 = vadd.f32 0.0, %v1152
        %v1154 = vpop.f32.mrf.mxu0
        %v1155 = vadd.f32 0.0, %v1154
        %1156 = vmatmul.bf16.gmra.mxu0 %v919
        %v1157 = vpop.f32.mrf.mxu0
        %v1158 = vadd.f32 0.0, %v1157
        %v1159 = vpop.f32.mrf.mxu0
        %v1160 = vadd.f32 0.0, %v1159
        %1161 = vmatmul.bf16.gmra.mxu0 %v920
        %v1162 = vpop.f32.mrf.mxu0
        %v1163 = vadd.f32 0.0, %v1162
        %v1164 = vpop.f32.mrf.mxu0
        %v1165 = vadd.f32 0.0, %v1164
        %1166 = vmatmul.bf16.gmra.mxu0 %v921
        %v1167 = vpop.f32.mrf.mxu0
        %v1168 = vadd.f32 0.0, %v1167
        %v1169 = vpop.f32.mrf.mxu0
        %v1170 = vadd.f32 0.0, %v1169
        %1171 = vmatmul.bf16.gmra.mxu0 %v922
        %v1172 = vpop.f32.mrf.mxu0
        %v1173 = vadd.f32 0.0, %v1172
        %v1174 = vpop.f32.mrf.mxu0
        %v1175 = vadd.f32 0.0, %v1174
        %1176 = vmatmul.bf16.gmra.mxu0 %v923
        %v1177 = vpop.f32.mrf.mxu0
        %v1178 = vadd.f32 0.0, %v1177
        %v1179 = vpop.f32.mrf.mxu0
        %v1180 = vadd.f32 0.0, %v1179
        %1181 = vmatmul.bf16.gmra.mxu0 %v924
        %v1182 = vpop.f32.mrf.mxu0
        %v1183 = vadd.f32 0.0, %v1182
        %v1184 = vpop.f32.mrf.mxu0
        %v1185 = vadd.f32 0.0, %v1184
        %1186 = vmatmul.bf16.gmra.mxu0 %v925
        %v1187 = vpop.f32.mrf.mxu0
        %v1188 = vadd.f32 0.0, %v1187
        %v1189 = vpop.f32.mrf.mxu0
        %v1190 = vadd.f32 0.0, %v1189
        %1191 = vdwg.mxu0
        %1192 = vmatpush.bf16.msra.mxu0 %v1060
        %1193 = vmatpush.bf16.msra.mxu0 %v1056
        %1194 = vmatpush.bf16.msra.mxu0 %v1052
        %1195 = vmatpush.bf16.msra.mxu0 %v1048
        %1196 = vmatpush.bf16.msra.mxu0 %v1044
        %1197 = vmatpush.bf16.msra.mxu0 %v1040
        %1198 = vmatpush.bf16.msra.mxu0 %v1036
        %1199 = vmatpush.bf16.msra.mxu0 %v1032
        %1200 = vmatmul.bf16.gmra.mxu0 %v918
        %v1201 = vpop.f32.mrf.mxu0
        %v1202 = vadd.f32 0.0, %v1201
        %v1203 = vpop.f32.mrf.mxu0
        %v1204 = vadd.f32 0.0, %v1203
        %1205 = vmatmul.bf16.gmra.mxu0 %v919
        %v1206 = vpop.f32.mrf.mxu0
        %v1207 = vadd.f32 0.0, %v1206
        %v1208 = vpop.f32.mrf.mxu0
        %v1209 = vadd.f32 0.0, %v1208
        %1210 = vmatmul.bf16.gmra.mxu0 %v920
        %v1211 = vpop.f32.mrf.mxu0
        %v1212 = vadd.f32 0.0, %v1211
        %v1213 = vpop.f32.mrf.mxu0
        %v1214 = vadd.f32 0.0, %v1213
        %1215 = vmatmul.bf16.gmra.mxu0 %v921
        %v1216 = vpop.f32.mrf.mxu0
        %v1217 = vadd.f32 0.0, %v1216
        %v1218 = vpop.f32.mrf.mxu0
        %v1219 = vadd.f32 0.0, %v1218
        %1220 = vmatmul.bf16.gmra.mxu0 %v922
        %v1221 = vpop.f32.mrf.mxu0
        %v1222 = vadd.f32 0.0, %v1221
        %v1223 = vpop.f32.mrf.mxu0
        %v1224 = vadd.f32 0.0, %v1223
        %1225 = vmatmul.bf16.gmra.mxu0 %v923
        %v1226 = vpop.f32.mrf.mxu0
        %v1227 = vadd.f32 0.0, %v1226
        %v1228 = vpop.f32.mrf.mxu0
        %v1229 = vadd.f32 0.0, %v1228
        %1230 = vmatmul.bf16.gmra.mxu0 %v924
        %v1231 = vpop.f32.mrf.mxu0
        %v1232 = vadd.f32 0.0, %v1231
        %v1233 = vpop.f32.mrf.mxu0
        %v1234 = vadd.f32 0.0, %v1233
        %1235 = vmatmul.bf16.gmra.mxu0 %v925
        %v1236 = vpop.f32.mrf.mxu0
        %v1237 = vadd.f32 0.0, %v1236
        %v1238 = vpop.f32.mrf.mxu0
        %v1239 = vadd.f32 0.0, %v1238
        %1240 = vdwg.mxu0
        %1241 = vmatpush.bf16.msra.mxu0 %v1061
        %1242 = vmatpush.bf16.msra.mxu0 %v1057
        %1243 = vmatpush.bf16.msra.mxu0 %v1053
        %1244 = vmatpush.bf16.msra.mxu0 %v1049
        %1245 = vmatpush.bf16.msra.mxu0 %v1045
        %1246 = vmatpush.bf16.msra.mxu0 %v1041
        %1247 = vmatpush.bf16.msra.mxu0 %v1037
        %1248 = vmatpush.bf16.msra.mxu0 %v1033
        %1249 = vmatmul.bf16.gmra.mxu0 %v918
        %v1250 = vpop.f32.mrf.mxu0
        %v1251 = vadd.f32 0.0, %v1250
        %v1252 = vpop.f32.mrf.mxu0
        %v1253 = vadd.f32 0.0, %v1252
        %1254 = vmatmul.bf16.gmra.mxu0 %v919
        %v1255 = vpop.f32.mrf.mxu0
        %v1256 = vadd.f32 0.0, %v1255
        %v1257 = vpop.f32.mrf.mxu0
        %v1258 = vadd.f32 0.0, %v1257
        %1259 = vmatmul.bf16.gmra.mxu0 %v920
        %v1260 = vpop.f32.mrf.mxu0
        %v1261 = vadd.f32 0.0, %v1260
        %v1262 = vpop.f32.mrf.mxu0
        %v1263 = vadd.f32 0.0, %v1262
        %1264 = vmatmul.bf16.gmra.mxu0 %v921
        %v1265 = vpop.f32.mrf.mxu0
        %v1266 = vadd.f32 0.0, %v1265
        %v1267 = vpop.f32.mrf.mxu0
        %v1268 = vadd.f32 0.0, %v1267
        %1269 = vmatmul.bf16.gmra.mxu0 %v922
        %v1270 = vpop.f32.mrf.mxu0
        %v1271 = vadd.f32 0.0, %v1270
        %v1272 = vpop.f32.mrf.mxu0
        %v1273 = vadd.f32 0.0, %v1272
        %1274 = vmatmul.bf16.gmra.mxu0 %v923
        %v1275 = vpop.f32.mrf.mxu0
        %v1276 = vadd.f32 0.0, %v1275
        %v1277 = vpop.f32.mrf.mxu0
        %v1278 = vadd.f32 0.0, %v1277
        %1279 = vmatmul.bf16.gmra.mxu0 %v924
        %v1280 = vpop.f32.mrf.mxu0
        %v1281 = vadd.f32 0.0, %v1280
        %v1282 = vpop.f32.mrf.mxu0
        %v1283 = vadd.f32 0.0, %v1282
        %1284 = vmatmul.bf16.gmra.mxu0 %v925
        %v1285 = vpop.f32.mrf.mxu0
        %v1286 = vadd.f32 0.0, %v1285
        %v1287 = vpop.f32.mrf.mxu0
        %v1288 = vadd.f32 0.0, %v1287
        %1289 = vdwg.mxu0
        %v1290 = vmul.f32 %v1104, 5.0
        %v1291 = vmul.f32 %v1153, 5.0
        %v1292 = vmul.f32 %v1202, 5.0
        %v1293 = vmul.f32 %v1251, 5.0
        %v1294 = vmul.f32 %v1106, 5.0
        %v1295 = vmul.f32 %v1155, 5.0
        %v1296 = vmul.f32 %v1204, 5.0
        %v1297 = vmul.f32 %v1253, 5.0
        %v1298 = vmul.f32 %v1109, 5.0
        %v1299 = vmul.f32 %v1158, 5.0
        %v1300 = vmul.f32 %v1207, 5.0
        %v1301 = vmul.f32 %v1256, 5.0
        %v1302 = vmul.f32 %v1111, 5.0
        %v1303 = vmul.f32 %v1160, 5.0
        %v1304 = vmul.f32 %v1209, 5.0
        %v1305 = vmul.f32 %v1258, 5.0
        %v1306 = vmul.f32 %v1114, 5.0
        %v1307 = vmul.f32 %v1163, 5.0
        %v1308 = vmul.f32 %v1212, 5.0
        %v1309 = vmul.f32 %v1261, 5.0
        %v1310 = vmul.f32 %v1116, 5.0
        %v1311 = vmul.f32 %v1165, 5.0
        %v1312 = vmul.f32 %v1214, 5.0
        %v1313 = vmul.f32 %v1263, 5.0
        %v1314 = vmul.f32 %v1119, 5.0
        %v1315 = vmul.f32 %v1168, 5.0
        %v1316 = vmul.f32 %v1217, 5.0
        %v1317 = vmul.f32 %v1266, 5.0
        %v1318 = vmul.f32 %v1121, 5.0
        %v1319 = vmul.f32 %v1170, 5.0
        %v1320 = vmul.f32 %v1219, 5.0
        %v1321 = vmul.f32 %v1268, 5.0
        %v1322 = vmul.f32 %v1124, 5.0
        %v1323 = vmul.f32 %v1173, 5.0
        %v1324 = vmul.f32 %v1222, 5.0
        %v1325 = vmul.f32 %v1271, 5.0
        %v1326 = vmul.f32 %v1126, 5.0
        %v1327 = vmul.f32 %v1175, 5.0
        %v1328 = vmul.f32 %v1224, 5.0
        %v1329 = vmul.f32 %v1273, 5.0
        %v1330 = vmul.f32 %v1129, 5.0
        %v1331 = vmul.f32 %v1178, 5.0
        %v1332 = vmul.f32 %v1227, 5.0
        %v1333 = vmul.f32 %v1276, 5.0
        %v1334 = vmul.f32 %v1131, 5.0
        %v1335 = vmul.f32 %v1180, 5.0
        %v1336 = vmul.f32 %v1229, 5.0
        %v1337 = vmul.f32 %v1278, 5.0
        %v1338 = vmul.f32 %v1134, 5.0
        %v1339 = vmul.f32 %v1183, 5.0
        %v1340 = vmul.f32 %v1232, 5.0
        %v1341 = vmul.f32 %v1281, 5.0
        %v1342 = vmul.f32 %v1136, 5.0
        %v1343 = vmul.f32 %v1185, 5.0
        %v1344 = vmul.f32 %v1234, 5.0
        %v1345 = vmul.f32 %v1283, 5.0
        %v1346 = vmul.f32 %v1139, 5.0
        %v1347 = vmul.f32 %v1188, 5.0
        %v1348 = vmul.f32 %v1237, 5.0
        %v1349 = vmul.f32 %v1286, 5.0
        %v1350 = vmul.f32 %v1141, 5.0
        %v1351 = vmul.f32 %v1190, 5.0
        %v1352 = vmul.f32 %v1239, 5.0
        %v1353 = vmul.f32 %v1288, 5.0
        %v1354 = vld [vmem:[#allocation2] sm:$0xf]
        %v1355 = vld [vmem:[#allocation2 + $0x4] sm:$0xf]
        %v1356 = vld [vmem:[#allocation2 + $0x8] sm:$0xf]
        %v1357 = vld [vmem:[#allocation2 + $0xc] sm:$0xf]
        %v1358 = vld [vmem:[#allocation2 + $0x10] sm:$0xf]
        %v1359 = vld [vmem:[#allocation2 + $0x14] sm:$0xf]
        %v1360 = vld [vmem:[#allocation2 + $0x18] sm:$0xf]
        %v1361 = vld [vmem:[#allocation2 + $0x1c] sm:$0xf]
        %v1362 = vld [vmem:[#allocation2 + $0x20] sm:$0xf]
        %v1363 = vld [vmem:[#allocation2 + $0x24] sm:$0xf]
        %v1364 = vld [vmem:[#allocation2 + $0x28] sm:$0xf]
        %v1365 = vld [vmem:[#allocation2 + $0x2c] sm:$0xf]
        %v1366 = vld [vmem:[#allocation2 + $0x30] sm:$0xf]
        %v1367 = vld [vmem:[#allocation2 + $0x34] sm:$0xf]
        %v1368 = vld [vmem:[#allocation2 + $0x38] sm:$0xf]
        %v1369 = vld [vmem:[#allocation2 + $0x3c] sm:$0xf]
        %v1370 = vld [vmem:[%s423] sm:$0xff]
        %v1371 = vld [vmem:[%s423 + $0x8] sm:$0xff]
        %v1372 = vld [vmem:[%s423 + $0x10] sm:$0xff]
        %v1373 = vld [vmem:[%s423 + $0x18] sm:$0xff]
        %v1390 = vunpack.c.l.b16 %v1354
        %v1391 = vunpack.c.l.b16 %v1355
        %v1392 = vunpack.c.l.b16 %v1356
        %v1393 = vunpack.c.l.b16 %v1357
        %v1394 = vunpack.c.l.b16 %v1358
        %v1395 = vunpack.c.l.b16 %v1359
        %v1396 = vunpack.c.l.b16 %v1360
        %v1397 = vunpack.c.l.b16 %v1361
        %v1398 = vunpack.c.l.b16 %v1362
        %v1399 = vunpack.c.l.b16 %v1363
        %v1400 = vunpack.c.l.b16 %v1364
        %v1401 = vunpack.c.l.b16 %v1365
        %v1402 = vunpack.c.l.b16 %v1366
        %v1403 = vunpack.c.l.b16 %v1367
        %v1404 = vunpack.c.l.b16 %v1368
        %v1405 = vunpack.c.l.b16 %v1369
        %v1406 = vpack.c.b16 %v1391, %v1390
        %v1407 = vpack.c.b16 %v1393, %v1392
        %v1408 = vpack.c.b16 %v1395, %v1394
        %v1409 = vpack.c.b16 %v1397, %v1396
        %v1410 = vpack.c.b16 %v1399, %v1398
        %v1411 = vpack.c.b16 %v1401, %v1400
        %v1412 = vpack.c.b16 %v1403, %v1402
        %v1413 = vpack.c.b16 %v1405, %v1404
        %v1418 = vunpack.c.l.b16 %v1370
        %v1419 = vunpack.c.h.b16 %v1370
        %v1420 = vunpack.c.l.b16 %v1371
        %v1421 = vunpack.c.h.b16 %v1371
        %v1422 = vunpack.c.l.b16 %v1372
        %v1423 = vunpack.c.h.b16 %v1372
        %v1424 = vunpack.c.l.b16 %v1373
        %v1425 = vunpack.c.h.b16 %v1373
        %v1426 = vpack.c.b16 %v1422, %v1418
        %v1427 = vpack.c.b16 %v1423, %v1419
        %v1428 = vpack.c.b16 %v1424, %v1420
        %v1429 = vpack.c.b16 %v1425, %v1421
        %vm1434 = vcmask 130048
        %v1436 = vsel %vm1434, %v1406, 0
        %v1439 = vsel %vm1434, %v1407, 0
        %v1442 = vsel %vm1434, %v1408, 0
        %v1445 = vsel %vm1434, %v1409, 0
        %v1448 = vsel %vm1434, %v1410, 0
        %v1451 = vsel %vm1434, %v1411, 0
        %v1454 = vsel %vm1434, %v1412, 0
        %v1457 = vsel %vm1434, %v1413, 0
        %1459 = vmatpush.bf16.msra.mxu0 0
        %1460 = vmatpush.bf16.msra.mxu0 0
        %1461 = vmatpush.bf16.msra.mxu0 0
        %1462 = vmatpush.bf16.msra.mxu0 0
        %1463 = vmatpush.bf16.msra.mxu0 0
        %1464 = vmatpush.bf16.msra.mxu0 0
        %1465 = vmatpush.bf16.msra.mxu0 0
        %1466 = vmatpush.bf16.msra.mxu0 %v1426
        %1467 = vmatmul.bf16.gmra.mxu0 %v1436
        %v1468 = vpop.f32.mrf.mxu0
        %v1469 = vadd.f32 0.0, %v1468
        %v1470 = vpop.f32.mrf.mxu0
        %v1471 = vadd.f32 0.0, %v1470
        %1472 = vmatmul.bf16.gmra.mxu0 %v1439
        %v1473 = vpop.f32.mrf.mxu0
        %v1474 = vadd.f32 0.0, %v1473
        %v1475 = vpop.f32.mrf.mxu0
        %v1476 = vadd.f32 0.0, %v1475
        %1477 = vmatmul.bf16.gmra.mxu0 %v1442
        %v1478 = vpop.f32.mrf.mxu0
        %v1479 = vadd.f32 0.0, %v1478
        %v1480 = vpop.f32.mrf.mxu0
        %v1481 = vadd.f32 0.0, %v1480
        %1482 = vmatmul.bf16.gmra.mxu0 %v1445
        %v1483 = vpop.f32.mrf.mxu0
        %v1484 = vadd.f32 0.0, %v1483
        %v1485 = vpop.f32.mrf.mxu0
        %v1486 = vadd.f32 0.0, %v1485
        %1487 = vmatmul.bf16.gmra.mxu0 %v1448
        %v1488 = vpop.f32.mrf.mxu0
        %v1489 = vadd.f32 0.0, %v1488
        %v1490 = vpop.f32.mrf.mxu0
        %v1491 = vadd.f32 0.0, %v1490
        %1492 = vmatmul.bf16.gmra.mxu0 %v1451
        %v1493 = vpop.f32.mrf.mxu0
        %v1494 = vadd.f32 0.0, %v1493
        %v1495 = vpop.f32.mrf.mxu0
        %v1496 = vadd.f32 0.0, %v1495
        %1497 = vmatmul.bf16.gmra.mxu0 %v1454
        %v1498 = vpop.f32.mrf.mxu0
        %v1499 = vadd.f32 0.0, %v1498
        %v1500 = vpop.f32.mrf.mxu0
        %v1501 = vadd.f32 0.0, %v1500
        %1502 = vmatmul.bf16.gmra.mxu0 %v1457
        %v1503 = vpop.f32.mrf.mxu0
        %v1504 = vadd.f32 0.0, %v1503
        %v1505 = vpop.f32.mrf.mxu0
        %v1506 = vadd.f32 0.0, %v1505
        %1507 = vdwg.mxu0
        %1508 = vmatpush.bf16.msra.mxu0 0
        %1509 = vmatpush.bf16.msra.mxu0 0
        %1510 = vmatpush.bf16.msra.mxu0 0
        %1511 = vmatpush.bf16.msra.mxu0 0
        %1512 = vmatpush.bf16.msra.mxu0 0
        %1513 = vmatpush.bf16.msra.mxu0 0
        %1514 = vmatpush.bf16.msra.mxu0 0
        %1515 = vmatpush.bf16.msra.mxu0 %v1427
        %1516 = vmatmul.bf16.gmra.mxu0 %v1436
        %v1517 = vpop.f32.mrf.mxu0
        %v1518 = vadd.f32 0.0, %v1517
        %v1519 = vpop.f32.mrf.mxu0
        %v1520 = vadd.f32 0.0, %v1519
        %1521 = vmatmul.bf16.gmra.mxu0 %v1439
        %v1522 = vpop.f32.mrf.mxu0
        %v1523 = vadd.f32 0.0, %v1522
        %v1524 = vpop.f32.mrf.mxu0
        %v1525 = vadd.f32 0.0, %v1524
        %1526 = vmatmul.bf16.gmra.mxu0 %v1442
        %v1527 = vpop.f32.mrf.mxu0
        %v1528 = vadd.f32 0.0, %v1527
        %v1529 = vpop.f32.mrf.mxu0
        %v1530 = vadd.f32 0.0, %v1529
        %1531 = vmatmul.bf16.gmra.mxu0 %v1445
        %v1532 = vpop.f32.mrf.mxu0
        %v1533 = vadd.f32 0.0, %v1532
        %v1534 = vpop.f32.mrf.mxu0
        %v1535 = vadd.f32 0.0, %v1534
        %1536 = vmatmul.bf16.gmra.mxu0 %v1448
        %v1537 = vpop.f32.mrf.mxu0
        %v1538 = vadd.f32 0.0, %v1537
        %v1539 = vpop.f32.mrf.mxu0
        %v1540 = vadd.f32 0.0, %v1539
        %1541 = vmatmul.bf16.gmra.mxu0 %v1451
        %v1542 = vpop.f32.mrf.mxu0
        %v1543 = vadd.f32 0.0, %v1542
        %v1544 = vpop.f32.mrf.mxu0
        %v1545 = vadd.f32 0.0, %v1544
        %1546 = vmatmul.bf16.gmra.mxu0 %v1454
        %v1547 = vpop.f32.mrf.mxu0
        %v1548 = vadd.f32 0.0, %v1547
        %v1549 = vpop.f32.mrf.mxu0
        %v1550 = vadd.f32 0.0, %v1549
        %1551 = vmatmul.bf16.gmra.mxu0 %v1457
        %v1552 = vpop.f32.mrf.mxu0
        %v1553 = vadd.f32 0.0, %v1552
        %v1554 = vpop.f32.mrf.mxu0
        %v1555 = vadd.f32 0.0, %v1554
        %1556 = vdwg.mxu0
        %1557 = vmatpush.bf16.msra.mxu0 0
        %1558 = vmatpush.bf16.msra.mxu0 0
        %1559 = vmatpush.bf16.msra.mxu0 0
        %1560 = vmatpush.bf16.msra.mxu0 0
        %1561 = vmatpush.bf16.msra.mxu0 0
        %1562 = vmatpush.bf16.msra.mxu0 0
        %1563 = vmatpush.bf16.msra.mxu0 0
        %1564 = vmatpush.bf16.msra.mxu0 %v1428
        %1565 = vmatmul.bf16.gmra.mxu0 %v1436
        %v1566 = vpop.f32.mrf.mxu0
        %v1567 = vadd.f32 0.0, %v1566
        %v1568 = vpop.f32.mrf.mxu0
        %v1569 = vadd.f32 0.0, %v1568
        %1570 = vmatmul.bf16.gmra.mxu0 %v1439
        %v1571 = vpop.f32.mrf.mxu0
        %v1572 = vadd.f32 0.0, %v1571
        %v1573 = vpop.f32.mrf.mxu0
        %v1574 = vadd.f32 0.0, %v1573
        %1575 = vmatmul.bf16.gmra.mxu0 %v1442
        %v1576 = vpop.f32.mrf.mxu0
        %v1577 = vadd.f32 0.0, %v1576
        %v1578 = vpop.f32.mrf.mxu0
        %v1579 = vadd.f32 0.0, %v1578
        %1580 = vmatmul.bf16.gmra.mxu0 %v1445
        %v1581 = vpop.f32.mrf.mxu0
        %v1582 = vadd.f32 0.0, %v1581
        %v1583 = vpop.f32.mrf.mxu0
        %v1584 = vadd.f32 0.0, %v1583
        %1585 = vmatmul.bf16.gmra.mxu0 %v1448
        %v1586 = vpop.f32.mrf.mxu0
        %v1587 = vadd.f32 0.0, %v1586
        %v1588 = vpop.f32.mrf.mxu0
        %v1589 = vadd.f32 0.0, %v1588
        %1590 = vmatmul.bf16.gmra.mxu0 %v1451
        %v1591 = vpop.f32.mrf.mxu0
        %v1592 = vadd.f32 0.0, %v1591
        %v1593 = vpop.f32.mrf.mxu0
        %v1594 = vadd.f32 0.0, %v1593
        %1595 = vmatmul.bf16.gmra.mxu0 %v1454
        %v1596 = vpop.f32.mrf.mxu0
        %v1597 = vadd.f32 0.0, %v1596
        %v1598 = vpop.f32.mrf.mxu0
        %v1599 = vadd.f32 0.0, %v1598
        %1600 = vmatmul.bf16.gmra.mxu0 %v1457
        %v1601 = vpop.f32.mrf.mxu0
        %v1602 = vadd.f32 0.0, %v1601
        %v1603 = vpop.f32.mrf.mxu0
        %v1604 = vadd.f32 0.0, %v1603
        %1605 = vdwg.mxu0
        %1606 = vmatpush.bf16.msra.mxu0 0
        %1607 = vmatpush.bf16.msra.mxu0 0
        %1608 = vmatpush.bf16.msra.mxu0 0
        %1609 = vmatpush.bf16.msra.mxu0 0
        %1610 = vmatpush.bf16.msra.mxu0 0
        %1611 = vmatpush.bf16.msra.mxu0 0
        %1612 = vmatpush.bf16.msra.mxu0 0
        %1613 = vmatpush.bf16.msra.mxu0 %v1429
        %1614 = vmatmul.bf16.gmra.mxu0 %v1436
        %v1615 = vpop.f32.mrf.mxu0
        %v1616 = vadd.f32 0.0, %v1615
        %v1617 = vpop.f32.mrf.mxu0
        %v1618 = vadd.f32 0.0, %v1617
        %1619 = vmatmul.bf16.gmra.mxu0 %v1439
        %v1620 = vpop.f32.mrf.mxu0
        %v1621 = vadd.f32 0.0, %v1620
        %v1622 = vpop.f32.mrf.mxu0
        %v1623 = vadd.f32 0.0, %v1622
        %1624 = vmatmul.bf16.gmra.mxu0 %v1442
        %v1625 = vpop.f32.mrf.mxu0
        %v1626 = vadd.f32 0.0, %v1625
        %v1627 = vpop.f32.mrf.mxu0
        %v1628 = vadd.f32 0.0, %v1627
        %1629 = vmatmul.bf16.gmra.mxu0 %v1445
        %v1630 = vpop.f32.mrf.mxu0
        %v1631 = vadd.f32 0.0, %v1630
        %v1632 = vpop.f32.mrf.mxu0
        %v1633 = vadd.f32 0.0, %v1632
        %1634 = vmatmul.bf16.gmra.mxu0 %v1448
        %v1635 = vpop.f32.mrf.mxu0
        %v1636 = vadd.f32 0.0, %v1635
        %v1637 = vpop.f32.mrf.mxu0
        %v1638 = vadd.f32 0.0, %v1637
        %1639 = vmatmul.bf16.gmra.mxu0 %v1451
        %v1640 = vpop.f32.mrf.mxu0
        %v1641 = vadd.f32 0.0, %v1640
        %v1642 = vpop.f32.mrf.mxu0
        %v1643 = vadd.f32 0.0, %v1642
        %1644 = vmatmul.bf16.gmra.mxu0 %v1454
        %v1645 = vpop.f32.mrf.mxu0
        %v1646 = vadd.f32 0.0, %v1645
        %v1647 = vpop.f32.mrf.mxu0
        %v1648 = vadd.f32 0.0, %v1647
        %1649 = vmatmul.bf16.gmra.mxu0 %v1457
        %v1650 = vpop.f32.mrf.mxu0
        %v1651 = vadd.f32 0.0, %v1650
        %v1652 = vpop.f32.mrf.mxu0
        %v1653 = vadd.f32 0.0, %v1652
        %1654 = vdwg.mxu0
        %v1655 = vld [vmem:[#allocation4] sm:$0xff]
        %v1656 = vld [vmem:[#allocation4 + $0x8] sm:$0xff]
        %v1657 = vld [vmem:[#allocation4 + $0x10] sm:$0xff]
        %v1658 = vld [vmem:[#allocation4 + $0x18] sm:$0xff]
        %v1659 = vld [vmem:[#allocation4 + $0x20] sm:$0xff]
        %v1660 = vld [vmem:[#allocation4 + $0x28] sm:$0xff]
        %v1661 = vld [vmem:[#allocation4 + $0x30] sm:$0xff]
        %v1662 = vld [vmem:[#allocation4 + $0x38] sm:$0xff]
        %v1663 = vld [vmem:[#allocation4 + $0x40] sm:$0xff]
        %v1664 = vld [vmem:[#allocation4 + $0x48] sm:$0xff]
        %v1665 = vld [vmem:[#allocation4 + $0x50] sm:$0xff]
        %v1666 = vld [vmem:[#allocation4 + $0x58] sm:$0xff]
        %v1667 = vld [vmem:[#allocation4 + $0x60] sm:$0xff]
        %v1668 = vld [vmem:[#allocation4 + $0x68] sm:$0xff]
        %v1669 = vld [vmem:[#allocation4 + $0x70] sm:$0xff]
        %v1670 = vld [vmem:[#allocation4 + $0x78] sm:$0xff]
        %v1671 = vmax.f32 %v1290, %v1291
        %v1672 = vmax.f32 %v1671, %v1292
        %v1673 = vmax.f32 %v1672, %v1293
        %1674 = vmax.xlane.f32.xlu0 %v1673
        %v1675 = vpop.xlane.xlu0 %1674
        %v1676 = vmax.f32 %v1294, %v1295
        %v1677 = vmax.f32 %v1676, %v1296
        %v1678 = vmax.f32 %v1677, %v1297
        %1679 = vmax.xlane.f32.xlu0 %v1678
        %v1680 = vpop.xlane.xlu0 %1679
        %v1681 = vmax.f32 %v1298, %v1299
        %v1682 = vmax.f32 %v1681, %v1300
        %v1683 = vmax.f32 %v1682, %v1301
        %1684 = vmax.xlane.f32.xlu0 %v1683
        %v1685 = vpop.xlane.xlu0 %1684
        %v1686 = vmax.f32 %v1302, %v1303
        %v1687 = vmax.f32 %v1686, %v1304
        %v1688 = vmax.f32 %v1687, %v1305
        %1689 = vmax.xlane.f32.xlu0 %v1688
        %v1690 = vpop.xlane.xlu0 %1689
        %v1691 = vmax.f32 %v1306, %v1307
        %v1692 = vmax.f32 %v1691, %v1308
        %v1693 = vmax.f32 %v1692, %v1309
        %1694 = vmax.xlane.f32.xlu0 %v1693
        %v1695 = vpop.xlane.xlu0 %1694
        %v1696 = vmax.f32 %v1310, %v1311
        %v1697 = vmax.f32 %v1696, %v1312
        %v1698 = vmax.f32 %v1697, %v1313
        %1699 = vmax.xlane.f32.xlu0 %v1698
        %v1700 = vpop.xlane.xlu0 %1699
        %v1701 = vmax.f32 %v1314, %v1315
        %v1702 = vmax.f32 %v1701, %v1316
        %v1703 = vmax.f32 %v1702, %v1317
        %1704 = vmax.xlane.f32.xlu0 %v1703
        %v1705 = vpop.xlane.xlu0 %1704
        %v1706 = vmax.f32 %v1318, %v1319
        %v1707 = vmax.f32 %v1706, %v1320
        %v1708 = vmax.f32 %v1707, %v1321
        %1709 = vmax.xlane.f32.xlu0 %v1708
        %v1710 = vpop.xlane.xlu0 %1709
        %v1711 = vmax.f32 %v1322, %v1323
        %v1712 = vmax.f32 %v1711, %v1324
        %v1713 = vmax.f32 %v1712, %v1325
        %1714 = vmax.xlane.f32.xlu0 %v1713
        %v1715 = vpop.xlane.xlu0 %1714
        %v1716 = vmax.f32 %v1326, %v1327
        %v1717 = vmax.f32 %v1716, %v1328
        %v1718 = vmax.f32 %v1717, %v1329
        %1719 = vmax.xlane.f32.xlu0 %v1718
        %v1720 = vpop.xlane.xlu0 %1719
        %v1721 = vmax.f32 %v1330, %v1331
        %v1722 = vmax.f32 %v1721, %v1332
        %v1723 = vmax.f32 %v1722, %v1333
        %1724 = vmax.xlane.f32.xlu0 %v1723
        %v1725 = vpop.xlane.xlu0 %1724
        %v1726 = vmax.f32 %v1334, %v1335
        %v1727 = vmax.f32 %v1726, %v1336
        %v1728 = vmax.f32 %v1727, %v1337
        %1729 = vmax.xlane.f32.xlu0 %v1728
        %v1730 = vpop.xlane.xlu0 %1729
        %v1731 = vmax.f32 %v1338, %v1339
        %v1732 = vmax.f32 %v1731, %v1340
        %v1733 = vmax.f32 %v1732, %v1341
        %1734 = vmax.xlane.f32.xlu0 %v1733
        %v1735 = vpop.xlane.xlu0 %1734
        %v1736 = vmax.f32 %v1342, %v1343
        %v1737 = vmax.f32 %v1736, %v1344
        %v1738 = vmax.f32 %v1737, %v1345
        %1739 = vmax.xlane.f32.xlu0 %v1738
        %v1740 = vpop.xlane.xlu0 %1739
        %v1741 = vmax.f32 %v1346, %v1347
        %v1742 = vmax.f32 %v1741, %v1348
        %v1743 = vmax.f32 %v1742, %v1349
        %1744 = vmax.xlane.f32.xlu0 %v1743
        %v1745 = vpop.xlane.xlu0 %1744
        %v1746 = vmax.f32 %v1350, %v1351
        %v1747 = vmax.f32 %v1746, %v1352
        %v1748 = vmax.f32 %v1747, %v1353
        %1749 = vmax.xlane.f32.xlu0 %v1748
        %v1750 = vpop.xlane.xlu0 %1749
        %v1751 = vmax.f32 %v1655, %v1675
        %v1752 = vmax.f32 %v1656, %v1680
        %v1753 = vmax.f32 %v1657, %v1685
        %v1754 = vmax.f32 %v1658, %v1690
        %v1755 = vmax.f32 %v1659, %v1695
        %v1756 = vmax.f32 %v1660, %v1700
        %v1757 = vmax.f32 %v1661, %v1705
        %v1758 = vmax.f32 %v1662, %v1710
        %v1759 = vmax.f32 %v1663, %v1715
        %v1760 = vmax.f32 %v1664, %v1720
        %v1761 = vmax.f32 %v1665, %v1725
        %v1762 = vmax.f32 %v1666, %v1730
        %v1763 = vmax.f32 %v1667, %v1735
        %v1764 = vmax.f32 %v1668, %v1740
        %v1765 = vmax.f32 %v1669, %v1745
        %v1766 = vmax.f32 %v1670, %v1750
        %1768 = vset.pattern.permute.xlu0 0
        %1769 = vperm.xlu0 %1768, %v1751
        %v1770 = vpop.permute.xlu0 %1769
        %1773 = vset.pattern.permute.xlu0 0
        %1774 = vperm.xlu0 %1773, %v1752
        %v1775 = vpop.permute.xlu0 %1774
        %1778 = vset.pattern.permute.xlu0 0
        %1779 = vperm.xlu0 %1778, %v1753
        %v1780 = vpop.permute.xlu0 %1779
        %1783 = vset.pattern.permute.xlu0 0
        %1784 = vperm.xlu0 %1783, %v1754
        %v1785 = vpop.permute.xlu0 %1784
        %1788 = vset.pattern.permute.xlu0 0
        %1789 = vperm.xlu0 %1788, %v1755
        %v1790 = vpop.permute.xlu0 %1789
        %1793 = vset.pattern.permute.xlu0 0
        %1794 = vperm.xlu0 %1793, %v1756
        %v1795 = vpop.permute.xlu0 %1794
        %1798 = vset.pattern.permute.xlu0 0
        %1799 = vperm.xlu0 %1798, %v1757
        %v1800 = vpop.permute.xlu0 %1799
        %1803 = vset.pattern.permute.xlu0 0
        %1804 = vperm.xlu0 %1803, %v1758
        %v1805 = vpop.permute.xlu0 %1804
        %1808 = vset.pattern.permute.xlu0 0
        %1809 = vperm.xlu0 %1808, %v1759
        %v1810 = vpop.permute.xlu0 %1809
        %1813 = vset.pattern.permute.xlu0 0
        %1814 = vperm.xlu0 %1813, %v1760
        %v1815 = vpop.permute.xlu0 %1814
        %1818 = vset.pattern.permute.xlu0 0
        %1819 = vperm.xlu0 %1818, %v1761
        %v1820 = vpop.permute.xlu0 %1819
        %1823 = vset.pattern.permute.xlu0 0
        %1824 = vperm.xlu0 %1823, %v1762
        %v1825 = vpop.permute.xlu0 %1824
        %1828 = vset.pattern.permute.xlu0 0
        %1829 = vperm.xlu0 %1828, %v1763
        %v1830 = vpop.permute.xlu0 %1829
        %1833 = vset.pattern.permute.xlu0 0
        %1834 = vperm.xlu0 %1833, %v1764
        %v1835 = vpop.permute.xlu0 %1834
        %1838 = vset.pattern.permute.xlu0 0
        %1839 = vperm.xlu0 %1838, %v1765
        %v1840 = vpop.permute.xlu0 %1839
        %1843 = vset.pattern.permute.xlu0 0
        %1844 = vperm.xlu0 %1843, %v1766
        %v1845 = vpop.permute.xlu0 %1844
        %v1847 = vsub.f32 %v1290, %v1770
        %v1848 = vsub.f32 %v1291, %v1770
        %v1849 = vsub.f32 %v1292, %v1770
        %v1850 = vsub.f32 %v1293, %v1770
        %v1851 = vsub.f32 %v1294, %v1775
        %v1852 = vsub.f32 %v1295, %v1775
        %v1853 = vsub.f32 %v1296, %v1775
        %v1854 = vsub.f32 %v1297, %v1775
        %v1855 = vsub.f32 %v1298, %v1780
        %v1856 = vsub.f32 %v1299, %v1780
        %v1857 = vsub.f32 %v1300, %v1780
        %v1858 = vsub.f32 %v1301, %v1780
        %v1859 = vsub.f32 %v1302, %v1785
        %v1860 = vsub.f32 %v1303, %v1785
        %v1861 = vsub.f32 %v1304, %v1785
        %v1862 = vsub.f32 %v1305, %v1785
        %v1863 = vsub.f32 %v1306, %v1790
        %v1864 = vsub.f32 %v1307, %v1790
        %v1865 = vsub.f32 %v1308, %v1790
        %v1866 = vsub.f32 %v1309, %v1790
        %v1867 = vsub.f32 %v1310, %v1795
        %v1868 = vsub.f32 %v1311, %v1795
        %v1869 = vsub.f32 %v1312, %v1795
        %v1870 = vsub.f32 %v1313, %v1795
        %v1871 = vsub.f32 %v1314, %v1800
        %v1872 = vsub.f32 %v1315, %v1800
        %v1873 = vsub.f32 %v1316, %v1800
        %v1874 = vsub.f32 %v1317, %v1800
        %v1875 = vsub.f32 %v1318, %v1805
        %v1876 = vsub.f32 %v1319, %v1805
        %v1877 = vsub.f32 %v1320, %v1805
        %v1878 = vsub.f32 %v1321, %v1805
        %v1879 = vsub.f32 %v1322, %v1810
        %v1880 = vsub.f32 %v1323, %v1810
        %v1881 = vsub.f32 %v1324, %v1810
        %v1882 = vsub.f32 %v1325, %v1810
        %v1883 = vsub.f32 %v1326, %v1815
        %v1884 = vsub.f32 %v1327, %v1815
        %v1885 = vsub.f32 %v1328, %v1815
        %v1886 = vsub.f32 %v1329, %v1815
        %v1887 = vsub.f32 %v1330, %v1820
        %v1888 = vsub.f32 %v1331, %v1820
        %v1889 = vsub.f32 %v1332, %v1820
        %v1890 = vsub.f32 %v1333, %v1820
        %v1891 = vsub.f32 %v1334, %v1825
        %v1892 = vsub.f32 %v1335, %v1825
        %v1893 = vsub.f32 %v1336, %v1825
        %v1894 = vsub.f32 %v1337, %v1825
        %v1895 = vsub.f32 %v1338, %v1830
        %v1896 = vsub.f32 %v1339, %v1830
        %v1897 = vsub.f32 %v1340, %v1830
        %v1898 = vsub.f32 %v1341, %v1830
        %v1899 = vsub.f32 %v1342, %v1835
        %v1900 = vsub.f32 %v1343, %v1835
        %v1901 = vsub.f32 %v1344, %v1835
        %v1902 = vsub.f32 %v1345, %v1835
        %v1903 = vsub.f32 %v1346, %v1840
        %v1904 = vsub.f32 %v1347, %v1840
        %v1905 = vsub.f32 %v1348, %v1840
        %v1906 = vsub.f32 %v1349, %v1840
        %v1907 = vsub.f32 %v1350, %v1845
        %v1908 = vsub.f32 %v1351, %v1845
        %v1909 = vsub.f32 %v1352, %v1845
        %v1910 = vsub.f32 %v1353, %v1845
        %v1911 = vmul.f32 %v1847, 1.442695
        %v1912 = vpow.pop %v1911
        %v1913 = vmul.f32 %v1848, 1.442695
        %v1914 = vpow.pop %v1913
        %v1915 = vmul.f32 %v1849, 1.442695
        %v1916 = vpow.pop %v1915
        %v1917 = vmul.f32 %v1850, 1.442695
        %v1918 = vpow.pop %v1917
        %v1919 = vmul.f32 %v1851, 1.442695
        %v1920 = vpow.pop %v1919
        %v1921 = vmul.f32 %v1852, 1.442695
        %v1922 = vpow.pop %v1921
        %v1923 = vmul.f32 %v1853, 1.442695
        %v1924 = vpow.pop %v1923
        %v1925 = vmul.f32 %v1854, 1.442695
        %v1926 = vpow.pop %v1925
        %v1927 = vmul.f32 %v1855, 1.442695
        %v1928 = vpow.pop %v1927
        %v1929 = vmul.f32 %v1856, 1.442695
        %v1930 = vpow.pop %v1929
        %v1931 = vmul.f32 %v1857, 1.442695
        %v1932 = vpow.pop %v1931
        %v1933 = vmul.f32 %v1858, 1.442695
        %v1934 = vpow.pop %v1933
        %v1935 = vmul.f32 %v1859, 1.442695
        %v1936 = vpow.pop %v1935
        %v1937 = vmul.f32 %v1860, 1.442695
        %v1938 = vpow.pop %v1937
        %v1939 = vmul.f32 %v1861, 1.442695
        %v1940 = vpow.pop %v1939
        %v1941 = vmul.f32 %v1862, 1.442695
        %v1942 = vpow.pop %v1941
        %v1943 = vmul.f32 %v1863, 1.442695
        %v1944 = vpow.pop %v1943
        %v1945 = vmul.f32 %v1864, 1.442695
        %v1946 = vpow.pop %v1945
        %v1947 = vmul.f32 %v1865, 1.442695
        %v1948 = vpow.pop %v1947
        %v1949 = vmul.f32 %v1866, 1.442695
        %v1950 = vpow.pop %v1949
        %v1951 = vmul.f32 %v1867, 1.442695
        %v1952 = vpow.pop %v1951
        %v1953 = vmul.f32 %v1868, 1.442695
        %v1954 = vpow.pop %v1953
        %v1955 = vmul.f32 %v1869, 1.442695
        %v1956 = vpow.pop %v1955
        %v1957 = vmul.f32 %v1870, 1.442695
        %v1958 = vpow.pop %v1957
        %v1959 = vmul.f32 %v1871, 1.442695
        %v1960 = vpow.pop %v1959
        %v1961 = vmul.f32 %v1872, 1.442695
        %v1962 = vpow.pop %v1961
        %v1963 = vmul.f32 %v1873, 1.442695
        %v1964 = vpow.pop %v1963
        %v1965 = vmul.f32 %v1874, 1.442695
        %v1966 = vpow.pop %v1965
        %v1967 = vmul.f32 %v1875, 1.442695
        %v1968 = vpow.pop %v1967
        %v1969 = vmul.f32 %v1876, 1.442695
        %v1970 = vpow.pop %v1969
        %v1971 = vmul.f32 %v1877, 1.442695
        %v1972 = vpow.pop %v1971
        %v1973 = vmul.f32 %v1878, 1.442695
        %v1974 = vpow.pop %v1973
        %v1975 = vmul.f32 %v1879, 1.442695
        %v1976 = vpow.pop %v1975
        %v1977 = vmul.f32 %v1880, 1.442695
        %v1978 = vpow.pop %v1977
        %v1979 = vmul.f32 %v1881, 1.442695
        %v1980 = vpow.pop %v1979
        %v1981 = vmul.f32 %v1882, 1.442695
        %v1982 = vpow.pop %v1981
        %v1983 = vmul.f32 %v1883, 1.442695
        %v1984 = vpow.pop %v1983
        %v1985 = vmul.f32 %v1884, 1.442695
        %v1986 = vpow.pop %v1985
        %v1987 = vmul.f32 %v1885, 1.442695
        %v1988 = vpow.pop %v1987
        %v1989 = vmul.f32 %v1886, 1.442695
        %v1990 = vpow.pop %v1989
        %v1991 = vmul.f32 %v1887, 1.442695
        %v1992 = vpow.pop %v1991
        %v1993 = vmul.f32 %v1888, 1.442695
        %v1994 = vpow.pop %v1993
        %v1995 = vmul.f32 %v1889, 1.442695
        %v1996 = vpow.pop %v1995
        %v1997 = vmul.f32 %v1890, 1.442695
        %v1998 = vpow.pop %v1997
        %v1999 = vmul.f32 %v1891, 1.442695
        %v2000 = vpow.pop %v1999
        %v2001 = vmul.f32 %v1892, 1.442695
        %v2002 = vpow.pop %v2001
        %v2003 = vmul.f32 %v1893, 1.442695
        %v2004 = vpow.pop %v2003
        %v2005 = vmul.f32 %v1894, 1.442695
        %v2006 = vpow.pop %v2005
        %v2007 = vmul.f32 %v1895, 1.442695
        %v2008 = vpow.pop %v2007
        %v2009 = vmul.f32 %v1896, 1.442695
        %v2010 = vpow.pop %v2009
        %v2011 = vmul.f32 %v1897, 1.442695
        %v2012 = vpow.pop %v2011
        %v2013 = vmul.f32 %v1898, 1.442695
        %v2014 = vpow.pop %v2013
        %v2015 = vmul.f32 %v1899, 1.442695
        %v2016 = vpow.pop %v2015
        %v2017 = vmul.f32 %v1900, 1.442695
        %v2018 = vpow.pop %v2017
        %v2019 = vmul.f32 %v1901, 1.442695
        %v2020 = vpow.pop %v2019
        %v2021 = vmul.f32 %v1902, 1.442695
        %v2022 = vpow.pop %v2021
        %v2023 = vmul.f32 %v1903, 1.442695
        %v2024 = vpow.pop %v2023
        %v2025 = vmul.f32 %v1904, 1.442695
        %v2026 = vpow.pop %v2025
        %v2027 = vmul.f32 %v1905, 1.442695
        %v2028 = vpow.pop %v2027
        %v2029 = vmul.f32 %v1906, 1.442695
        %v2030 = vpow.pop %v2029
        %v2031 = vmul.f32 %v1907, 1.442695
        %v2032 = vpow.pop %v2031
        %v2033 = vmul.f32 %v1908, 1.442695
        %v2034 = vpow.pop %v2033
        %v2035 = vmul.f32 %v1909, 1.442695
        %v2036 = vpow.pop %v2035
        %v2037 = vmul.f32 %v1910, 1.442695
        %v2038 = vpow.pop %v2037
        %v2039 = vmul.f32 %v1912, %v1469
        %v2040 = vmul.f32 %v1914, %v1518
        %v2041 = vmul.f32 %v1916, %v1567
        %v2042 = vmul.f32 %v1918, %v1616
        %v2043 = vmul.f32 %v1920, %v1471
        %v2044 = vmul.f32 %v1922, %v1520
        %v2045 = vmul.f32 %v1924, %v1569
        %v2046 = vmul.f32 %v1926, %v1618
        %v2047 = vmul.f32 %v1928, %v1474
        %v2048 = vmul.f32 %v1930, %v1523
        %v2049 = vmul.f32 %v1932, %v1572
        %v2050 = vmul.f32 %v1934, %v1621
        %v2051 = vmul.f32 %v1936, %v1476
        %v2052 = vmul.f32 %v1938, %v1525
        %v2053 = vmul.f32 %v1940, %v1574
        %v2054 = vmul.f32 %v1942, %v1623
        %v2055 = vmul.f32 %v1944, %v1479
        %v2056 = vmul.f32 %v1946, %v1528
        %v2057 = vmul.f32 %v1948, %v1577
        %v2058 = vmul.f32 %v1950, %v1626
        %v2059 = vmul.f32 %v1952, %v1481
        %v2060 = vmul.f32 %v1954, %v1530
        %v2061 = vmul.f32 %v1956, %v1579
        %v2062 = vmul.f32 %v1958, %v1628
        %v2063 = vmul.f32 %v1960, %v1484
        %v2064 = vmul.f32 %v1962, %v1533
        %v2065 = vmul.f32 %v1964, %v1582
        %v2066 = vmul.f32 %v1966, %v1631
        %v2067 = vmul.f32 %v1968, %v1486
        %v2068 = vmul.f32 %v1970, %v1535
        %v2069 = vmul.f32 %v1972, %v1584
        %v2070 = vmul.f32 %v1974, %v1633
        %v2071 = vmul.f32 %v1976, %v1489
        %v2072 = vmul.f32 %v1978, %v1538
        %v2073 = vmul.f32 %v1980, %v1587
        %v2074 = vmul.f32 %v1982, %v1636
        %v2075 = vmul.f32 %v1984, %v1491
        %v2076 = vmul.f32 %v1986, %v1540
        %v2077 = vmul.f32 %v1988, %v1589
        %v2078 = vmul.f32 %v1990, %v1638
        %v2079 = vmul.f32 %v1992, %v1494
        %v2080 = vmul.f32 %v1994, %v1543
        %v2081 = vmul.f32 %v1996, %v1592
        %v2082 = vmul.f32 %v1998, %v1641
        %v2083 = vmul.f32 %v2000, %v1496
        %v2084 = vmul.f32 %v2002, %v1545
        %v2085 = vmul.f32 %v2004, %v1594
        %v2086 = vmul.f32 %v2006, %v1643
        %v2087 = vmul.f32 %v2008, %v1499
        %v2088 = vmul.f32 %v2010, %v1548
        %v2089 = vmul.f32 %v2012, %v1597
        %v2090 = vmul.f32 %v2014, %v1646
        %v2091 = vmul.f32 %v2016, %v1501
        %v2092 = vmul.f32 %v2018, %v1550
        %v2093 = vmul.f32 %v2020, %v1599
        %v2094 = vmul.f32 %v2022, %v1648
        %v2095 = vmul.f32 %v2024, %v1504
        %v2096 = vmul.f32 %v2026, %v1553
        %v2097 = vmul.f32 %v2028, %v1602
        %v2098 = vmul.f32 %v2030, %v1651
        %v2099 = vmul.f32 %v2032, %v1506
        %v2100 = vmul.f32 %v2034, %v1555
        %v2101 = vmul.f32 %v2036, %v1604
        %v2102 = vmul.f32 %v2038, %v1653
        %v2103 = vsub.f32 %v1655, %v1751
        %v2104 = vsub.f32 %v1656, %v1752
        %v2105 = vsub.f32 %v1657, %v1753
        %v2106 = vsub.f32 %v1658, %v1754
        %v2107 = vsub.f32 %v1659, %v1755
        %v2108 = vsub.f32 %v1660, %v1756
        %v2109 = vsub.f32 %v1661, %v1757
        %v2110 = vsub.f32 %v1662, %v1758
        %v2111 = vsub.f32 %v1663, %v1759
        %v2112 = vsub.f32 %v1664, %v1760
        %v2113 = vsub.f32 %v1665, %v1761
        %v2114 = vsub.f32 %v1666, %v1762
        %v2115 = vsub.f32 %v1667, %v1763
        %v2116 = vsub.f32 %v1668, %v1764
        %v2117 = vsub.f32 %v1669, %v1765
        %v2118 = vsub.f32 %v1670, %v1766
        %v2119 = vmul.f32 %v2103, 1.442695
        %v2120 = vpow.pop %v2119
        %v2121 = vmul.f32 %v2104, 1.442695
        %v2122 = vpow.pop %v2121
        %v2123 = vmul.f32 %v2105, 1.442695
        %v2124 = vpow.pop %v2123
        %v2125 = vmul.f32 %v2106, 1.442695
        %v2126 = vpow.pop %v2125
        %v2127 = vmul.f32 %v2107, 1.442695
        %v2128 = vpow.pop %v2127
        %v2129 = vmul.f32 %v2108, 1.442695
        %v2130 = vpow.pop %v2129
        %v2131 = vmul.f32 %v2109, 1.442695
        %v2132 = vpow.pop %v2131
        %v2133 = vmul.f32 %v2110, 1.442695
        %v2134 = vpow.pop %v2133
        %v2135 = vmul.f32 %v2111, 1.442695
        %v2136 = vpow.pop %v2135
        %v2137 = vmul.f32 %v2112, 1.442695
        %v2138 = vpow.pop %v2137
        %v2139 = vmul.f32 %v2113, 1.442695
        %v2140 = vpow.pop %v2139
        %v2141 = vmul.f32 %v2114, 1.442695
        %v2142 = vpow.pop %v2141
        %v2143 = vmul.f32 %v2115, 1.442695
        %v2144 = vpow.pop %v2143
        %v2145 = vmul.f32 %v2116, 1.442695
        %v2146 = vpow.pop %v2145
        %v2147 = vmul.f32 %v2117, 1.442695
        %v2148 = vpow.pop %v2147
        %v2149 = vmul.f32 %v2118, 1.442695
        %v2150 = vpow.pop %v2149
        %v2151 = vld [vmem:[#allocation5] sm:$0xff]
        %v2152 = vld [vmem:[#allocation5 + $0x8] sm:$0xff]
        %v2153 = vld [vmem:[#allocation5 + $0x10] sm:$0xff]
        %v2154 = vld [vmem:[#allocation5 + $0x18] sm:$0xff]
        %v2155 = vld [vmem:[#allocation5 + $0x20] sm:$0xff]
        %v2156 = vld [vmem:[#allocation5 + $0x28] sm:$0xff]
        %v2157 = vld [vmem:[#allocation5 + $0x30] sm:$0xff]
        %v2158 = vld [vmem:[#allocation5 + $0x38] sm:$0xff]
        %v2159 = vld [vmem:[#allocation5 + $0x40] sm:$0xff]
        %v2160 = vld [vmem:[#allocation5 + $0x48] sm:$0xff]
        %v2161 = vld [vmem:[#allocation5 + $0x50] sm:$0xff]
        %v2162 = vld [vmem:[#allocation5 + $0x58] sm:$0xff]
        %v2163 = vld [vmem:[#allocation5 + $0x60] sm:$0xff]
        %v2164 = vld [vmem:[#allocation5 + $0x68] sm:$0xff]
        %v2165 = vld [vmem:[#allocation5 + $0x70] sm:$0xff]
        %v2166 = vld [vmem:[#allocation5 + $0x78] sm:$0xff]
        %v2167 = vmul.f32 %v2120, %v2151
        %v2168 = vmul.f32 %v2122, %v2152
        %v2169 = vmul.f32 %v2124, %v2153
        %v2170 = vmul.f32 %v2126, %v2154
        %v2171 = vmul.f32 %v2128, %v2155
        %v2172 = vmul.f32 %v2130, %v2156
        %v2173 = vmul.f32 %v2132, %v2157
        %v2174 = vmul.f32 %v2134, %v2158
        %v2175 = vmul.f32 %v2136, %v2159
        %v2176 = vmul.f32 %v2138, %v2160
        %v2177 = vmul.f32 %v2140, %v2161
        %v2178 = vmul.f32 %v2142, %v2162
        %v2179 = vmul.f32 %v2144, %v2163
        %v2180 = vmul.f32 %v2146, %v2164
        %v2181 = vmul.f32 %v2148, %v2165
        %v2182 = vmul.f32 %v2150, %v2166
        %v2183 = vadd.f32 %v2039, %v2040
        %v2184 = vadd.f32 %v2183, %v2041
        %v2185 = vadd.f32 %v2184, %v2042
        %2186 = vadd.xlane.f32.xlu0 %v2185
        %v2187 = vpop.xlane.xlu0 %2186
        %v2188 = vadd.f32 %v2043, %v2044
        %v2189 = vadd.f32 %v2188, %v2045
        %v2190 = vadd.f32 %v2189, %v2046
        %2191 = vadd.xlane.f32.xlu0 %v2190
        %v2192 = vpop.xlane.xlu0 %2191
        %v2193 = vadd.f32 %v2047, %v2048
        %v2194 = vadd.f32 %v2193, %v2049
        %v2195 = vadd.f32 %v2194, %v2050
        %2196 = vadd.xlane.f32.xlu0 %v2195
        %v2197 = vpop.xlane.xlu0 %2196
        %v2198 = vadd.f32 %v2051, %v2052
        %v2199 = vadd.f32 %v2198, %v2053
        %v2200 = vadd.f32 %v2199, %v2054
        %2201 = vadd.xlane.f32.xlu0 %v2200
        %v2202 = vpop.xlane.xlu0 %2201
        %v2203 = vadd.f32 %v2055, %v2056
        %v2204 = vadd.f32 %v2203, %v2057
        %v2205 = vadd.f32 %v2204, %v2058
        %2206 = vadd.xlane.f32.xlu0 %v2205
        %v2207 = vpop.xlane.xlu0 %2206
        %v2208 = vadd.f32 %v2059, %v2060
        %v2209 = vadd.f32 %v2208, %v2061
        %v2210 = vadd.f32 %v2209, %v2062
        %2211 = vadd.xlane.f32.xlu0 %v2210
        %v2212 = vpop.xlane.xlu0 %2211
        %v2213 = vadd.f32 %v2063, %v2064
        %v2214 = vadd.f32 %v2213, %v2065
        %v2215 = vadd.f32 %v2214, %v2066
        %2216 = vadd.xlane.f32.xlu0 %v2215
        %v2217 = vpop.xlane.xlu0 %2216
        %v2218 = vadd.f32 %v2067, %v2068
        %v2219 = vadd.f32 %v2218, %v2069
        %v2220 = vadd.f32 %v2219, %v2070
        %2221 = vadd.xlane.f32.xlu0 %v2220
        %v2222 = vpop.xlane.xlu0 %2221
        %v2223 = vadd.f32 %v2071, %v2072
        %v2224 = vadd.f32 %v2223, %v2073
        %v2225 = vadd.f32 %v2224, %v2074
        %2226 = vadd.xlane.f32.xlu0 %v2225
        %v2227 = vpop.xlane.xlu0 %2226
        %v2228 = vadd.f32 %v2075, %v2076
        %v2229 = vadd.f32 %v2228, %v2077
        %v2230 = vadd.f32 %v2229, %v2078
        %2231 = vadd.xlane.f32.xlu0 %v2230
        %v2232 = vpop.xlane.xlu0 %2231
        %v2233 = vadd.f32 %v2079, %v2080
        %v2234 = vadd.f32 %v2233, %v2081
        %v2235 = vadd.f32 %v2234, %v2082
        %2236 = vadd.xlane.f32.xlu0 %v2235
        %v2237 = vpop.xlane.xlu0 %2236
        %v2238 = vadd.f32 %v2083, %v2084
        %v2239 = vadd.f32 %v2238, %v2085
        %v2240 = vadd.f32 %v2239, %v2086
        %2241 = vadd.xlane.f32.xlu0 %v2240
        %v2242 = vpop.xlane.xlu0 %2241
        %v2243 = vadd.f32 %v2087, %v2088
        %v2244 = vadd.f32 %v2243, %v2089
        %v2245 = vadd.f32 %v2244, %v2090
        %2246 = vadd.xlane.f32.xlu0 %v2245
        %v2247 = vpop.xlane.xlu0 %2246
        %v2248 = vadd.f32 %v2091, %v2092
        %v2249 = vadd.f32 %v2248, %v2093
        %v2250 = vadd.f32 %v2249, %v2094
        %2251 = vadd.xlane.f32.xlu0 %v2250
        %v2252 = vpop.xlane.xlu0 %2251
        %v2253 = vadd.f32 %v2095, %v2096
        %v2254 = vadd.f32 %v2253, %v2097
        %v2255 = vadd.f32 %v2254, %v2098
        %2256 = vadd.xlane.f32.xlu0 %v2255
        %v2257 = vpop.xlane.xlu0 %2256
        %v2258 = vadd.f32 %v2099, %v2100
        %v2259 = vadd.f32 %v2258, %v2101
        %v2260 = vadd.f32 %v2259, %v2102
        %2261 = vadd.xlane.f32.xlu0 %v2260
        %v2262 = vpop.xlane.xlu0 %2261
        %v2263 = vadd.f32 %v2167, %v2187
        %v2264 = vadd.f32 %v2168, %v2192
        %v2265 = vadd.f32 %v2169, %v2197
        %v2266 = vadd.f32 %v2170, %v2202
        %v2267 = vadd.f32 %v2171, %v2207
        %v2268 = vadd.f32 %v2172, %v2212
        %v2269 = vadd.f32 %v2173, %v2217
        %v2270 = vadd.f32 %v2174, %v2222
        %v2271 = vadd.f32 %v2175, %v2227
        %v2272 = vadd.f32 %v2176, %v2232
        %v2273 = vadd.f32 %v2177, %v2237
        %v2274 = vadd.f32 %v2178, %v2242
        %v2275 = vadd.f32 %v2179, %v2247
        %v2276 = vadd.f32 %v2180, %v2252
        %v2277 = vadd.f32 %v2181, %v2257
        %v2278 = vadd.f32 %v2182, %v2262
        %vm2279 = vcmask 7168
        %2280 = vst.msk [vmem:[#allocation5] sm:$0xff] %vm2279, %v2263
        %2281 = vst.msk [vmem:[#allocation5 + $0x8] sm:$0xff] %vm2279, %v2264
        %2282 = vst.msk [vmem:[#allocation5 + $0x10] sm:$0xff] %vm2279, %v2265
        %2283 = vst.msk [vmem:[#allocation5 + $0x18] sm:$0xff] %vm2279, %v2266
        %2284 = vst.msk [vmem:[#allocation5 + $0x20] sm:$0xff] %vm2279, %v2267
        %2285 = vst.msk [vmem:[#allocation5 + $0x28] sm:$0xff] %vm2279, %v2268
        %2286 = vst.msk [vmem:[#allocation5 + $0x30] sm:$0xff] %vm2279, %v2269
        %2287 = vst.msk [vmem:[#allocation5 + $0x38] sm:$0xff] %vm2279, %v2270
        %2288 = vst.msk [vmem:[#allocation5 + $0x40] sm:$0xff] %vm2279, %v2271
        %2289 = vst.msk [vmem:[#allocation5 + $0x48] sm:$0xff] %vm2279, %v2272
        %2290 = vst.msk [vmem:[#allocation5 + $0x50] sm:$0xff] %vm2279, %v2273
        %2291 = vst.msk [vmem:[#allocation5 + $0x58] sm:$0xff] %vm2279, %v2274
        %2292 = vst.msk [vmem:[#allocation5 + $0x60] sm:$0xff] %vm2279, %v2275
        %2293 = vst.msk [vmem:[#allocation5 + $0x68] sm:$0xff] %vm2279, %v2276
        %2294 = vst.msk [vmem:[#allocation5 + $0x70] sm:$0xff] %vm2279, %v2277
        %2295 = vst.msk [vmem:[#allocation5 + $0x78] sm:$0xff] %vm2279, %v2278
        %2296 = vst.msk [vmem:[#allocation4] sm:$0xff] %vm2279, %v1751
        %2297 = vst.msk [vmem:[#allocation4 + $0x8] sm:$0xff] %vm2279, %v1752
        %2298 = vst.msk [vmem:[#allocation4 + $0x10] sm:$0xff] %vm2279, %v1753
        %2299 = vst.msk [vmem:[#allocation4 + $0x18] sm:$0xff] %vm2279, %v1754
        %2300 = vst.msk [vmem:[#allocation4 + $0x20] sm:$0xff] %vm2279, %v1755
        %2301 = vst.msk [vmem:[#allocation4 + $0x28] sm:$0xff] %vm2279, %v1756
        %2302 = vst.msk [vmem:[#allocation4 + $0x30] sm:$0xff] %vm2279, %v1757
        %2303 = vst.msk [vmem:[#allocation4 + $0x38] sm:$0xff] %vm2279, %v1758
        %2304 = vst.msk [vmem:[#allocation4 + $0x40] sm:$0xff] %vm2279, %v1759
        %2305 = vst.msk [vmem:[#allocation4 + $0x48] sm:$0xff] %vm2279, %v1760
        %2306 = vst.msk [vmem:[#allocation4 + $0x50] sm:$0xff] %vm2279, %v1761
        %2307 = vst.msk [vmem:[#allocation4 + $0x58] sm:$0xff] %vm2279, %v1762
        %2308 = vst.msk [vmem:[#allocation4 + $0x60] sm:$0xff] %vm2279, %v1763
        %2309 = vst.msk [vmem:[#allocation4 + $0x68] sm:$0xff] %vm2279, %v1764
        %2310 = vst.msk [vmem:[#allocation4 + $0x70] sm:$0xff] %vm2279, %v1765
        %2311 = vst.msk [vmem:[#allocation4 + $0x78] sm:$0xff] %vm2279, %v1766
        %2312 = vst [vmem:[%s465] sm:$0xff] %v1290
        %2313 = vst [vmem:[%s465 + $0x8] sm:$0xff] %v1291
        %2314 = vst [vmem:[%s465 + $0x10] sm:$0xff] %v1292
        %2315 = vst [vmem:[%s465 + $0x18] sm:$0xff] %v1293
        %2316 = vst [vmem:[%s465 + $0x20] sm:$0xff] %v1294
        %2317 = vst [vmem:[%s465 + $0x28] sm:$0xff] %v1295
        %2318 = vst [vmem:[%s465 + $0x30] sm:$0xff] %v1296
        %2319 = vst [vmem:[%s465 + $0x38] sm:$0xff] %v1297
        %2320 = vst [vmem:[%s465 + $0x40] sm:$0xff] %v1298
        %2321 = vst [vmem:[%s465 + $0x48] sm:$0xff] %v1299
        %2322 = vst [vmem:[%s465 + $0x50] sm:$0xff] %v1300
        %2323 = vst [vmem:[%s465 + $0x58] sm:$0xff] %v1301
        %2324 = vst [vmem:[%s465 + $0x60] sm:$0xff] %v1302
        %2325 = vst [vmem:[%s465 + $0x68] sm:$0xff] %v1303
        %2326 = vst [vmem:[%s465 + $0x70] sm:$0xff] %v1304
        %2327 = vst [vmem:[%s465 + $0x78] sm:$0xff] %v1305
        %2328 = vst [vmem:[%s465 + $0x80] sm:$0xff] %v1306
        %2329 = vst [vmem:[%s465 + $0x88] sm:$0xff] %v1307
        %2330 = vst [vmem:[%s465 + $0x90] sm:$0xff] %v1308
        %2331 = vst [vmem:[%s465 + $0x98] sm:$0xff] %v1309
        %2332 = vst [vmem:[%s465 + $0xa0] sm:$0xff] %v1310
        %2333 = vst [vmem:[%s465 + $0xa8] sm:$0xff] %v1311
        %2334 = vst [vmem:[%s465 + $0xb0] sm:$0xff] %v1312
        %2335 = vst [vmem:[%s465 + $0xb8] sm:$0xff] %v1313
        %2336 = vst [vmem:[%s465 + $0xc0] sm:$0xff] %v1314
        %2337 = vst [vmem:[%s465 + $0xc8] sm:$0xff] %v1315
        %2338 = vst [vmem:[%s465 + $0xd0] sm:$0xff] %v1316
        %2339 = vst [vmem:[%s465 + $0xd8] sm:$0xff] %v1317
        %2340 = vst [vmem:[%s465 + $0xe0] sm:$0xff] %v1318
        %2341 = vst [vmem:[%s465 + $0xe8] sm:$0xff] %v1319
        %2342 = vst [vmem:[%s465 + $0xf0] sm:$0xff] %v1320
        %2343 = vst [vmem:[%s465 + $0xf8] sm:$0xff] %v1321
        %2344 = vst [vmem:[%s465 + $0x100] sm:$0xff] %v1322
        %2345 = vst [vmem:[%s465 + $0x108] sm:$0xff] %v1323
        %2346 = vst [vmem:[%s465 + $0x110] sm:$0xff] %v1324
        %2347 = vst [vmem:[%s465 + $0x118] sm:$0xff] %v1325
        %2348 = vst [vmem:[%s465 + $0x120] sm:$0xff] %v1326
        %2349 = vst [vmem:[%s465 + $0x128] sm:$0xff] %v1327
        %2350 = vst [vmem:[%s465 + $0x130] sm:$0xff] %v1328
        %2351 = vst [vmem:[%s465 + $0x138] sm:$0xff] %v1329
        %2352 = vst [vmem:[%s465 + $0x140] sm:$0xff] %v1330
        %2353 = vst [vmem:[%s465 + $0x148] sm:$0xff] %v1331
        %2354 = vst [vmem:[%s465 + $0x150] sm:$0xff] %v1332
        %2355 = vst [vmem:[%s465 + $0x158] sm:$0xff] %v1333
        %2356 = vst [vmem:[%s465 + $0x160] sm:$0xff] %v1334
        %2357 = vst [vmem:[%s465 + $0x168] sm:$0xff] %v1335
        %2358 = vst [vmem:[%s465 + $0x170] sm:$0xff] %v1336
        %2359 = vst [vmem:[%s465 + $0x178] sm:$0xff] %v1337
        %2360 = vst [vmem:[%s465 + $0x180] sm:$0xff] %v1338
        %2361 = vst [vmem:[%s465 + $0x188] sm:$0xff] %v1339
        %2362 = vst [vmem:[%s465 + $0x190] sm:$0xff] %v1340
        %2363 = vst [vmem:[%s465 + $0x198] sm:$0xff] %v1341
        %2364 = vst [vmem:[%s465 + $0x1a0] sm:$0xff] %v1342
        %2365 = vst [vmem:[%s465 + $0x1a8] sm:$0xff] %v1343
        %2366 = vst [vmem:[%s465 + $0x1b0] sm:$0xff] %v1344
        %2367 = vst [vmem:[%s465 + $0x1b8] sm:$0xff] %v1345
        %2368 = vst [vmem:[%s465 + $0x1c0] sm:$0xff] %v1346
        %2369 = vst [vmem:[%s465 + $0x1c8] sm:$0xff] %v1347
        %2370 = vst [vmem:[%s465 + $0x1d0] sm:$0xff] %v1348
        %2371 = vst [vmem:[%s465 + $0x1d8] sm:$0xff] %v1349
        %2372 = vst [vmem:[%s465 + $0x1e0] sm:$0xff] %v1350
        %2373 = vst [vmem:[%s465 + $0x1e8] sm:$0xff] %v1351
        %2374 = vst [vmem:[%s465 + $0x1f0] sm:$0xff] %v1352
        %2375 = vst [vmem:[%s465 + $0x1f8] sm:$0xff] %v1353
        %v2376 = vmax.f32 %v1469, -128.0
        %v2377 = vmax.f32 %v1518, -128.0
        %v2378 = vmax.f32 %v1567, -128.0
        %v2379 = vmax.f32 %v1616, -128.0
        %v2380 = vmax.f32 %v1471, -128.0
        %v2381 = vmax.f32 %v1520, -128.0
        %v2382 = vmax.f32 %v1569, -128.0
        %v2383 = vmax.f32 %v1618, -128.0
        %v2384 = vmax.f32 %v1474, -128.0
        %v2385 = vmax.f32 %v1523, -128.0
        %v2386 = vmax.f32 %v1572, -128.0
        %v2387 = vmax.f32 %v1621, -128.0
        %v2388 = vmax.f32 %v1476, -128.0
        %v2389 = vmax.f32 %v1525, -128.0
        %v2390 = vmax.f32 %v1574, -128.0
        %v2391 = vmax.f32 %v1623, -128.0
        %v2392 = vmax.f32 %v1479, -128.0
        %v2393 = vmax.f32 %v1528, -128.0
        %v2394 = vmax.f32 %v1577, -128.0
        %v2395 = vmax.f32 %v1626, -128.0
        %v2396 = vmax.f32 %v1481, -128.0
        %v2397 = vmax.f32 %v1530, -128.0
        %v2398 = vmax.f32 %v1579, -128.0
        %v2399 = vmax.f32 %v1628, -128.0
        %v2400 = vmax.f32 %v1484, -128.0
        %v2401 = vmax.f32 %v1533, -128.0
        %v2402 = vmax.f32 %v1582, -128.0
        %v2403 = vmax.f32 %v1631, -128.0
        %v2404 = vmax.f32 %v1486, -128.0
        %v2405 = vmax.f32 %v1535, -128.0
        %v2406 = vmax.f32 %v1584, -128.0
        %v2407 = vmax.f32 %v1633, -128.0
        %v2408 = vmax.f32 %v1489, -128.0
        %v2409 = vmax.f32 %v1538, -128.0
        %v2410 = vmax.f32 %v1587, -128.0
        %v2411 = vmax.f32 %v1636, -128.0
        %v2412 = vmax.f32 %v1491, -128.0
        %v2413 = vmax.f32 %v1540, -128.0
        %v2414 = vmax.f32 %v1589, -128.0
        %v2415 = vmax.f32 %v1638, -128.0
        %v2416 = vmax.f32 %v1494, -128.0
        %v2417 = vmax.f32 %v1543, -128.0
        %v2418 = vmax.f32 %v1592, -128.0
        %v2419 = vmax.f32 %v1641, -128.0
        %v2420 = vmax.f32 %v1496, -128.0
        %v2421 = vmax.f32 %v1545, -128.0
        %v2422 = vmax.f32 %v1594, -128.0
        %v2423 = vmax.f32 %v1643, -128.0
        %v2424 = vmax.f32 %v1499, -128.0
        %v2425 = vmax.f32 %v1548, -128.0
        %v2426 = vmax.f32 %v1597, -128.0
        %v2427 = vmax.f32 %v1646, -128.0
        %v2428 = vmax.f32 %v1501, -128.0
        %v2429 = vmax.f32 %v1550, -128.0
        %v2430 = vmax.f32 %v1599, -128.0
        %v2431 = vmax.f32 %v1648, -128.0
        %v2432 = vmax.f32 %v1504, -128.0
        %v2433 = vmax.f32 %v1553, -128.0
        %v2434 = vmax.f32 %v1602, -128.0
        %v2435 = vmax.f32 %v1651, -128.0
        %v2436 = vmax.f32 %v1506, -128.0
        %v2437 = vmax.f32 %v1555, -128.0
        %v2438 = vmax.f32 %v1604, -128.0
        %v2439 = vmax.f32 %v1653, -128.0
        %v2440 = vmin.f32 %v2376, 127.0
        %v2441 = vmin.f32 %v2377, 127.0
        %v2442 = vmin.f32 %v2378, 127.0
        %v2443 = vmin.f32 %v2379, 127.0
        %v2444 = vmin.f32 %v2380, 127.0
        %v2445 = vmin.f32 %v2381, 127.0
        %v2446 = vmin.f32 %v2382, 127.0
        %v2447 = vmin.f32 %v2383, 127.0
        %v2448 = vmin.f32 %v2384, 127.0
        %v2449 = vmin.f32 %v2385, 127.0
        %v2450 = vmin.f32 %v2386, 127.0
        %v2451 = vmin.f32 %v2387, 127.0
        %v2452 = vmin.f32 %v2388, 127.0
        %v2453 = vmin.f32 %v2389, 127.0
        %v2454 = vmin.f32 %v2390, 127.0
        %v2455 = vmin.f32 %v2391, 127.0
        %v2456 = vmin.f32 %v2392, 127.0
        %v2457 = vmin.f32 %v2393, 127.0
        %v2458 = vmin.f32 %v2394, 127.0
        %v2459 = vmin.f32 %v2395, 127.0
        %v2460 = vmin.f32 %v2396, 127.0
        %v2461 = vmin.f32 %v2397, 127.0
        %v2462 = vmin.f32 %v2398, 127.0
        %v2463 = vmin.f32 %v2399, 127.0
        %v2464 = vmin.f32 %v2400, 127.0
        %v2465 = vmin.f32 %v2401, 127.0
        %v2466 = vmin.f32 %v2402, 127.0
        %v2467 = vmin.f32 %v2403, 127.0
        %v2468 = vmin.f32 %v2404, 127.0
        %v2469 = vmin.f32 %v2405, 127.0
        %v2470 = vmin.f32 %v2406, 127.0
        %v2471 = vmin.f32 %v2407, 127.0
        %v2472 = vmin.f32 %v2408, 127.0
        %v2473 = vmin.f32 %v2409, 127.0
        %v2474 = vmin.f32 %v2410, 127.0
        %v2475 = vmin.f32 %v2411, 127.0
        %v2476 = vmin.f32 %v2412, 127.0
        %v2477 = vmin.f32 %v2413, 127.0
        %v2478 = vmin.f32 %v2414, 127.0
        %v2479 = vmin.f32 %v2415, 127.0
        %v2480 = vmin.f32 %v2416, 127.0
        %v2481 = vmin.f32 %v2417, 127.0
        %v2482 = vmin.f32 %v2418, 127.0
        %v2483 = vmin.f32 %v2419, 127.0
        %v2484 = vmin.f32 %v2420, 127.0
        %v2485 = vmin.f32 %v2421, 127.0
        %v2486 = vmin.f32 %v2422, 127.0
        %v2487 = vmin.f32 %v2423, 127.0
        %v2488 = vmin.f32 %v2424, 127.0
        %v2489 = vmin.f32 %v2425, 127.0
        %v2490 = vmin.f32 %v2426, 127.0
        %v2491 = vmin.f32 %v2427, 127.0
        %v2492 = vmin.f32 %v2428, 127.0
        %v2493 = vmin.f32 %v2429, 127.0
        %v2494 = vmin.f32 %v2430, 127.0
        %v2495 = vmin.f32 %v2431, 127.0
        %v2496 = vmin.f32 %v2432, 127.0
        %v2497 = vmin.f32 %v2433, 127.0
        %v2498 = vmin.f32 %v2434, 127.0
        %v2499 = vmin.f32 %v2435, 127.0
        %v2500 = vmin.f32 %v2436, 127.0
        %v2501 = vmin.f32 %v2437, 127.0
        %v2502 = vmin.f32 %v2438, 127.0
        %v2503 = vmin.f32 %v2439, 127.0
        %v2504 = vcvt.f32.s32.to.zero.pseudo %v2440
        %v2505 = vcvt.f32.s32.to.zero.pseudo %v2441
        %v2506 = vcvt.f32.s32.to.zero.pseudo %v2442
        %v2507 = vcvt.f32.s32.to.zero.pseudo %v2443
        %v2508 = vcvt.f32.s32.to.zero.pseudo %v2444
        %v2509 = vcvt.f32.s32.to.zero.pseudo %v2445
        %v2510 = vcvt.f32.s32.to.zero.pseudo %v2446
        %v2511 = vcvt.f32.s32.to.zero.pseudo %v2447
        %v2512 = vcvt.f32.s32.to.zero.pseudo %v2448
        %v2513 = vcvt.f32.s32.to.zero.pseudo %v2449
        %v2514 = vcvt.f32.s32.to.zero.pseudo %v2450
        %v2515 = vcvt.f32.s32.to.zero.pseudo %v2451
        %v2516 = vcvt.f32.s32.to.zero.pseudo %v2452
        %v2517 = vcvt.f32.s32.to.zero.pseudo %v2453
        %v2518 = vcvt.f32.s32.to.zero.pseudo %v2454
        %v2519 = vcvt.f32.s32.to.zero.pseudo %v2455
        %v2520 = vcvt.f32.s32.to.zero.pseudo %v2456
        %v2521 = vcvt.f32.s32.to.zero.pseudo %v2457
        %v2522 = vcvt.f32.s32.to.zero.pseudo %v2458
        %v2523 = vcvt.f32.s32.to.zero.pseudo %v2459
        %v2524 = vcvt.f32.s32.to.zero.pseudo %v2460
        %v2525 = vcvt.f32.s32.to.zero.pseudo %v2461
        %v2526 = vcvt.f32.s32.to.zero.pseudo %v2462
        %v2527 = vcvt.f32.s32.to.zero.pseudo %v2463
        %v2528 = vcvt.f32.s32.to.zero.pseudo %v2464
        %v2529 = vcvt.f32.s32.to.zero.pseudo %v2465
        %v2530 = vcvt.f32.s32.to.zero.pseudo %v2466
        %v2531 = vcvt.f32.s32.to.zero.pseudo %v2467
        %v2532 = vcvt.f32.s32.to.zero.pseudo %v2468
        %v2533 = vcvt.f32.s32.to.zero.pseudo %v2469
        %v2534 = vcvt.f32.s32.to.zero.pseudo %v2470
        %v2535 = vcvt.f32.s32.to.zero.pseudo %v2471
        %v2536 = vcvt.f32.s32.to.zero.pseudo %v2472
        %v2537 = vcvt.f32.s32.to.zero.pseudo %v2473
        %v2538 = vcvt.f32.s32.to.zero.pseudo %v2474
        %v2539 = vcvt.f32.s32.to.zero.pseudo %v2475
        %v2540 = vcvt.f32.s32.to.zero.pseudo %v2476
        %v2541 = vcvt.f32.s32.to.zero.pseudo %v2477
        %v2542 = vcvt.f32.s32.to.zero.pseudo %v2478
        %v2543 = vcvt.f32.s32.to.zero.pseudo %v2479
        %v2544 = vcvt.f32.s32.to.zero.pseudo %v2480
        %v2545 = vcvt.f32.s32.to.zero.pseudo %v2481
        %v2546 = vcvt.f32.s32.to.zero.pseudo %v2482
        %v2547 = vcvt.f32.s32.to.zero.pseudo %v2483
        %v2548 = vcvt.f32.s32.to.zero.pseudo %v2484
        %v2549 = vcvt.f32.s32.to.zero.pseudo %v2485
        %v2550 = vcvt.f32.s32.to.zero.pseudo %v2486
        %v2551 = vcvt.f32.s32.to.zero.pseudo %v2487
        %v2552 = vcvt.f32.s32.to.zero.pseudo %v2488
        %v2553 = vcvt.f32.s32.to.zero.pseudo %v2489
        %v2554 = vcvt.f32.s32.to.zero.pseudo %v2490
        %v2555 = vcvt.f32.s32.to.zero.pseudo %v2491
        %v2556 = vcvt.f32.s32.to.zero.pseudo %v2492
        %v2557 = vcvt.f32.s32.to.zero.pseudo %v2493
        %v2558 = vcvt.f32.s32.to.zero.pseudo %v2494
        %v2559 = vcvt.f32.s32.to.zero.pseudo %v2495
        %v2560 = vcvt.f32.s32.to.zero.pseudo %v2496
        %v2561 = vcvt.f32.s32.to.zero.pseudo %v2497
        %v2562 = vcvt.f32.s32.to.zero.pseudo %v2498
        %v2563 = vcvt.f32.s32.to.zero.pseudo %v2499
        %v2564 = vcvt.f32.s32.to.zero.pseudo %v2500
        %v2565 = vcvt.f32.s32.to.zero.pseudo %v2501
        %v2566 = vcvt.f32.s32.to.zero.pseudo %v2502
        %v2567 = vcvt.f32.s32.to.zero.pseudo %v2503
        %v2568 = vpack.c.b16 %v2505, %v2504
        %v2569 = vpack.c.b16 %v2507, %v2506
        %v2570 = vpack.c.b8 %v2569, %v2568
        %v2571 = vpack.c.b16 %v2509, %v2508
        %v2572 = vpack.c.b16 %v2511, %v2510
        %v2573 = vpack.c.b8 %v2572, %v2571
        %v2574 = vpack.c.b16 %v2513, %v2512
        %v2575 = vpack.c.b16 %v2515, %v2514
        %v2576 = vpack.c.b8 %v2575, %v2574
        %v2577 = vpack.c.b16 %v2517, %v2516
        %v2578 = vpack.c.b16 %v2519, %v2518
        %v2579 = vpack.c.b8 %v2578, %v2577
        %v2580 = vpack.c.b16 %v2521, %v2520
        %v2581 = vpack.c.b16 %v2523, %v2522
        %v2582 = vpack.c.b8 %v2581, %v2580
        %v2583 = vpack.c.b16 %v2525, %v2524
        %v2584 = vpack.c.b16 %v2527, %v2526
        %v2585 = vpack.c.b8 %v2584, %v2583
        %v2586 = vpack.c.b16 %v2529, %v2528
        %v2587 = vpack.c.b16 %v2531, %v2530
        %v2588 = vpack.c.b8 %v2587, %v2586
        %v2589 = vpack.c.b16 %v2533, %v2532
        %v2590 = vpack.c.b16 %v2535, %v2534
        %v2591 = vpack.c.b8 %v2590, %v2589
        %v2592 = vpack.c.b16 %v2537, %v2536
        %v2593 = vpack.c.b16 %v2539, %v2538
        %v2594 = vpack.c.b8 %v2593, %v2592
        %v2595 = vpack.c.b16 %v2541, %v2540
        %v2596 = vpack.c.b16 %v2543, %v2542
        %v2597 = vpack.c.b8 %v2596, %v2595
        %v2598 = vpack.c.b16 %v2545, %v2544
        %v2599 = vpack.c.b16 %v2547, %v2546
        %v2600 = vpack.c.b8 %v2599, %v2598
        %v2601 = vpack.c.b16 %v2549, %v2548
        %v2602 = vpack.c.b16 %v2551, %v2550
        %v2603 = vpack.c.b8 %v2602, %v2601
        %v2604 = vpack.c.b16 %v2553, %v2552
        %v2605 = vpack.c.b16 %v2555, %v2554
        %v2606 = vpack.c.b8 %v2605, %v2604
        %v2607 = vpack.c.b16 %v2557, %v2556
        %v2608 = vpack.c.b16 %v2559, %v2558
        %v2609 = vpack.c.b8 %v2608, %v2607
        %v2610 = vpack.c.b16 %v2561, %v2560
        %v2611 = vpack.c.b16 %v2563, %v2562
        %v2612 = vpack.c.b8 %v2611, %v2610
        %v2613 = vpack.c.b16 %v2565, %v2564
        %v2614 = vpack.c.b16 %v2567, %v2566
        %v2615 = vpack.c.b8 %v2614, %v2613
        %2616 = vst [vmem:[%s471] sm:$0xff] %v2570
        %2617 = vst [vmem:[%s471 + $0x8] sm:$0xff] %v2573
        %2618 = vst [vmem:[%s471 + $0x10] sm:$0xff] %v2576
        %2619 = vst [vmem:[%s471 + $0x18] sm:$0xff] %v2579
        %2620 = vst [vmem:[%s471 + $0x20] sm:$0xff] %v2582
        %2621 = vst [vmem:[%s471 + $0x28] sm:$0xff] %v2585
        %2622 = vst [vmem:[%s471 + $0x30] sm:$0xff] %v2588
        %2623 = vst [vmem:[%s471 + $0x38] sm:$0xff] %v2591
        %2624 = vst [vmem:[%s471 + $0x40] sm:$0xff] %v2594
        %2625 = vst [vmem:[%s471 + $0x48] sm:$0xff] %v2597
        %2626 = vst [vmem:[%s471 + $0x50] sm:$0xff] %v2600
        %2627 = vst [vmem:[%s471 + $0x58] sm:$0xff] %v2603
        %2628 = vst [vmem:[%s471 + $0x60] sm:$0xff] %v2606
        %2629 = vst [vmem:[%s471 + $0x68] sm:$0xff] %v2609
        %2630 = vst [vmem:[%s471 + $0x70] sm:$0xff] %v2612
        %2631 = vst [vmem:[%s471 + $0x78] sm:$0xff] %v2615
        %p2632 = scmp.eq.s32.totalorder %s24, 1
        // Predicated region
        $region91: #{moco_with_mixture_loss.1} parent=77 // pred_check
          %p2633 = pneg %p2632
        $region92: #{moco_with_mixture_loss.1} parent=77 // pred_check_branch
          %2635 = sbr.rel (%p2633) target = $region94
        $region93: #{moco_with_mixture_loss.1} parent=77 // pred_region
          %v2636 = vld [vmem:[#allocation4] sm:$0xff]
          %v2637 = vld [vmem:[#allocation4 + $0x8] sm:$0xff]
          %v2638 = vld [vmem:[#allocation4 + $0x10] sm:$0xff]
          %v2639 = vld [vmem:[#allocation4 + $0x18] sm:$0xff]
          %v2640 = vld [vmem:[#allocation4 + $0x20] sm:$0xff]
          %v2641 = vld [vmem:[#allocation4 + $0x28] sm:$0xff]
          %v2642 = vld [vmem:[#allocation4 + $0x30] sm:$0xff]
          %v2643 = vld [vmem:[#allocation4 + $0x38] sm:$0xff]
          %v2644 = vld [vmem:[#allocation4 + $0x40] sm:$0xff]
          %v2645 = vld [vmem:[#allocation4 + $0x48] sm:$0xff]
          %v2646 = vld [vmem:[#allocation4 + $0x50] sm:$0xff]
          %v2647 = vld [vmem:[#allocation4 + $0x58] sm:$0xff]
          %v2648 = vld [vmem:[#allocation4 + $0x60] sm:$0xff]
          %v2649 = vld [vmem:[#allocation4 + $0x68] sm:$0xff]
          %v2650 = vld [vmem:[#allocation4 + $0x70] sm:$0xff]
          %v2651 = vld [vmem:[#allocation4 + $0x78] sm:$0xff]
          %v2652 = vld [vmem:[#allocation5] sm:$0xff]
          %v2653 = vld [vmem:[#allocation5 + $0x8] sm:$0xff]
          %v2654 = vld [vmem:[#allocation5 + $0x10] sm:$0xff]
          %v2655 = vld [vmem:[#allocation5 + $0x18] sm:$0xff]
          %v2656 = vld [vmem:[#allocation5 + $0x20] sm:$0xff]
          %v2657 = vld [vmem:[#allocation5 + $0x28] sm:$0xff]
          %v2658 = vld [vmem:[#allocation5 + $0x30] sm:$0xff]
          %v2659 = vld [vmem:[#allocation5 + $0x38] sm:$0xff]
          %v2660 = vld [vmem:[#allocation5 + $0x40] sm:$0xff]
          %v2661 = vld [vmem:[#allocation5 + $0x48] sm:$0xff]
          %v2662 = vld [vmem:[#allocation5 + $0x50] sm:$0xff]
          %v2663 = vld [vmem:[#allocation5 + $0x58] sm:$0xff]
          %v2664 = vld [vmem:[#allocation5 + $0x60] sm:$0xff]
          %v2665 = vld [vmem:[#allocation5 + $0x68] sm:$0xff]
          %v2666 = vld [vmem:[#allocation5 + $0x70] sm:$0xff]
          %v2667 = vld [vmem:[#allocation5 + $0x78] sm:$0xff]
          %v2668 = vlog2.pop %v2652
          %v2669 = vmul.f32 %v2668, 0.6931472
          %v2670 = vlog2.pop %v2653
          %v2671 = vmul.f32 %v2670, 0.6931472
          %v2672 = vlog2.pop %v2654
          %v2673 = vmul.f32 %v2672, 0.6931472
          %v2674 = vlog2.pop %v2655
          %v2675 = vmul.f32 %v2674, 0.6931472
          %v2676 = vlog2.pop %v2656
          %v2677 = vmul.f32 %v2676, 0.6931472
          %v2678 = vlog2.pop %v2657
          %v2679 = vmul.f32 %v2678, 0.6931472
          %v2680 = vlog2.pop %v2658
          %v2681 = vmul.f32 %v2680, 0.6931472
          %v2682 = vlog2.pop %v2659
          %v2683 = vmul.f32 %v2682, 0.6931472
          %v2684 = vlog2.pop %v2660
          %v2685 = vmul.f32 %v2684, 0.6931472
          %v2686 = vlog2.pop %v2661
          %v2687 = vmul.f32 %v2686, 0.6931472
          %v2688 = vlog2.pop %v2662
          %v2689 = vmul.f32 %v2688, 0.6931472
          %v2690 = vlog2.pop %v2663
          %v2691 = vmul.f32 %v2690, 0.6931472
          %v2692 = vlog2.pop %v2664
          %v2693 = vmul.f32 %v2692, 0.6931472
          %v2694 = vlog2.pop %v2665
          %v2695 = vmul.f32 %v2694, 0.6931472
          %v2696 = vlog2.pop %v2666
          %v2697 = vmul.f32 %v2696, 0.6931472
          %v2698 = vlog2.pop %v2667
          %v2699 = vmul.f32 %v2698, 0.6931472
          %v2700 = vadd.f32 %v2636, %v2669
          %v2701 = vadd.f32 %v2637, %v2671
          %v2702 = vadd.f32 %v2638, %v2673
          %v2703 = vadd.f32 %v2639, %v2675
          %v2704 = vadd.f32 %v2640, %v2677
          %v2705 = vadd.f32 %v2641, %v2679
          %v2706 = vadd.f32 %v2642, %v2681
          %v2707 = vadd.f32 %v2643, %v2683
          %v2708 = vadd.f32 %v2644, %v2685
          %v2709 = vadd.f32 %v2645, %v2687
          %v2710 = vadd.f32 %v2646, %v2689
          %v2711 = vadd.f32 %v2647, %v2691
          %v2712 = vadd.f32 %v2648, %v2693
          %v2713 = vadd.f32 %v2649, %v2695
          %v2714 = vadd.f32 %v2650, %v2697
          %v2715 = vadd.f32 %v2651, %v2699
          %v2716 = vld [vmem:[#allocation3] sm:$0xff]
          %v2717 = vld [vmem:[#allocation3 + $0x8] sm:$0xff]
          %v2718 = vld [vmem:[#allocation3 + $0x10] sm:$0xff]
          %v2719 = vld [vmem:[#allocation3 + $0x18] sm:$0xff]
          %v2720 = vld [vmem:[#allocation3 + $0x20] sm:$0xff]
          %v2721 = vld [vmem:[#allocation3 + $0x28] sm:$0xff]
          %v2722 = vld [vmem:[#allocation3 + $0x30] sm:$0xff]
          %v2723 = vld [vmem:[#allocation3 + $0x38] sm:$0xff]
          %v2724 = vld [vmem:[#allocation3 + $0x40] sm:$0xff]
          %v2725 = vld [vmem:[#allocation3 + $0x48] sm:$0xff]
          %v2726 = vld [vmem:[#allocation3 + $0x50] sm:$0xff]
          %v2727 = vld [vmem:[#allocation3 + $0x58] sm:$0xff]
          %v2728 = vld [vmem:[#allocation3 + $0x60] sm:$0xff]
          %v2729 = vld [vmem:[#allocation3 + $0x68] sm:$0xff]
          %v2730 = vld [vmem:[#allocation3 + $0x70] sm:$0xff]
          %v2731 = vld [vmem:[#allocation3 + $0x78] sm:$0xff]
          %v2732 = vsub.f32 %v2700, %v2716
          %v2733 = vsub.f32 %v2701, %v2717
          %v2734 = vsub.f32 %v2702, %v2718
          %v2735 = vsub.f32 %v2703, %v2719
          %v2736 = vsub.f32 %v2704, %v2720
          %v2737 = vsub.f32 %v2705, %v2721
          %v2738 = vsub.f32 %v2706, %v2722
          %v2739 = vsub.f32 %v2707, %v2723
          %v2740 = vsub.f32 %v2708, %v2724
          %v2741 = vsub.f32 %v2709, %v2725
          %v2742 = vsub.f32 %v2710, %v2726
          %v2743 = vsub.f32 %v2711, %v2727
          %v2744 = vsub.f32 %v2712, %v2728
          %v2745 = vsub.f32 %v2713, %v2729
          %v2746 = vsub.f32 %v2714, %v2730
          %v2747 = vsub.f32 %v2715, %v2731
          %v2748 = vlaneseq
          %v2749 = vand.u32 %v2748, 127
          %vm2750 = vcmp.eq.s32.totalorder %v2749, 0
          %vm2751 = vcmp.eq.s32.totalorder %v2749, 1
          %2753 = vset.pattern.permute.xlu0 0
          %2754 = vperm.xlu0 %2753, %v2732
          %v2755 = vpop.permute.xlu0 %2754
          %2758 = vset.pattern.permute.xlu0 0
          %2759 = vperm.xlu0 %2758, %v2733
          %v2760 = vpop.permute.xlu0 %2759
          %2763 = vset.pattern.permute.xlu0 0
          %2764 = vperm.xlu0 %2763, %v2734
          %v2765 = vpop.permute.xlu0 %2764
          %2768 = vset.pattern.permute.xlu0 0
          %2769 = vperm.xlu0 %2768, %v2735
          %v2770 = vpop.permute.xlu0 %2769
          %2773 = vset.pattern.permute.xlu0 0
          %2774 = vperm.xlu0 %2773, %v2736
          %v2775 = vpop.permute.xlu0 %2774
          %2778 = vset.pattern.permute.xlu0 0
          %2779 = vperm.xlu0 %2778, %v2737
          %v2780 = vpop.permute.xlu0 %2779
          %2783 = vset.pattern.permute.xlu0 0
          %2784 = vperm.xlu0 %2783, %v2738
          %v2785 = vpop.permute.xlu0 %2784
          %2788 = vset.pattern.permute.xlu0 0
          %2789 = vperm.xlu0 %2788, %v2739
          %v2790 = vpop.permute.xlu0 %2789
          %2793 = vset.pattern.permute.xlu0 0
          %2794 = vperm.xlu0 %2793, %v2740
          %v2795 = vpop.permute.xlu0 %2794
          %2798 = vset.pattern.permute.xlu0 0
          %2799 = vperm.xlu0 %2798, %v2741
          %v2800 = vpop.permute.xlu0 %2799
          %2803 = vset.pattern.permute.xlu0 0
          %2804 = vperm.xlu0 %2803, %v2742
          %v2805 = vpop.permute.xlu0 %2804
          %2808 = vset.pattern.permute.xlu0 0
          %2809 = vperm.xlu0 %2808, %v2743
          %v2810 = vpop.permute.xlu0 %2809
          %2813 = vset.pattern.permute.xlu0 0
          %2814 = vperm.xlu0 %2813, %v2744
          %v2815 = vpop.permute.xlu0 %2814
          %2818 = vset.pattern.permute.xlu0 0
          %2819 = vperm.xlu0 %2818, %v2745
          %v2820 = vpop.permute.xlu0 %2819
          %2823 = vset.pattern.permute.xlu0 0
          %2824 = vperm.xlu0 %2823, %v2746
          %v2825 = vpop.permute.xlu0 %2824
          %2828 = vset.pattern.permute.xlu0 0
          %2829 = vperm.xlu0 %2828, %v2747
          %v2830 = vpop.permute.xlu0 %2829
          %v2832 = vsel %vm2751, %v2755, 0.0
          %v2833 = vsel %vm2751, %v2760, 0.0
          %v2834 = vsel %vm2751, %v2765, 0.0
          %v2835 = vsel %vm2751, %v2770, 0.0
          %v2836 = vsel %vm2751, %v2775, 0.0
          %v2837 = vsel %vm2751, %v2780, 0.0
          %v2838 = vsel %vm2751, %v2785, 0.0
          %v2839 = vsel %vm2751, %v2790, 0.0
          %v2840 = vsel %vm2751, %v2795, 0.0
          %v2841 = vsel %vm2751, %v2800, 0.0
          %v2842 = vsel %vm2751, %v2805, 0.0
          %v2843 = vsel %vm2751, %v2810, 0.0
          %v2844 = vsel %vm2751, %v2815, 0.0
          %v2845 = vsel %vm2751, %v2820, 0.0
          %v2846 = vsel %vm2751, %v2825, 0.0
          %v2847 = vsel %vm2751, %v2830, 0.0
          %2849 = vset.pattern.permute.xlu0 0
          %2850 = vperm.xlu0 %2849, %v2716
          %v2851 = vpop.permute.xlu0 %2850
          %2854 = vset.pattern.permute.xlu0 0
          %2855 = vperm.xlu0 %2854, %v2717
          %v2856 = vpop.permute.xlu0 %2855
          %2859 = vset.pattern.permute.xlu0 0
          %2860 = vperm.xlu0 %2859, %v2718
          %v2861 = vpop.permute.xlu0 %2860
          %2864 = vset.pattern.permute.xlu0 0
          %2865 = vperm.xlu0 %2864, %v2719
          %v2866 = vpop.permute.xlu0 %2865
          %2869 = vset.pattern.permute.xlu0 0
          %2870 = vperm.xlu0 %2869, %v2720
          %v2871 = vpop.permute.xlu0 %2870
          %2874 = vset.pattern.permute.xlu0 0
          %2875 = vperm.xlu0 %2874, %v2721
          %v2876 = vpop.permute.xlu0 %2875
          %2879 = vset.pattern.permute.xlu0 0
          %2880 = vperm.xlu0 %2879, %v2722
          %v2881 = vpop.permute.xlu0 %2880
          %2884 = vset.pattern.permute.xlu0 0
          %2885 = vperm.xlu0 %2884, %v2723
          %v2886 = vpop.permute.xlu0 %2885
          %2889 = vset.pattern.permute.xlu0 0
          %2890 = vperm.xlu0 %2889, %v2724
          %v2891 = vpop.permute.xlu0 %2890
          %2894 = vset.pattern.permute.xlu0 0
          %2895 = vperm.xlu0 %2894, %v2725
          %v2896 = vpop.permute.xlu0 %2895
          %2899 = vset.pattern.permute.xlu0 0
          %2900 = vperm.xlu0 %2899, %v2726
          %v2901 = vpop.permute.xlu0 %2900
          %2904 = vset.pattern.permute.xlu0 0
          %2905 = vperm.xlu0 %2904, %v2727
          %v2906 = vpop.permute.xlu0 %2905
          %2909 = vset.pattern.permute.xlu0 0
          %2910 = vperm.xlu0 %2909, %v2728
          %v2911 = vpop.permute.xlu0 %2910
          %2914 = vset.pattern.permute.xlu0 0
          %2915 = vperm.xlu0 %2914, %v2729
          %v2916 = vpop.permute.xlu0 %2915
          %2919 = vset.pattern.permute.xlu0 0
          %2920 = vperm.xlu0 %2919, %v2730
          %v2921 = vpop.permute.xlu0 %2920
          %2924 = vset.pattern.permute.xlu0 0
          %2925 = vperm.xlu0 %2924, %v2731
          %v2926 = vpop.permute.xlu0 %2925
          %v2928 = vsel %vm2750, %v2851, %v2832
          %v2929 = vsel %vm2750, %v2856, %v2833
          %v2930 = vsel %vm2750, %v2861, %v2834
          %v2931 = vsel %vm2750, %v2866, %v2835
          %v2932 = vsel %vm2750, %v2871, %v2836
          %v2933 = vsel %vm2750, %v2876, %v2837
          %v2934 = vsel %vm2750, %v2881, %v2838
          %v2935 = vsel %vm2750, %v2886, %v2839
          %v2936 = vsel %vm2750, %v2891, %v2840
          %v2937 = vsel %vm2750, %v2896, %v2841
          %v2938 = vsel %vm2750, %v2901, %v2842
          %v2939 = vsel %vm2750, %v2906, %v2843
          %v2940 = vsel %vm2750, %v2911, %v2844
          %v2941 = vsel %vm2750, %v2916, %v2845
          %v2942 = vsel %vm2750, %v2921, %v2846
          %v2943 = vsel %vm2750, %v2926, %v2847
          %2944 = vst [vmem:[%s507] sm:$0xff] %v2928
          %2945 = vst [vmem:[%s507 + $0x8] sm:$0xff] %v2929
          %2946 = vst [vmem:[%s507 + $0x10] sm:$0xff] %v2930
          %2947 = vst [vmem:[%s507 + $0x18] sm:$0xff] %v2931
          %2948 = vst [vmem:[%s507 + $0x20] sm:$0xff] %v2932
          %2949 = vst [vmem:[%s507 + $0x28] sm:$0xff] %v2933
          %2950 = vst [vmem:[%s507 + $0x30] sm:$0xff] %v2934
          %2951 = vst [vmem:[%s507 + $0x38] sm:$0xff] %v2935
          %2952 = vst [vmem:[%s507 + $0x40] sm:$0xff] %v2936
          %2953 = vst [vmem:[%s507 + $0x48] sm:$0xff] %v2937
          %2954 = vst [vmem:[%s507 + $0x50] sm:$0xff] %v2938
          %2955 = vst [vmem:[%s507 + $0x58] sm:$0xff] %v2939
          %2956 = vst [vmem:[%s507 + $0x60] sm:$0xff] %v2940
          %2957 = vst [vmem:[%s507 + $0x68] sm:$0xff] %v2941
          %2958 = vst [vmem:[%s507 + $0x70] sm:$0xff] %v2942
          %2959 = vst [vmem:[%s507 + $0x78] sm:$0xff] %v2943
        $region94: #{moco_with_mixture_loss.1} parent=77 // pred_fallthru
          _
        %s2960 = sand.u32 %s171, 1
        %s2961 = sand.u32 %s171, 1
        %s2962 = smul.addr %s2961, 512
        %s2963 = scalar_lea.vmem [#allocation8], %s2962
        %s2964 = sand.u32 %s199, 1
        %s2965 = sand.u32 %s199, 1
        %s2966 = smul.addr %s2965, 128
        %s2967 = scalar_lea.vmem [#allocation9], %s2966
        %s2968 = smul.u32 16, %s23
        %p2969 = scmp.lt.s32.totalorder %s2968, 31
        %s2970 = scalar_select %p2969, %s2968, 31
        %s2971 = smul.addr %s2970, 8
        %s2972 = scalar_lea.vmem %s7, %s2971
        // Predicated region
        $region95: #{moco_with_mixture_loss.1} parent=77 // pred_check
          %p2973 = pneg %p181
        $region96: #{moco_with_mixture_loss.1} parent=77 // pred_check_branch
          %2975 = sbr.rel (%p2973) target = $region98
        $region97: #{moco_with_mixture_loss.1} parent=77 // pred_region
          %s2976 = smul.u32 16, %s23
          %s2977 = smul.u32 4, %s24
          %s2978 = smul.addr %s2976, 8
          %s2979 = sadd.s32 %s2977, %s2978
          %s2980 = smul.addr %s2979, 8
          %s2981 = scalar_lea.vmem %s5, %s2980
          // Predicated region
          $region99: #{moco_with_mixture_loss.1} parent=97 // pred_check
            _
          $region100: #{moco_with_mixture_loss.1} parent=97 // pred_check_branch
            %2983 = sbr.rel (0) target = $region102
          $region101: #{moco_with_mixture_loss.1} parent=97 // pred_region
            // Predicated region
            $region103: #{moco_with_mixture_loss.1} parent=101 // pred_check
              _
            $region104: #{moco_with_mixture_loss.1} parent=101 // pred_check_branch
              %2985 = sbr.rel (0) target = $region106
            $region105: #{moco_with_mixture_loss.1} parent=101 // pred_region
              loop: start=0, step=1, limit=1
              $region107: #{moco_with_mixture_loss.1} parent=105 // loop_pre_header
                _
              $region108: #{moco_with_mixture_loss.1} parent=105 // loop_header
                %s2987 = sphi 0, %s2991
                %p2988 = scmp.ge.s32.totalorder %s2987, 1
                %s2992 = sphi %s2963, %s2963
                %s2993 = sphi %s2981, %s2981
              $region109: #{moco_with_mixture_loss.1} parent=105 // loop_header_branch
                %2990 = sbr.rel (%p2988) target = $region113
              $region110: #{moco_with_mixture_loss.1} parent=105 // loop_body
                %v2994 = vld [vmem:[%s2992] sm:$0xff]
                %2995 = vst [vmem:[%s2993] sm:$0xff] %v2994
                %v2996 = vld [vmem:[%s2992 + $0x8] sm:$0xff]
                %2997 = vst [vmem:[%s2993 + $0x8] sm:$0xff] %v2996
                %v2998 = vld [vmem:[%s2992 + $0x10] sm:$0xff]
                %2999 = vst [vmem:[%s2993 + $0x10] sm:$0xff] %v2998
                %v3000 = vld [vmem:[%s2992 + $0x18] sm:$0xff]
                %3001 = vst [vmem:[%s2993 + $0x18] sm:$0xff] %v3000
                %v3002 = vld [vmem:[%s2992 + $0x20] sm:$0xff]
                %3003 = vst [vmem:[%s2993 + $0x40] sm:$0xff] %v3002
                %v3004 = vld [vmem:[%s2992 + $0x28] sm:$0xff]
                %3005 = vst [vmem:[%s2993 + $0x48] sm:$0xff] %v3004
                %v3006 = vld [vmem:[%s2992 + $0x30] sm:$0xff]
                %3007 = vst [vmem:[%s2993 + $0x50] sm:$0xff] %v3006
                %v3008 = vld [vmem:[%s2992 + $0x38] sm:$0xff]
                %3009 = vst [vmem:[%s2993 + $0x58] sm:$0xff] %v3008
                %v3010 = vld [vmem:[%s2992 + $0x40] sm:$0xff]
                %3011 = vst [vmem:[%s2993 + $0x80] sm:$0xff] %v3010
                %v3012 = vld [vmem:[%s2992 + $0x48] sm:$0xff]
                %3013 = vst [vmem:[%s2993 + $0x88] sm:$0xff] %v3012
                %v3014 = vld [vmem:[%s2992 + $0x50] sm:$0xff]
                %3015 = vst [vmem:[%s2993 + $0x90] sm:$0xff] %v3014
                %v3016 = vld [vmem:[%s2992 + $0x58] sm:$0xff]
                %3017 = vst [vmem:[%s2993 + $0x98] sm:$0xff] %v3016
                %v3018 = vld [vmem:[%s2992 + $0x60] sm:$0xff]
                %3019 = vst [vmem:[%s2993 + $0xc0] sm:$0xff] %v3018
                %v3020 = vld [vmem:[%s2992 + $0x68] sm:$0xff]
                %3021 = vst [vmem:[%s2993 + $0xc8] sm:$0xff] %v3020
                %v3022 = vld [vmem:[%s2992 + $0x70] sm:$0xff]
                %3023 = vst [vmem:[%s2993 + $0xd0] sm:$0xff] %v3022
                %v3024 = vld [vmem:[%s2992 + $0x78] sm:$0xff]
                %3025 = vst [vmem:[%s2993 + $0xd8] sm:$0xff] %v3024
                %v3026 = vld [vmem:[%s2992 + $0x80] sm:$0xff]
                %3027 = vst [vmem:[%s2993 + $0x100] sm:$0xff] %v3026
                %v3028 = vld [vmem:[%s2992 + $0x88] sm:$0xff]
                %3029 = vst [vmem:[%s2993 + $0x108] sm:$0xff] %v3028
                %v3030 = vld [vmem:[%s2992 + $0x90] sm:$0xff]
                %3031 = vst [vmem:[%s2993 + $0x110] sm:$0xff] %v3030
                %v3032 = vld [vmem:[%s2992 + $0x98] sm:$0xff]
                %3033 = vst [vmem:[%s2993 + $0x118] sm:$0xff] %v3032
                %v3034 = vld [vmem:[%s2992 + $0xa0] sm:$0xff]
                %3035 = vst [vmem:[%s2993 + $0x140] sm:$0xff] %v3034
                %v3036 = vld [vmem:[%s2992 + $0xa8] sm:$0xff]
                %3037 = vst [vmem:[%s2993 + $0x148] sm:$0xff] %v3036
                %v3038 = vld [vmem:[%s2992 + $0xb0] sm:$0xff]
                %3039 = vst [vmem:[%s2993 + $0x150] sm:$0xff] %v3038
                %v3040 = vld [vmem:[%s2992 + $0xb8] sm:$0xff]
                %3041 = vst [vmem:[%s2993 + $0x158] sm:$0xff] %v3040
                %v3042 = vld [vmem:[%s2992 + $0xc0] sm:$0xff]
                %3043 = vst [vmem:[%s2993 + $0x180] sm:$0xff] %v3042
                %v3044 = vld [vmem:[%s2992 + $0xc8] sm:$0xff]
                %3045 = vst [vmem:[%s2993 + $0x188] sm:$0xff] %v3044
                %v3046 = vld [vmem:[%s2992 + $0xd0] sm:$0xff]
                %3047 = vst [vmem:[%s2993 + $0x190] sm:$0xff] %v3046
                %v3048 = vld [vmem:[%s2992 + $0xd8] sm:$0xff]
                %3049 = vst [vmem:[%s2993 + $0x198] sm:$0xff] %v3048
                %v3050 = vld [vmem:[%s2992 + $0xe0] sm:$0xff]
                %3051 = vst [vmem:[%s2993 + $0x1c0] sm:$0xff] %v3050
                %v3052 = vld [vmem:[%s2992 + $0xe8] sm:$0xff]
                %3053 = vst [vmem:[%s2993 + $0x1c8] sm:$0xff] %v3052
                %v3054 = vld [vmem:[%s2992 + $0xf0] sm:$0xff]
                %3055 = vst [vmem:[%s2993 + $0x1d0] sm:$0xff] %v3054
                %v3056 = vld [vmem:[%s2992 + $0xf8] sm:$0xff]
                %3057 = vst [vmem:[%s2993 + $0x1d8] sm:$0xff] %v3056
                %v3058 = vld [vmem:[%s2992 + $0x100] sm:$0xff]
                %3059 = vst [vmem:[%s2993 + $0x200] sm:$0xff] %v3058
                %v3060 = vld [vmem:[%s2992 + $0x108] sm:$0xff]
                %3061 = vst [vmem:[%s2993 + $0x208] sm:$0xff] %v3060
                %v3062 = vld [vmem:[%s2992 + $0x110] sm:$0xff]
                %3063 = vst [vmem:[%s2993 + $0x210] sm:$0xff] %v3062
                %v3064 = vld [vmem:[%s2992 + $0x118] sm:$0xff]
                %3065 = vst [vmem:[%s2993 + $0x218] sm:$0xff] %v3064
                %v3066 = vld [vmem:[%s2992 + $0x120] sm:$0xff]
                %3067 = vst [vmem:[%s2993 + $0x240] sm:$0xff] %v3066
                %v3068 = vld [vmem:[%s2992 + $0x128] sm:$0xff]
                %3069 = vst [vmem:[%s2993 + $0x248] sm:$0xff] %v3068
                %v3070 = vld [vmem:[%s2992 + $0x130] sm:$0xff]
                %3071 = vst [vmem:[%s2993 + $0x250] sm:$0xff] %v3070
                %v3072 = vld [vmem:[%s2992 + $0x138] sm:$0xff]
                %3073 = vst [vmem:[%s2993 + $0x258] sm:$0xff] %v3072
                %v3074 = vld [vmem:[%s2992 + $0x140] sm:$0xff]
                %3075 = vst [vmem:[%s2993 + $0x280] sm:$0xff] %v3074
                %v3076 = vld [vmem:[%s2992 + $0x148] sm:$0xff]
                %3077 = vst [vmem:[%s2993 + $0x288] sm:$0xff] %v3076
                %v3078 = vld [vmem:[%s2992 + $0x150] sm:$0xff]
                %3079 = vst [vmem:[%s2993 + $0x290] sm:$0xff] %v3078
                %v3080 = vld [vmem:[%s2992 + $0x158] sm:$0xff]
                %3081 = vst [vmem:[%s2993 + $0x298] sm:$0xff] %v3080
                %v3082 = vld [vmem:[%s2992 + $0x160] sm:$0xff]
                %3083 = vst [vmem:[%s2993 + $0x2c0] sm:$0xff] %v3082
                %v3084 = vld [vmem:[%s2992 + $0x168] sm:$0xff]
                %3085 = vst [vmem:[%s2993 + $0x2c8] sm:$0xff] %v3084
                %v3086 = vld [vmem:[%s2992 + $0x170] sm:$0xff]
                %3087 = vst [vmem:[%s2993 + $0x2d0] sm:$0xff] %v3086
                %v3088 = vld [vmem:[%s2992 + $0x178] sm:$0xff]
                %3089 = vst [vmem:[%s2993 + $0x2d8] sm:$0xff] %v3088
                %v3090 = vld [vmem:[%s2992 + $0x180] sm:$0xff]
                %3091 = vst [vmem:[%s2993 + $0x300] sm:$0xff] %v3090
                %v3092 = vld [vmem:[%s2992 + $0x188] sm:$0xff]
                %3093 = vst [vmem:[%s2993 + $0x308] sm:$0xff] %v3092
                %v3094 = vld [vmem:[%s2992 + $0x190] sm:$0xff]
                %3095 = vst [vmem:[%s2993 + $0x310] sm:$0xff] %v3094
                %v3096 = vld [vmem:[%s2992 + $0x198] sm:$0xff]
                %3097 = vst [vmem:[%s2993 + $0x318] sm:$0xff] %v3096
                %v3098 = vld [vmem:[%s2992 + $0x1a0] sm:$0xff]
                %3099 = vst [vmem:[%s2993 + $0x340] sm:$0xff] %v3098
                %v3100 = vld [vmem:[%s2992 + $0x1a8] sm:$0xff]
                %3101 = vst [vmem:[%s2993 + $0x348] sm:$0xff] %v3100
                %v3102 = vld [vmem:[%s2992 + $0x1b0] sm:$0xff]
                %3103 = vst [vmem:[%s2993 + $0x350] sm:$0xff] %v3102
                %v3104 = vld [vmem:[%s2992 + $0x1b8] sm:$0xff]
                %3105 = vst [vmem:[%s2993 + $0x358] sm:$0xff] %v3104
                %v3106 = vld [vmem:[%s2992 + $0x1c0] sm:$0xff]
                %3107 = vst [vmem:[%s2993 + $0x380] sm:$0xff] %v3106
                %v3108 = vld [vmem:[%s2992 + $0x1c8] sm:$0xff]
                %3109 = vst [vmem:[%s2993 + $0x388] sm:$0xff] %v3108
                %v3110 = vld [vmem:[%s2992 + $0x1d0] sm:$0xff]
                %3111 = vst [vmem:[%s2993 + $0x390] sm:$0xff] %v3110
                %v3112 = vld [vmem:[%s2992 + $0x1d8] sm:$0xff]
                %3113 = vst [vmem:[%s2993 + $0x398] sm:$0xff] %v3112
                %v3114 = vld [vmem:[%s2992 + $0x1e0] sm:$0xff]
                %3115 = vst [vmem:[%s2993 + $0x3c0] sm:$0xff] %v3114
                %v3116 = vld [vmem:[%s2992 + $0x1e8] sm:$0xff]
                %3117 = vst [vmem:[%s2993 + $0x3c8] sm:$0xff] %v3116
                %v3118 = vld [vmem:[%s2992 + $0x1f0] sm:$0xff]
                %3119 = vst [vmem:[%s2993 + $0x3d0] sm:$0xff] %v3118
                %v3120 = vld [vmem:[%s2992 + $0x1f8] sm:$0xff]
                %3121 = vst [vmem:[%s2993 + $0x3d8] sm:$0xff] %v3120
              $region111: #{moco_with_mixture_loss.1} parent=105 // loop_footer
                %s2991 = sadd.s32 1, %s2987
              $region112: #{moco_with_mixture_loss.1} parent=105 // loop_footer_branch
                %2986 = sbr.rel target = $region108
              $region113: #{moco_with_mixture_loss.1} parent=105 // loop_exit
                _
            $region106: #{moco_with_mixture_loss.1} parent=101 // pred_fallthru
              _
            // Predicated region
            $region114: #{moco_with_mixture_loss.1} parent=101 // pred_check
              _
            $region115: #{moco_with_mixture_loss.1} parent=101 // pred_check_branch
              %3123 = sbr.rel target = $region117
            $region116: #{moco_with_mixture_loss.1} parent=101 // pred_region
              _
            $region117: #{moco_with_mixture_loss.1} parent=101 // pred_fallthru
              _
          $region102: #{moco_with_mixture_loss.1} parent=97 // pred_fallthru
            _
          %3124 = vnop
        $region98: #{moco_with_mixture_loss.1} parent=77 // pred_fallthru
          _
        // Predicated region
        $region118: #{moco_with_mixture_loss.1} parent=77 // pred_check
          %p3125 = pneg %p209
        $region119: #{moco_with_mixture_loss.1} parent=77 // pred_check_branch
          %3127 = sbr.rel (%p3125) target = $region121
        $region120: #{moco_with_mixture_loss.1} parent=77 // pred_region
          %s3128 = smul.u32 16, %s23
          %s3129 = smul.u32 4, %s24
          %s3130 = smul.addr %s3128, 8
          %s3131 = sadd.s32 %s3129, %s3130
          %s3132 = smul.addr %s3131, 2
          %s3133 = scalar_lea.vmem %s6, %s3132
          // Predicated region
          $region122: #{moco_with_mixture_loss.1} parent=120 // pred_check
            _
          $region123: #{moco_with_mixture_loss.1} parent=120 // pred_check_branch
            %3135 = sbr.rel (0) target = $region125
          $region124: #{moco_with_mixture_loss.1} parent=120 // pred_region
            // Predicated region
            $region126: #{moco_with_mixture_loss.1} parent=124 // pred_check
              _
            $region127: #{moco_with_mixture_loss.1} parent=124 // pred_check_branch
              %3137 = sbr.rel (0) target = $region129
            $region128: #{moco_with_mixture_loss.1} parent=124 // pred_region
              // Predicated region
              $region141: #{moco_with_mixture_loss.1} parent=128 // pred_check
                _
              $region142: #{moco_with_mixture_loss.1} parent=128 // pred_check_branch
                %3183 = sbr.rel (0) target = $region144
              $region143: #{moco_with_mixture_loss.1} parent=128 // pred_region
                loop: start=0, step=1, limit=1
                $region145: #{moco_with_mixture_loss.1} parent=143 // loop_pre_header
                  _
                $region146: #{moco_with_mixture_loss.1} parent=143 // loop_header
                  %s3185 = sphi 0, %s3189
                  %p3186 = scmp.ge.s32.totalorder %s3185, 1
                  %s3190 = sphi %s2967, %s2967
                  %s3191 = sphi %s3133, %s3133
                $region147: #{moco_with_mixture_loss.1} parent=143 // loop_header_branch
                  %3188 = sbr.rel (%p3186) target = $region151
                $region148: #{moco_with_mixture_loss.1} parent=143 // loop_body
                  %v3192 = vld [vmem:[%s3190] sm:$0xff]
                  %3193 = vst [vmem:[%s3191] sm:$0xff] %v3192
                  %v3194 = vld [vmem:[%s3190 + $0x8] sm:$0xff]
                  %3195 = vst [vmem:[%s3191 + $0x10] sm:$0xff] %v3194
                  %v3196 = vld [vmem:[%s3190 + $0x10] sm:$0xff]
                  %3197 = vst [vmem:[%s3191 + $0x20] sm:$0xff] %v3196
                  %v3198 = vld [vmem:[%s3190 + $0x18] sm:$0xff]
                  %3199 = vst [vmem:[%s3191 + $0x30] sm:$0xff] %v3198
                  %v3200 = vld [vmem:[%s3190 + $0x20] sm:$0xff]
                  %3201 = vst [vmem:[%s3191 + $0x40] sm:$0xff] %v3200
                  %v3202 = vld [vmem:[%s3190 + $0x28] sm:$0xff]
                  %3203 = vst [vmem:[%s3191 + $0x50] sm:$0xff] %v3202
                  %v3204 = vld [vmem:[%s3190 + $0x30] sm:$0xff]
                  %3205 = vst [vmem:[%s3191 + $0x60] sm:$0xff] %v3204
                  %v3206 = vld [vmem:[%s3190 + $0x38] sm:$0xff]
                  %3207 = vst [vmem:[%s3191 + $0x70] sm:$0xff] %v3206
                  %v3208 = vld [vmem:[%s3190 + $0x40] sm:$0xff]
                  %3209 = vst [vmem:[%s3191 + $0x80] sm:$0xff] %v3208
                  %v3210 = vld [vmem:[%s3190 + $0x48] sm:$0xff]
                  %3211 = vst [vmem:[%s3191 + $0x90] sm:$0xff] %v3210
                  %v3212 = vld [vmem:[%s3190 + $0x50] sm:$0xff]
                  %3213 = vst [vmem:[%s3191 + $0xa0] sm:$0xff] %v3212
                  %v3214 = vld [vmem:[%s3190 + $0x58] sm:$0xff]
                  %3215 = vst [vmem:[%s3191 + $0xb0] sm:$0xff] %v3214
                  %v3216 = vld [vmem:[%s3190 + $0x60] sm:$0xff]
                  %3217 = vst [vmem:[%s3191 + $0xc0] sm:$0xff] %v3216
                  %v3218 = vld [vmem:[%s3190 + $0x68] sm:$0xff]
                  %3219 = vst [vmem:[%s3191 + $0xd0] sm:$0xff] %v3218
                  %v3220 = vld [vmem:[%s3190 + $0x70] sm:$0xff]
                  %3221 = vst [vmem:[%s3191 + $0xe0] sm:$0xff] %v3220
                  %v3222 = vld [vmem:[%s3190 + $0x78] sm:$0xff]
                  %3223 = vst [vmem:[%s3191 + $0xf0] sm:$0xff] %v3222
                $region149: #{moco_with_mixture_loss.1} parent=143 // loop_footer
                  %s3189 = sadd.s32 1, %s3185
                $region150: #{moco_with_mixture_loss.1} parent=143 // loop_footer_branch
                  %3184 = sbr.rel target = $region146
                $region151: #{moco_with_mixture_loss.1} parent=143 // loop_exit
                  _
              $region144: #{moco_with_mixture_loss.1} parent=128 // pred_fallthru
                _
              // Predicated region
              $region152: #{moco_with_mixture_loss.1} parent=128 // pred_check
                _
              $region153: #{moco_with_mixture_loss.1} parent=128 // pred_check_branch
                %3225 = sbr.rel target = $region155
              $region154: #{moco_with_mixture_loss.1} parent=128 // pred_region
                _
              $region155: #{moco_with_mixture_loss.1} parent=128 // pred_fallthru
                _
            $region129: #{moco_with_mixture_loss.1} parent=124 // pred_fallthru
              _
            // Predicated region
            $region130: #{moco_with_mixture_loss.1} parent=124 // pred_check
              _
            $region131: #{moco_with_mixture_loss.1} parent=124 // pred_check_branch
              %3139 = sbr.rel target = $region133
            $region132: #{moco_with_mixture_loss.1} parent=124 // pred_region
              %s3141 = ssub.s32 256, 1
              loop: start=0, step=1, limit=1
              $region134: #{moco_with_mixture_loss.1} parent=132 // loop_pre_header
                _
              $region135: #{moco_with_mixture_loss.1} parent=132 // loop_header
                %s3143 = sphi 0, %s3147
                %p3144 = scmp.ge.s32.totalorder %s3143, 1
                %s3148 = sphi %s2967, %s2967
                %s3149 = sphi %s3133, %s3133
              $region136: #{moco_with_mixture_loss.1} parent=132 // loop_header_branch
                %3146 = sbr.rel (%p3144) target = $region140
              $region137: #{moco_with_mixture_loss.1} parent=132 // loop_body
                %v3150 = vld [vmem:[%s3148] sm:%s3141]
                %3151 = vst [vmem:[%s3149] sm:%s3141] %v3150
                %v3152 = vld [vmem:[%s3148 + $0x8] sm:%s3141]
                %3153 = vst [vmem:[%s3149 + $0x10] sm:%s3141] %v3152
                %v3154 = vld [vmem:[%s3148 + $0x10] sm:%s3141]
                %3155 = vst [vmem:[%s3149 + $0x20] sm:%s3141] %v3154
                %v3156 = vld [vmem:[%s3148 + $0x18] sm:%s3141]
                %3157 = vst [vmem:[%s3149 + $0x30] sm:%s3141] %v3156
                %v3158 = vld [vmem:[%s3148 + $0x20] sm:%s3141]
                %3159 = vst [vmem:[%s3149 + $0x40] sm:%s3141] %v3158
                %v3160 = vld [vmem:[%s3148 + $0x28] sm:%s3141]
                %3161 = vst [vmem:[%s3149 + $0x50] sm:%s3141] %v3160
                %v3162 = vld [vmem:[%s3148 + $0x30] sm:%s3141]
                %3163 = vst [vmem:[%s3149 + $0x60] sm:%s3141] %v3162
                %v3164 = vld [vmem:[%s3148 + $0x38] sm:%s3141]
                %3165 = vst [vmem:[%s3149 + $0x70] sm:%s3141] %v3164
                %v3166 = vld [vmem:[%s3148 + $0x40] sm:%s3141]
                %3167 = vst [vmem:[%s3149 + $0x80] sm:%s3141] %v3166
                %v3168 = vld [vmem:[%s3148 + $0x48] sm:%s3141]
                %3169 = vst [vmem:[%s3149 + $0x90] sm:%s3141] %v3168
                %v3170 = vld [vmem:[%s3148 + $0x50] sm:%s3141]
                %3171 = vst [vmem:[%s3149 + $0xa0] sm:%s3141] %v3170
                %v3172 = vld [vmem:[%s3148 + $0x58] sm:%s3141]
                %3173 = vst [vmem:[%s3149 + $0xb0] sm:%s3141] %v3172
                %v3174 = vld [vmem:[%s3148 + $0x60] sm:%s3141]
                %3175 = vst [vmem:[%s3149 + $0xc0] sm:%s3141] %v3174
                %v3176 = vld [vmem:[%s3148 + $0x68] sm:%s3141]
                %3177 = vst [vmem:[%s3149 + $0xd0] sm:%s3141] %v3176
                %v3178 = vld [vmem:[%s3148 + $0x70] sm:%s3141]
                %3179 = vst [vmem:[%s3149 + $0xe0] sm:%s3141] %v3178
                %v3180 = vld [vmem:[%s3148 + $0x78] sm:%s3141]
                %3181 = vst [vmem:[%s3149 + $0xf0] sm:%s3141] %v3180
              $region138: #{moco_with_mixture_loss.1} parent=132 // loop_footer
                %s3147 = sadd.s32 1, %s3143
              $region139: #{moco_with_mixture_loss.1} parent=132 // loop_footer_branch
                %3142 = sbr.rel target = $region135
              $region140: #{moco_with_mixture_loss.1} parent=132 // loop_exit
                _
            $region133: #{moco_with_mixture_loss.1} parent=124 // pred_fallthru
              _
          $region125: #{moco_with_mixture_loss.1} parent=120 // pred_fallthru
            _
          %3226 = vnop
        $region121: #{moco_with_mixture_loss.1} parent=77 // pred_fallthru
          _
        // Predicated region
        $region156: #{moco_with_mixture_loss.1} parent=77 // pred_check
          %p3227 = pneg %p235
        $region157: #{moco_with_mixture_loss.1} parent=77 // pred_check_branch
          %3229 = sbr.rel (%p3227) target = $region159
        $region158: #{moco_with_mixture_loss.1} parent=77 // pred_region
          %s3230 = smul.u32 16, %s23
        $region159: #{moco_with_mixture_loss.1} parent=77 // pred_fallthru
          _
      $region78: #{moco_with_mixture_loss.1} parent=5 // pred_fallthru
        _
      %p3231 = scmp.le.s32.totalorder 2, %s14
      // Predicated region
      $region160: #{moco_with_mixture_loss.1} parent=5 // pred_check
        %p3232 = pneg %p3231
      $region161: #{moco_with_mixture_loss.1} parent=5 // pred_check_branch
        %3234 = sbr.rel (%p3232) target = $region163
      $region162: #{moco_with_mixture_loss.1} parent=5 // pred_region
        %s3235 = ssub.s32 %s14, 2
        // Predicated region
        $region164: #{moco_with_mixture_loss.1} parent=162 // pred_check
          %p3236 = pneg %p187
        $region165: #{moco_with_mixture_loss.1} parent=162 // pred_check_branch
          %3238 = sbr.rel (%p3236) target = $region167
        $region166: #{moco_with_mixture_loss.1} parent=162 // pred_region
          %s3239 = sand.u32 %s172, 1
          %s3240 = sand.u32 %s172, 1
          %s3241 = smul.addr %s3240, 512
          %s3242 = scalar_lea.vmem [#allocation8], %s3241
        $region167: #{moco_with_mixture_loss.1} parent=162 // pred_fallthru
          _
        // Predicated region
        $region168: #{moco_with_mixture_loss.1} parent=162 // pred_check
          %p3243 = pneg %p215
        $region169: #{moco_with_mixture_loss.1} parent=162 // pred_check_branch
          %3245 = sbr.rel (%p3243) target = $region171
        $region170: #{moco_with_mixture_loss.1} parent=162 // pred_region
          %s3246 = sand.u32 %s200, 1
          %s3247 = sand.u32 %s200, 1
          %s3248 = smul.addr %s3247, 128
          %s3249 = scalar_lea.vmem [#allocation9], %s3248
        $region171: #{moco_with_mixture_loss.1} parent=162 // pred_fallthru
          _
        // Predicated region
        $region172: #{moco_with_mixture_loss.1} parent=162 // pred_check
          %p3250 = pneg %p241
        $region173: #{moco_with_mixture_loss.1} parent=162 // pred_check_branch
          %3252 = sbr.rel (%p3250) target = $region175
        $region174: #{moco_with_mixture_loss.1} parent=162 // pred_region
          %s3253 = smul.u32 16, %s25
          %p3254 = scmp.lt.s32.totalorder %s3253, 31
          %s3255 = scalar_select %p3254, %s3253, 31
          %s3256 = smul.addr %s3255, 8
          %s3257 = scalar_lea.vmem %s7, %s3256
        $region175: #{moco_with_mixture_loss.1} parent=162 // pred_fallthru
          _
      $region163: #{moco_with_mixture_loss.1} parent=5 // pred_fallthru
        _
    $region6: #{moco_with_mixture_loss.1} parent=1 // loop_footer
      %s18 = sadd.s32 1, %s14
    $region7: #{moco_with_mixture_loss.1} parent=1 // loop_footer_branch
      %13 = sbr.rel target = $region3
    $region8: #{moco_with_mixture_loss.1} parent=1 // loop_exit
      _

</llo_original>
